<compile_context>
chip_gen: v7x
topology: tpu7x:2x2x1
jax: 0.10.0
libtpu: 0.0.40
codegen_flags: <defaults>
</compile_context>

<pallas_src>
import functools

import jax
import jax.numpy as jnp
from jax.experimental import pallas as pl
from jax.experimental.pallas import tpu as pltpu


# ---------------------------------------------------------------------------
# Fused Pallas kernel
# ---------------------------------------------------------------------------
def _lenet_fused_kernel(
    x_ref, wk1_ref, b1_ref, wk2_ref, b2_ref,
    c1e_ref, c1o_ref, c2e_ref, c2o_ref,
    wf1_ref, bf1_ref, wf2_ref, bf2_ref, wf3_ref, bf3_ref,
    out_ref, *, bpad,
):
    f32 = jnp.float32
    bf16 = jnp.bfloat16
    B = bpad

    def sigmoid(y):
        # exp + approximate reciprocal -> both run on the EUP slot, VALU stays free.
        return pl.reciprocal(1.0 + jnp.exp(-y), approx=True)

    def conv_sigmoid(src, h, k, wk_ref, brow):
        """src: batch-minor planar (h*B, w*cin) bf16 (Ref or array).

        The kw shift lives in the banded weight wk_ref[kh] (w*cin, ow*cout), so only
        k contiguous, sublane-aligned row-block slices are needed; the k partial
        products are accumulated in f32 on the VPU.
        """
        oh = h - k + 1
        acc = None
        for kh in range(k):
            piece = src[kh * B:kh * B + oh * B, :]            # aligned (oh*B, w*cin)
            y = jnp.dot(piece, wk_ref[kh], preferred_element_type=f32)
            acc = y if acc is None else acc + y
        return sigmoid(acc + brow)                            # (oh*B, ow*cout) f32

    def maxpool_rows(a, h):
        """Row pair-max (2i, 2i+1) in batch-minor layout: free reshape + VPU max."""
        x = a.shape[-1]
        a3 = a.reshape(h // 2, 2 * B, x)
        m = jnp.maximum(a3[:, :B, :], a3[:, B:, :])           # (h/2, B, x)
        return m.reshape((h // 2) * B, x)

    def maxpool_cols(a_bf16, ce, co):
        """Column pair-max + compaction via two bf16 0/1-selection matmuls."""
        return jnp.maximum(jnp.dot(a_bf16, ce, preferred_element_type=f32),
                           jnp.dot(a_bf16, co, preferred_element_type=f32))

    # conv1 + sigmoid + pool1
    a1 = conv_sigmoid(x_ref, 28, 5, wk1_ref, b1_ref[...])               # (24B, 144) f32
    r1 = maxpool_rows(a1, 24).astype(bf16)                              # (12B, 144)
    p1 = maxpool_cols(r1, c1e_ref[...], c1o_ref[...]).astype(bf16)      # (12B, 72)

    # conv2 + sigmoid + pool2
    a2 = conv_sigmoid(p1, 12, 5, wk2_ref, b2_ref[...])                  # (8B, 128) f32
    r2 = maxpool_rows(a2, 8).astype(bf16)                               # (4B, 128)
    p2 = maxpool_cols(r2, c2e_ref[...], c2o_ref[...]).astype(bf16)      # (4B, 64)

    # fc1: torch's NCHW flatten permutation is folded into wf1; accumulate the 4
    # aligned row blocks of p2 (no gather, no concat).
    acc = None
    for i in range(4):
        y = jnp.dot(p2[i * B:(i + 1) * B, :], wf1_ref[i], preferred_element_type=f32)
        acc = y if acc is None else acc + y
    h1 = sigmoid(acc + bf1_ref[...])                                    # (B, 120) f32

    h2 = sigmoid(jnp.dot(h1.astype(bf16), wf2_ref[...], preferred_element_type=f32)
                 + bf2_ref[...])
    logits = (jnp.dot(h2.astype(bf16), wf3_ref[...], preferred_element_type=f32)
              + bf3_ref[...])
    out_ref[...] = logits.astype(out_ref.dtype)


# ---------------------------------------------------------------------------
# Torch-layout params and one-time (init) repack into kernel layouts
# ---------------------------------------------------------------------------
def init_lenet_params(key):
    """Torch-layout parameters: Conv2d (Cout,Cin,K,K); Linear (out,in)."""
    ks = jax.random.split(key, 10)
    s = 0.1
    return {
        "conv1_w": s * jax.random.normal(ks[0], (6, 1, 5, 5), jnp.float32),
        "conv1_b": s * jax.random.normal(ks[1], (6,), jnp.float32),
        "conv2_w": s * jax.random.normal(ks[2], (16, 6, 5, 5), jnp.float32),
        "conv2_b": s * jax.random.normal(ks[3], (16,), jnp.float32),
        "fc1_w":   s * jax.random.normal(ks[4], (120, 16 * 4 * 4), jnp.float32),
        "fc1_b":   s * jax.random.normal(ks[5], (120,), jnp.float32),
        "fc2_w":   s * jax.random.normal(ks[6], (84, 120), jnp.float32),
        "fc2_b":   s * jax.random.normal(ks[7], (84,), jnp.float32),
        "fc3_w":   s * jax.random.normal(ks[8], (10, 84), jnp.float32),
        "fc3_b":   s * jax.random.normal(ks[9], (10,), jnp.float32),
    }


def prepare_lenet_params(params):
    """Pre-expand / pre-transpose all weights ONCE (batch-independent, no per-forward glue)."""
    f32, bf16 = jnp.float32, jnp.bfloat16

    def conv_banded(w, width):
        # (Cout,Cin,K,K) -> (K, width*Cin, ow*Cout), banded/Toeplitz along width:
        #   Wk[kh, wx*Cin+ci, ox*Cout+co] = w[co, ci, kh, wx-ox]   for 0 <= wx-ox < K.
        cout, cin, k, _ = w.shape
        ow = width - k + 1
        wt = jnp.transpose(w, (2, 3, 1, 0)).astype(f32)            # (K, Kw, Cin, Cout)
        diff = jnp.arange(width)[:, None] - jnp.arange(ow)[None, :]  # (width, ow)
        valid = ((diff >= 0) & (diff < k)).astype(f32)
        kw_idx = jnp.clip(diff, 0, k - 1)
        band = wt[:, kw_idx, :, :]                                 # (K, width, ow, Cin, Cout)
        band = band * valid[None, :, :, None, None]
        band = jnp.transpose(band, (0, 1, 3, 2, 4))                # (K, width, Cin, ow, Cout)
        return band.reshape(k, width * cin, ow * cout).astype(bf16)

    def pool_col_sel(w, c):
        # 0/1 compaction matrices selecting even / odd column pairs (exact in bf16).
        wo = w // 2
        o = jnp.arange(wo * c)
        src = 2 * (o // c) * c + (o % c)
        rows = jnp.arange(w * c)
        ce = (rows[:, None] == src[None, :]).astype(bf16)          # (w*c, w*c/2)
        co = (rows[:, None] == (src + c)[None, :]).astype(bf16)
        return ce, co

    c1e, c1o = pool_col_sel(24, 6)
    c2e, c2o = pool_col_sel(8, 16)

    # fc1 weight regrouped so block i multiplies the pooled rows i*B..i*B+B-1 whose
    # column order is (j, c); absorbs torch's NCHW .view(B, -1) flatten order (c, i, j).
    wf1 = jnp.transpose(params["fc1_w"].reshape(120, 16, 4, 4), (2, 3, 1, 0))
    wf1 = wf1.reshape(4, 64, 120)

    return {
        "wk1": conv_banded(params["conv1_w"], 28),                        # (5, 28, 144) bf16
        "b1": jnp.tile(params["conv1_b"], 24)[None, :].astype(f32),       # (1, 144)
        "wk2": conv_banded(params["conv2_w"], 12),                        # (5, 72, 128) bf16
        "b2": jnp.tile(params["conv2_b"], 8)[None, :].astype(f32),        # (1, 128)
        "c1e": c1e, "c1o": c1o, "c2e": c2e, "c2o": c2o,
        "wf1": wf1.astype(bf16),
        "bf1": params["fc1_b"][None, :].astype(f32),
        "wf2": jnp.transpose(params["fc2_w"]).astype(bf16),
        "bf2": params["fc2_b"][None, :].astype(f32),
        "wf3": jnp.transpose(params["fc3_w"]).astype(bf16),
        "bf3": params["fc3_b"][None, :].astype(f32),
    }


# ---------------------------------------------------------------------------
# Forward: one pallas_call
# ---------------------------------------------------------------------------
def _full_spec(shape):
    n = len(shape)
    return pl.BlockSpec(shape, lambda i, _n=n: (0,) * _n)


@jax.jit
def lenet_forward(prep, img):
    b = img.shape[0]
    bpad = ((b + 7) // 8) * 8                     # sublane-aligned batch tile
    # Batch-minor planar bf16 input: row = h*bpad + b, column = w (Cin = 1).
    x = img.astype(jnp.bfloat16).reshape(b, 28, 28)
    x = jnp.pad(x, ((0, bpad - b), (0, 0), (0, 0)))
    x2d = jnp.transpose(x, (1, 0, 2)).reshape(28 * bpad, 28)

    order = ("wk1", "b1", "wk2", "b2", "c1e", "c1o", "c2e", "c2o",
             "wf1", "bf1", "wf2", "bf2", "wf3", "bf3")
    args = (x2d,) + tuple(prep[k] for k in order)
    out = pl.pallas_call(
        functools.partial(_lenet_fused_kernel, bpad=bpad),
        out_shape=jax.ShapeDtypeStruct((bpad, 10), jnp.float32),
        grid=(1,),
        in_specs=[_full_spec(a.shape) for a in args],
        out_specs=pl.BlockSpec((bpad, 10), lambda i: (0, 0)),
        compiler_params=pltpu.CompilerParams(dimension_semantics=("arbitrary",)),
    )(*args)
    return out[:b]


# ---------------------------------------------------------------------------
# Pure-JAX reference (numerical sanity check)
# ---------------------------------------------------------------------------
def lenet_reference(params, img):
    dn = ("NCHW", "OIHW", "NCHW")
    b = img.shape[0]
    x = jax.lax.conv_general_dilated(img, params["conv1_w"], (1, 1), "VALID",
                                     dimension_numbers=dn)
    x = jax.nn.sigmoid(x + params["conv1_b"][None, :, None, None])
    x = x.reshape(b, 6, 12, 2, 12, 2).max(axis=(3, 5))
    x = jax.lax.conv_general_dilated(x, params["conv2_w"], (1, 1), "VALID",
                                     dimension_numbers=dn)
    x = jax.nn.sigmoid(x + params["conv2_b"][None, :, None, None])
    x = x.reshape(b, 16, 4, 2, 4, 2).max(axis=(3, 5))
    x = x.reshape(b, 16 * 4 * 4)
    x = jax.nn.sigmoid(x @ params["fc1_w"].T + params["fc1_b"])
    x = jax.nn.sigmoid(x @ params["fc2_w"].T + params["fc2_b"])
    return x @ params["fc3_w"].T + params["fc3_b"]


if __name__ == "__main__":
    key = jax.random.PRNGKey(0)
    pkey, xkey = jax.random.split(key)
    params = init_lenet_params(pkey)
    # fc1 expects 16*4*4 features, which pins the input to 1x28x28 (MNIST); batch = 2.
    img = jax.random.normal(xkey, (2, 1, 28, 28), jnp.float32)

    prep = prepare_lenet_params(params)
    out = jax.block_until_ready(lenet_forward(prep, img))
    assert out.shape == (2, 10) and out.dtype == jnp.float32

    ref = jax.block_until_ready(lenet_reference(params, img))
    max_err = float(jnp.max(jnp.abs(out - ref)))
    assert max_err < 5e-2, f"mismatch vs f32 reference: max abs err {max_err}"
    print("KERNEL_OK")
</pallas_src>

<mosaic_0001>
module attributes {stable_mosaic.version = 11 : i64} {
  func.func @_lenet_fused_kernel(%arg0: i32, %arg1: memref<224x28xbf16, #tpu.memory_space<vmem>>, %arg2: memref<5x28x144xbf16, #tpu.memory_space<vmem>>, %arg3: memref<1x144xf32, #tpu.memory_space<vmem>>, %arg4: memref<5x72x128xbf16, #tpu.memory_space<vmem>>, %arg5: memref<1x128xf32, #tpu.memory_space<vmem>>, %arg6: memref<144x72xbf16, #tpu.memory_space<vmem>>, %arg7: memref<144x72xbf16, #tpu.memory_space<vmem>>, %arg8: memref<128x64xbf16, #tpu.memory_space<vmem>>, %arg9: memref<128x64xbf16, #tpu.memory_space<vmem>>, %arg10: memref<4x64x120xbf16, #tpu.memory_space<vmem>>, %arg11: memref<1x120xf32, #tpu.memory_space<vmem>>, %arg12: memref<120x84xbf16, #tpu.memory_space<vmem>>, %arg13: memref<1x84xf32, #tpu.memory_space<vmem>>, %arg14: memref<84x10xbf16, #tpu.memory_space<vmem>>, %arg15: memref<1x10xf32, #tpu.memory_space<vmem>>, %arg16: memref<8x10xf32, #tpu.memory_space<vmem>>) attributes {dimension_semantics = [#tpu.dimension_semantics<arbitrary>], iteration_bounds = array<i64: 1>, scalar_prefetch = 0 : i64, scratch_operands = 0 : i64, tpu.core_type = #tpu.core_type<tc>, window_params = [{pipeline_mode = #tpu.pipeline_mode<synchronous>, transform_indices = @transform_0, window_bounds = array<i64: 224, 28>}, {pipeline_mode = #tpu.pipeline_mode<synchronous>, transform_indices = @transform_1, window_bounds = array<i64: 5, 28, 144>}, {pipeline_mode = #tpu.pipeline_mode<synchronous>, transform_indices = @transform_2, window_bounds = array<i64: 1, 144>}, {pipeline_mode = #tpu.pipeline_mode<synchronous>, transform_indices = @transform_3, window_bounds = array<i64: 5, 72, 128>}, {pipeline_mode = #tpu.pipeline_mode<synchronous>, transform_indices = @transform_4, window_bounds = array<i64: 1, 128>}, {pipeline_mode = #tpu.pipeline_mode<synchronous>, transform_indices = @transform_5, window_bounds = array<i64: 144, 72>}, {pipeline_mode = #tpu.pipeline_mode<synchronous>, transform_indices = @transform_6, window_bounds = array<i64: 144, 72>}, {pipeline_mode = #tpu.pipeline_mode<synchronous>, transform_indices = @transform_7, window_bounds = array<i64: 128, 64>}, {pipeline_mode = #tpu.pipeline_mode<synchronous>, transform_indices = @transform_8, window_bounds = array<i64: 128, 64>}, {pipeline_mode = #tpu.pipeline_mode<synchronous>, transform_indices = @transform_9, window_bounds = array<i64: 4, 64, 120>}, {pipeline_mode = #tpu.pipeline_mode<synchronous>, transform_indices = @transform_10, window_bounds = array<i64: 1, 120>}, {pipeline_mode = #tpu.pipeline_mode<synchronous>, transform_indices = @transform_11, window_bounds = array<i64: 120, 84>}, {pipeline_mode = #tpu.pipeline_mode<synchronous>, transform_indices = @transform_12, window_bounds = array<i64: 1, 84>}, {pipeline_mode = #tpu.pipeline_mode<synchronous>, transform_indices = @transform_13, window_bounds = array<i64: 84, 10>}, {pipeline_mode = #tpu.pipeline_mode<synchronous>, transform_indices = @transform_14, window_bounds = array<i64: 1, 10>}, {pipeline_mode = #tpu.pipeline_mode<synchronous>, transform_indices = @transform_15, window_bounds = array<i64: 8, 10>}]} {
    %c0 = arith.constant 0 : index
    %c0_0 = arith.constant 0 : index
    %0 = vector.load %arg3[%c0, %c0_0] : memref<1x144xf32, #tpu.memory_space<vmem>>, vector<1x144xf32>
    %c0_1 = arith.constant 0 : index
    %c0_2 = arith.constant 0 : index
    %1 = vector.load %arg1[%c0_1, %c0_2] : memref<224x28xbf16, #tpu.memory_space<vmem>>, vector<192x28xbf16>
    %c0_3 = arith.constant 0 : index
    %c0_4 = arith.constant 0 : index
    %c0_5 = arith.constant 0 : index
    %2 = vector.load %arg2[%c0_3, %c0_4, %c0_5] : memref<5x28x144xbf16, #tpu.memory_space<vmem>>, vector<1x28x144xbf16>
    %3 = vector.shape_cast %2 : vector<1x28x144xbf16> to vector<28x144xbf16>
    %cst = arith.constant dense<0.000000e+00> : vector<192x144xf32>
    %4 = tpu.matmul %1, %3, %cst {dimension_numbers = #tpu.dot_dimension_numbers<[1], [0], [0], [1], [0, 0, 1, 1], [], []>} : vector<192x28xbf16>, vector<28x144xbf16>, vector<192x144xf32> -> vector<192x144xf32>
    %c8 = arith.constant 8 : index
    %c0_6 = arith.constant 0 : index
    %5 = vector.load %arg1[%c8, %c0_6] : memref<224x28xbf16, #tpu.memory_space<vmem>>, vector<192x28xbf16>
    %c1 = arith.constant 1 : index
    %c0_7 = arith.constant 0 : index
    %c0_8 = arith.constant 0 : index
    %6 = vector.load %arg2[%c1, %c0_7, %c0_8] : memref<5x28x144xbf16, #tpu.memory_space<vmem>>, vector<1x28x144xbf16>
    %7 = vector.shape_cast %6 : vector<1x28x144xbf16> to vector<28x144xbf16>
    %cst_9 = arith.constant dense<0.000000e+00> : vector<192x144xf32>
    %8 = tpu.matmul %5, %7, %cst_9 {dimension_numbers = #tpu.dot_dimension_numbers<[1], [0], [0], [1], [0, 0, 1, 1], [], []>} : vector<192x28xbf16>, vector<28x144xbf16>, vector<192x144xf32> -> vector<192x144xf32>
    %9 = arith.addf %4, %8 : vector<192x144xf32>
    %c16 = arith.constant 16 : index
    %c0_10 = arith.constant 0 : index
    %10 = vector.load %arg1[%c16, %c0_10] : memref<224x28xbf16, #tpu.memory_space<vmem>>, vector<192x28xbf16>
    %c2 = arith.constant 2 : index
    %c0_11 = arith.constant 0 : index
    %c0_12 = arith.constant 0 : index
    %11 = vector.load %arg2[%c2, %c0_11, %c0_12] : memref<5x28x144xbf16, #tpu.memory_space<vmem>>, vector<1x28x144xbf16>
    %12 = vector.shape_cast %11 : vector<1x28x144xbf16> to vector<28x144xbf16>
    %cst_13 = arith.constant dense<0.000000e+00> : vector<192x144xf32>
    %13 = tpu.matmul %10, %12, %cst_13 {dimension_numbers = #tpu.dot_dimension_numbers<[1], [0], [0], [1], [0, 0, 1, 1], [], []>} : vector<192x28xbf16>, vector<28x144xbf16>, vector<192x144xf32> -> vector<192x144xf32>
    %14 = arith.addf %9, %13 : vector<192x144xf32>
    %c24 = arith.constant 24 : index
    %c0_14 = arith.constant 0 : index
    %15 = vector.load %arg1[%c24, %c0_14] : memref<224x28xbf16, #tpu.memory_space<vmem>>, vector<192x28xbf16>
    %c3 = arith.constant 3 : index
    %c0_15 = arith.constant 0 : index
    %c0_16 = arith.constant 0 : index
    %16 = vector.load %arg2[%c3, %c0_15, %c0_16] : memref<5x28x144xbf16, #tpu.memory_space<vmem>>, vector<1x28x144xbf16>
    %17 = vector.shape_cast %16 : vector<1x28x144xbf16> to vector<28x144xbf16>
    %cst_17 = arith.constant dense<0.000000e+00> : vector<192x144xf32>
    %18 = tpu.matmul %15, %17, %cst_17 {dimension_numbers = #tpu.dot_dimension_numbers<[1], [0], [0], [1], [0, 0, 1, 1], [], []>} : vector<192x28xbf16>, vector<28x144xbf16>, vector<192x144xf32> -> vector<192x144xf32>
    %19 = arith.addf %14, %18 : vector<192x144xf32>
    %c32 = arith.constant 32 : index
    %c0_18 = arith.constant 0 : index
    %20 = vector.load %arg1[%c32, %c0_18] : memref<224x28xbf16, #tpu.memory_space<vmem>>, vector<192x28xbf16>
    %c4 = arith.constant 4 : index
    %c0_19 = arith.constant 0 : index
    %c0_20 = arith.constant 0 : index
    %21 = vector.load %arg2[%c4, %c0_19, %c0_20] : memref<5x28x144xbf16, #tpu.memory_space<vmem>>, vector<1x28x144xbf16>
    %22 = vector.shape_cast %21 : vector<1x28x144xbf16> to vector<28x144xbf16>
    %cst_21 = arith.constant dense<0.000000e+00> : vector<192x144xf32>
    %23 = tpu.matmul %20, %22, %cst_21 {dimension_numbers = #tpu.dot_dimension_numbers<[1], [0], [0], [1], [0, 0, 1, 1], [], []>} : vector<192x28xbf16>, vector<28x144xbf16>, vector<192x144xf32> -> vector<192x144xf32>
    %24 = arith.addf %19, %23 : vector<192x144xf32>
    %25 = vector.broadcast %0 : vector<1x144xf32> to vector<192x144xf32>
    %26 = arith.addf %24, %25 : vector<192x144xf32>
    %cst_22 = arith.constant 0.000000e+00 : f32
    %27 = vector.broadcast %cst_22 : f32 to vector<192x144xf32>
    %28 = arith.subf %27, %26 : vector<192x144xf32>
    %29 = math.exp %28 : vector<192x144xf32>
    %cst_23 = arith.constant 1.000000e+00 : f32
    %30 = vector.broadcast %cst_23 : f32 to vector<192x144xf32>
    %31 = arith.addf %30, %29 : vector<192x144xf32>
    %32 = tpu.reciprocal %31 {approx = true} : vector<192x144xf32> -> vector<192x144xf32>
    %33 = vector.shape_cast %32 : vector<192x144xf32> to vector<12x16x144xf32>
    %34 = vector.extract_strided_slice %33 {offsets = [0, 0, 0], sizes = [12, 8, 144], strides = [1, 1, 1]} : vector<12x16x144xf32> to vector<12x8x144xf32>
    %35 = vector.extract_strided_slice %33 {offsets = [0, 8, 0], sizes = [12, 8, 144], strides = [1, 1, 1]} : vector<12x16x144xf32> to vector<12x8x144xf32>
    %36 = arith.maximumf %34, %35 : vector<12x8x144xf32>
    %37 = vector.shape_cast %36 : vector<12x8x144xf32> to vector<96x144xf32>
    %38 = arith.truncf %37 : vector<96x144xf32> to vector<96x144xbf16>
    %c0_24 = arith.constant 0 : index
    %c0_25 = arith.constant 0 : index
    %39 = vector.load %arg6[%c0_24, %c0_25] : memref<144x72xbf16, #tpu.memory_space<vmem>>, vector<144x72xbf16>
    %c0_26 = arith.constant 0 : index
    %c0_27 = arith.constant 0 : index
    %40 = vector.load %arg7[%c0_26, %c0_27] : memref<144x72xbf16, #tpu.memory_space<vmem>>, vector<144x72xbf16>
    %cst_28 = arith.constant dense<0.000000e+00> : vector<96x72xf32>
    %41 = tpu.matmul %38, %39, %cst_28 {dimension_numbers = #tpu.dot_dimension_numbers<[1], [0], [0], [1], [0, 0, 1, 1], [], []>} : vector<96x144xbf16>, vector<144x72xbf16>, vector<96x72xf32> -> vector<96x72xf32>
    %cst_29 = arith.constant dense<0.000000e+00> : vector<96x72xf32>
    %42 = tpu.matmul %38, %40, %cst_29 {dimension_numbers = #tpu.dot_dimension_numbers<[1], [0], [0], [1], [0, 0, 1, 1], [], []>} : vector<96x144xbf16>, vector<144x72xbf16>, vector<96x72xf32> -> vector<96x72xf32>
    %43 = arith.maximumf %41, %42 : vector<96x72xf32>
    %44 = arith.truncf %43 : vector<96x72xf32> to vector<96x72xbf16>
    %c0_30 = arith.constant 0 : index
    %c0_31 = arith.constant 0 : index
    %45 = vector.load %arg5[%c0_30, %c0_31] : memref<1x128xf32, #tpu.memory_space<vmem>>, vector<1x128xf32>
    %46 = vector.extract_strided_slice %44 {offsets = [0, 0], sizes = [64, 72], strides = [1, 1]} : vector<96x72xbf16> to vector<64x72xbf16>
    %c0_32 = arith.constant 0 : index
    %c0_33 = arith.constant 0 : index
    %c0_34 = arith.constant 0 : index
    %47 = vector.load %arg4[%c0_32, %c0_33, %c0_34] : memref<5x72x128xbf16, #tpu.memory_space<vmem>>, vector<1x72x128xbf16>
    %48 = vector.shape_cast %47 : vector<1x72x128xbf16> to vector<72x128xbf16>
    %cst_35 = arith.constant dense<0.000000e+00> : vector<64x128xf32>
    %49 = tpu.matmul %46, %48, %cst_35 {dimension_numbers = #tpu.dot_dimension_numbers<[1], [0], [0], [1], [0, 0, 1, 1], [], []>} : vector<64x72xbf16>, vector<72x128xbf16>, vector<64x128xf32> -> vector<64x128xf32>
    %50 = vector.extract_strided_slice %44 {offsets = [8, 0], sizes = [64, 72], strides = [1, 1]} : vector<96x72xbf16> to vector<64x72xbf16>
    %c1_36 = arith.constant 1 : index
    %c0_37 = arith.constant 0 : index
    %c0_38 = arith.constant 0 : index
    %51 = vector.load %arg4[%c1_36, %c0_37, %c0_38] : memref<5x72x128xbf16, #tpu.memory_space<vmem>>, vector<1x72x128xbf16>
    %52 = vector.shape_cast %51 : vector<1x72x128xbf16> to vector<72x128xbf16>
    %cst_39 = arith.constant dense<0.000000e+00> : vector<64x128xf32>
    %53 = tpu.matmul %50, %52, %cst_39 {dimension_numbers = #tpu.dot_dimension_numbers<[1], [0], [0], [1], [0, 0, 1, 1], [], []>} : vector<64x72xbf16>, vector<72x128xbf16>, vector<64x128xf32> -> vector<64x128xf32>
    %54 = arith.addf %49, %53 : vector<64x128xf32>
    %55 = vector.extract_strided_slice %44 {offsets = [16, 0], sizes = [64, 72], strides = [1, 1]} : vector<96x72xbf16> to vector<64x72xbf16>
    %c2_40 = arith.constant 2 : index
    %c0_41 = arith.constant 0 : index
    %c0_42 = arith.constant 0 : index
    %56 = vector.load %arg4[%c2_40, %c0_41, %c0_42] : memref<5x72x128xbf16, #tpu.memory_space<vmem>>, vector<1x72x128xbf16>
    %57 = vector.shape_cast %56 : vector<1x72x128xbf16> to vector<72x128xbf16>
    %cst_43 = arith.constant dense<0.000000e+00> : vector<64x128xf32>
    %58 = tpu.matmul %55, %57, %cst_43 {dimension_numbers = #tpu.dot_dimension_numbers<[1], [0], [0], [1], [0, 0, 1, 1], [], []>} : vector<64x72xbf16>, vector<72x128xbf16>, vector<64x128xf32> -> vector<64x128xf32>
    %59 = arith.addf %54, %58 : vector<64x128xf32>
    %60 = vector.extract_strided_slice %44 {offsets = [24, 0], sizes = [64, 72], strides = [1, 1]} : vector<96x72xbf16> to vector<64x72xbf16>
    %c3_44 = arith.constant 3 : index
    %c0_45 = arith.constant 0 : index
    %c0_46 = arith.constant 0 : index
    %61 = vector.load %arg4[%c3_44, %c0_45, %c0_46] : memref<5x72x128xbf16, #tpu.memory_space<vmem>>, vector<1x72x128xbf16>
    %62 = vector.shape_cast %61 : vector<1x72x128xbf16> to vector<72x128xbf16>
    %cst_47 = arith.constant dense<0.000000e+00> : vector<64x128xf32>
    %63 = tpu.matmul %60, %62, %cst_47 {dimension_numbers = #tpu.dot_dimension_numbers<[1], [0], [0], [1], [0, 0, 1, 1], [], []>} : vector<64x72xbf16>, vector<72x128xbf16>, vector<64x128xf32> -> vector<64x128xf32>
    %64 = arith.addf %59, %63 : vector<64x128xf32>
    %65 = vector.extract_strided_slice %44 {offsets = [32, 0], sizes = [64, 72], strides = [1, 1]} : vector<96x72xbf16> to vector<64x72xbf16>
    %c4_48 = arith.constant 4 : index
    %c0_49 = arith.constant 0 : index
    %c0_50 = arith.constant 0 : index
    %66 = vector.load %arg4[%c4_48, %c0_49, %c0_50] : memref<5x72x128xbf16, #tpu.memory_space<vmem>>, vector<1x72x128xbf16>
    %67 = vector.shape_cast %66 : vector<1x72x128xbf16> to vector<72x128xbf16>
    %cst_51 = arith.constant dense<0.000000e+00> : vector<64x128xf32>
    %68 = tpu.matmul %65, %67, %cst_51 {dimension_numbers = #tpu.dot_dimension_numbers<[1], [0], [0], [1], [0, 0, 1, 1], [], []>} : vector<64x72xbf16>, vector<72x128xbf16>, vector<64x128xf32> -> vector<64x128xf32>
    %69 = arith.addf %64, %68 : vector<64x128xf32>
    %70 = vector.broadcast %45 : vector<1x128xf32> to vector<64x128xf32>
    %71 = arith.addf %69, %70 : vector<64x128xf32>
    %cst_52 = arith.constant 0.000000e+00 : f32
    %72 = vector.broadcast %cst_52 : f32 to vector<64x128xf32>
    %73 = arith.subf %72, %71 : vector<64x128xf32>
    %74 = math.exp %73 : vector<64x128xf32>
    %cst_53 = arith.constant 1.000000e+00 : f32
    %75 = vector.broadcast %cst_53 : f32 to vector<64x128xf32>
    %76 = arith.addf %75, %74 : vector<64x128xf32>
    %77 = tpu.reciprocal %76 {approx = true} : vector<64x128xf32> -> vector<64x128xf32>
    %78 = vector.shape_cast %77 : vector<64x128xf32> to vector<4x16x128xf32>
    %79 = vector.extract_strided_slice %78 {offsets = [0, 0, 0], sizes = [4, 8, 128], strides = [1, 1, 1]} : vector<4x16x128xf32> to vector<4x8x128xf32>
    %80 = vector.extract_strided_slice %78 {offsets = [0, 8, 0], sizes = [4, 8, 128], strides = [1, 1, 1]} : vector<4x16x128xf32> to vector<4x8x128xf32>
    %81 = arith.maximumf %79, %80 : vector<4x8x128xf32>
    %82 = vector.shape_cast %81 : vector<4x8x128xf32> to vector<32x128xf32>
    %83 = arith.truncf %82 : vector<32x128xf32> to vector<32x128xbf16>
    %c0_54 = arith.constant 0 : index
    %c0_55 = arith.constant 0 : index
    %84 = vector.load %arg8[%c0_54, %c0_55] : memref<128x64xbf16, #tpu.memory_space<vmem>>, vector<128x64xbf16>
    %c0_56 = arith.constant 0 : index
    %c0_57 = arith.constant 0 : index
    %85 = vector.load %arg9[%c0_56, %c0_57] : memref<128x64xbf16, #tpu.memory_space<vmem>>, vector<128x64xbf16>
    %cst_58 = arith.constant dense<0.000000e+00> : vector<32x64xf32>
    %86 = tpu.matmul %83, %84, %cst_58 {dimension_numbers = #tpu.dot_dimension_numbers<[1], [0], [0], [1], [0, 0, 1, 1], [], []>} : vector<32x128xbf16>, vector<128x64xbf16>, vector<32x64xf32> -> vector<32x64xf32>
    %cst_59 = arith.constant dense<0.000000e+00> : vector<32x64xf32>
    %87 = tpu.matmul %83, %85, %cst_59 {dimension_numbers = #tpu.dot_dimension_numbers<[1], [0], [0], [1], [0, 0, 1, 1], [], []>} : vector<32x128xbf16>, vector<128x64xbf16>, vector<32x64xf32> -> vector<32x64xf32>
    %88 = arith.maximumf %86, %87 : vector<32x64xf32>
    %89 = arith.truncf %88 : vector<32x64xf32> to vector<32x64xbf16>
    %90 = vector.extract_strided_slice %89 {offsets = [0, 0], sizes = [8, 64], strides = [1, 1]} : vector<32x64xbf16> to vector<8x64xbf16>
    %c0_60 = arith.constant 0 : index
    %c0_61 = arith.constant 0 : index
    %c0_62 = arith.constant 0 : index
    %91 = vector.load %arg10[%c0_60, %c0_61, %c0_62] : memref<4x64x120xbf16, #tpu.memory_space<vmem>>, vector<1x64x120xbf16>
    %92 = vector.shape_cast %91 : vector<1x64x120xbf16> to vector<64x120xbf16>
    %cst_63 = arith.constant dense<0.000000e+00> : vector<8x120xf32>
    %93 = tpu.matmul %90, %92, %cst_63 {dimension_numbers = #tpu.dot_dimension_numbers<[1], [0], [0], [1], [0, 0, 1, 1], [], []>} : vector<8x64xbf16>, vector<64x120xbf16>, vector<8x120xf32> -> vector<8x120xf32>
    %94 = vector.extract_strided_slice %89 {offsets = [8, 0], sizes = [8, 64], strides = [1, 1]} : vector<32x64xbf16> to vector<8x64xbf16>
    %c1_64 = arith.constant 1 : index
    %c0_65 = arith.constant 0 : index
    %c0_66 = arith.constant 0 : index
    %95 = vector.load %arg10[%c1_64, %c0_65, %c0_66] : memref<4x64x120xbf16, #tpu.memory_space<vmem>>, vector<1x64x120xbf16>
    %96 = vector.shape_cast %95 : vector<1x64x120xbf16> to vector<64x120xbf16>
    %cst_67 = arith.constant dense<0.000000e+00> : vector<8x120xf32>
    %97 = tpu.matmul %94, %96, %cst_67 {dimension_numbers = #tpu.dot_dimension_numbers<[1], [0], [0], [1], [0, 0, 1, 1], [], []>} : vector<8x64xbf16>, vector<64x120xbf16>, vector<8x120xf32> -> vector<8x120xf32>
    %98 = arith.addf %93, %97 : vector<8x120xf32>
    %99 = vector.extract_strided_slice %89 {offsets = [16, 0], sizes = [8, 64], strides = [1, 1]} : vector<32x64xbf16> to vector<8x64xbf16>
    %c2_68 = arith.constant 2 : index
    %c0_69 = arith.constant 0 : index
    %c0_70 = arith.constant 0 : index
    %100 = vector.load %arg10[%c2_68, %c0_69, %c0_70] : memref<4x64x120xbf16, #tpu.memory_space<vmem>>, vector<1x64x120xbf16>
    %101 = vector.shape_cast %100 : vector<1x64x120xbf16> to vector<64x120xbf16>
    %cst_71 = arith.constant dense<0.000000e+00> : vector<8x120xf32>
    %102 = tpu.matmul %99, %101, %cst_71 {dimension_numbers = #tpu.dot_dimension_numbers<[1], [0], [0], [1], [0, 0, 1, 1], [], []>} : vector<8x64xbf16>, vector<64x120xbf16>, vector<8x120xf32> -> vector<8x120xf32>
    %103 = arith.addf %98, %102 : vector<8x120xf32>
    %104 = vector.extract_strided_slice %89 {offsets = [24, 0], sizes = [8, 64], strides = [1, 1]} : vector<32x64xbf16> to vector<8x64xbf16>
    %c3_72 = arith.constant 3 : index
    %c0_73 = arith.constant 0 : index
    %c0_74 = arith.constant 0 : index
    %105 = vector.load %arg10[%c3_72, %c0_73, %c0_74] : memref<4x64x120xbf16, #tpu.memory_space<vmem>>, vector<1x64x120xbf16>
    %106 = vector.shape_cast %105 : vector<1x64x120xbf16> to vector<64x120xbf16>
    %cst_75 = arith.constant dense<0.000000e+00> : vector<8x120xf32>
    %107 = tpu.matmul %104, %106, %cst_75 {dimension_numbers = #tpu.dot_dimension_numbers<[1], [0], [0], [1], [0, 0, 1, 1], [], []>} : vector<8x64xbf16>, vector<64x120xbf16>, vector<8x120xf32> -> vector<8x120xf32>
    %108 = arith.addf %103, %107 : vector<8x120xf32>
    %c0_76 = arith.constant 0 : index
    %c0_77 = arith.constant 0 : index
    %109 = vector.load %arg11[%c0_76, %c0_77] : memref<1x120xf32, #tpu.memory_space<vmem>>, vector<1x120xf32>
    %110 = vector.broadcast %109 : vector<1x120xf32> to vector<8x120xf32>
    %111 = arith.addf %108, %110 : vector<8x120xf32>
    %cst_78 = arith.constant 0.000000e+00 : f32
    %112 = vector.broadcast %cst_78 : f32 to vector<8x120xf32>
    %113 = arith.subf %112, %111 : vector<8x120xf32>
    %114 = math.exp %113 : vector<8x120xf32>
    %cst_79 = arith.constant 1.000000e+00 : f32
    %115 = vector.broadcast %cst_79 : f32 to vector<8x120xf32>
    %116 = arith.addf %115, %114 : vector<8x120xf32>
    %117 = tpu.reciprocal %116 {approx = true} : vector<8x120xf32> -> vector<8x120xf32>
    %118 = arith.truncf %117 : vector<8x120xf32> to vector<8x120xbf16>
    %c0_80 = arith.constant 0 : index
    %c0_81 = arith.constant 0 : index
    %119 = vector.load %arg12[%c0_80, %c0_81] : memref<120x84xbf16, #tpu.memory_space<vmem>>, vector<120x84xbf16>
    %cst_82 = arith.constant dense<0.000000e+00> : vector<8x84xf32>
    %120 = tpu.matmul %118, %119, %cst_82 {dimension_numbers = #tpu.dot_dimension_numbers<[1], [0], [0], [1], [0, 0, 1, 1], [], []>} : vector<8x120xbf16>, vector<120x84xbf16>, vector<8x84xf32> -> vector<8x84xf32>
    %c0_83 = arith.constant 0 : index
    %c0_84 = arith.constant 0 : index
    %121 = vector.load %arg13[%c0_83, %c0_84] : memref<1x84xf32, #tpu.memory_space<vmem>>, vector<1x84xf32>
    %122 = vector.broadcast %121 : vector<1x84xf32> to vector<8x84xf32>
    %123 = arith.addf %120, %122 : vector<8x84xf32>
    %cst_85 = arith.constant 0.000000e+00 : f32
    %124 = vector.broadcast %cst_85 : f32 to vector<8x84xf32>
    %125 = arith.subf %124, %123 : vector<8x84xf32>
    %126 = math.exp %125 : vector<8x84xf32>
    %cst_86 = arith.constant 1.000000e+00 : f32
    %127 = vector.broadcast %cst_86 : f32 to vector<8x84xf32>
    %128 = arith.addf %127, %126 : vector<8x84xf32>
    %129 = tpu.reciprocal %128 {approx = true} : vector<8x84xf32> -> vector<8x84xf32>
    %130 = arith.truncf %129 : vector<8x84xf32> to vector<8x84xbf16>
    %c0_87 = arith.constant 0 : index
    %c0_88 = arith.constant 0 : index
    %131 = vector.load %arg14[%c0_87, %c0_88] : memref<84x10xbf16, #tpu.memory_space<vmem>>, vector<84x10xbf16>
    %cst_89 = arith.constant dense<0.000000e+00> : vector<8x10xf32>
    %132 = tpu.matmul %130, %131, %cst_89 {dimension_numbers = #tpu.dot_dimension_numbers<[1], [0], [0], [1], [0, 0, 1, 1], [], []>} : vector<8x84xbf16>, vector<84x10xbf16>, vector<8x10xf32> -> vector<8x10xf32>
    %c0_90 = arith.constant 0 : index
    %c0_91 = arith.constant 0 : index
    %133 = vector.load %arg15[%c0_90, %c0_91] : memref<1x10xf32, #tpu.memory_space<vmem>>, vector<1x10xf32>
    %134 = vector.broadcast %133 : vector<1x10xf32> to vector<8x10xf32>
    %135 = arith.addf %132, %134 : vector<8x10xf32>
    %c0_92 = arith.constant 0 : index
    %c0_93 = arith.constant 0 : index
    %136 = vector.load %arg16[%c0_92, %c0_93] : memref<8x10xf32, #tpu.memory_space<vmem>>, vector<8x10xf32>
    tpu.vector_store %arg16[%c0_92, %c0_93], %135 {strides = array<i32>} : memref<8x10xf32, #tpu.memory_space<vmem>>, vector<8x10xf32>,
    return
  }
  func.func @transform_0(%arg0: i32) -> (i32, i32) {
    %c0_i32 = arith.constant 0 : i32
    %c0_i32_0 = arith.constant 0 : i32
    %c0_i32_1 = arith.constant 0 : i32
    return %c0_i32, %c0_i32_0 : i32, i32
  }
  func.func @transform_1(%arg0: i32) -> (i32, i32, i32) {
    %c0_i32 = arith.constant 0 : i32
    %c0_i32_0 = arith.constant 0 : i32
    %c0_i32_1 = arith.constant 0 : i32
    %c0_i32_2 = arith.constant 0 : i32
    return %c0_i32, %c0_i32_0, %c0_i32_1 : i32, i32, i32
  }
  func.func @transform_2(%arg0: i32) -> (i32, i32) {
    %c0_i32 = arith.constant 0 : i32
    %c0_i32_0 = arith.constant 0 : i32
    %c0_i32_1 = arith.constant 0 : i32
    return %c0_i32, %c0_i32_0 : i32, i32
  }
  func.func @transform_3(%arg0: i32) -> (i32, i32, i32) {
    %c0_i32 = arith.constant 0 : i32
    %c0_i32_0 = arith.constant 0 : i32
    %c0_i32_1 = arith.constant 0 : i32
    %c0_i32_2 = arith.constant 0 : i32
    return %c0_i32, %c0_i32_0, %c0_i32_1 : i32, i32, i32
  }
  func.func @transform_4(%arg0: i32) -> (i32, i32) {
    %c0_i32 = arith.constant 0 : i32
    %c0_i32_0 = arith.constant 0 : i32
    %c0_i32_1 = arith.constant 0 : i32
    return %c0_i32, %c0_i32_0 : i32, i32
  }
  func.func @transform_5(%arg0: i32) -> (i32, i32) {
    %c0_i32 = arith.constant 0 : i32
    %c0_i32_0 = arith.constant 0 : i32
    %c0_i32_1 = arith.constant 0 : i32
    return %c0_i32, %c0_i32_0 : i32, i32
  }
  func.func @transform_6(%arg0: i32) -> (i32, i32) {
    %c0_i32 = arith.constant 0 : i32
    %c0_i32_0 = arith.constant 0 : i32
    %c0_i32_1 = arith.constant 0 : i32
    return %c0_i32, %c0_i32_0 : i32, i32
  }
  func.func @transform_7(%arg0: i32) -> (i32, i32) {
    %c0_i32 = arith.constant 0 : i32
    %c0_i32_0 = arith.constant 0 : i32
    %c0_i32_1 = arith.constant 0 : i32
    return %c0_i32, %c0_i32_0 : i32, i32
  }
  func.func @transform_8(%arg0: i32) -> (i32, i32) {
    %c0_i32 = arith.constant 0 : i32
    %c0_i32_0 = arith.constant 0 : i32
    %c0_i32_1 = arith.constant 0 : i32
    return %c0_i32, %c0_i32_0 : i32, i32
  }
  func.func @transform_9(%arg0: i32) -> (i32, i32, i32) {
    %c0_i32 = arith.constant 0 : i32
    %c0_i32_0 = arith.constant 0 : i32
    %c0_i32_1 = arith.constant 0 : i32
    %c0_i32_2 = arith.constant 0 : i32
    return %c0_i32, %c0_i32_0, %c0_i32_1 : i32, i32, i32
  }
  func.func @transform_10(%arg0: i32) -> (i32, i32) {
    %c0_i32 = arith.constant 0 : i32
    %c0_i32_0 = arith.constant 0 : i32
    %c0_i32_1 = arith.constant 0 : i32
    return %c0_i32, %c0_i32_0 : i32, i32
  }
  func.func @transform_11(%arg0: i32) -> (i32, i32) {
    %c0_i32 = arith.constant 0 : i32
    %c0_i32_0 = arith.constant 0 : i32
    %c0_i32_1 = arith.constant 0 : i32
    return %c0_i32, %c0_i32_0 : i32, i32
  }
  func.func @transform_12(%arg0: i32) -> (i32, i32) {
    %c0_i32 = arith.constant 0 : i32
    %c0_i32_0 = arith.constant 0 : i32
    %c0_i32_1 = arith.constant 0 : i32
    return %c0_i32, %c0_i32_0 : i32, i32
  }
  func.func @transform_13(%arg0: i32) -> (i32, i32) {
    %c0_i32 = arith.constant 0 : i32
    %c0_i32_0 = arith.constant 0 : i32
    %c0_i32_1 = arith.constant 0 : i32
    return %c0_i32, %c0_i32_0 : i32, i32
  }
  func.func @transform_14(%arg0: i32) -> (i32, i32) {
    %c0_i32 = arith.constant 0 : i32
    %c0_i32_0 = arith.constant 0 : i32
    %c0_i32_1 = arith.constant 0 : i32
    return %c0_i32, %c0_i32_0 : i32, i32
  }
  func.func @transform_15(%arg0: i32) -> (i32, i32) {
    %c0_i32 = arith.constant 0 : i32
    %c0_i32_0 = arith.constant 0 : i32
    %c0_i32_1 = arith.constant 0 : i32
    return %c0_i32, %c0_i32_0 : i32, i32
  }
}

</mosaic_0001>

<llo_original>
// kernel: lenet_forward.1
$region0: #{lenet_forward.1}
  #allocation0 [shape = 'u32[]', space=smem, size = 0x4, offset = 0x4, fixed_abs, tag = 'smem constant byte address 0x4 - core index']
  #allocation1 [shape = 'u32[144,128]{1,0:T(1,128)}', space=vmem, size = 0x12000, scoped, tag = 'internal scratch']
  %s0 = inlined_call_operand.vmem [shape: bf16[224,28], index: 0, kind: input, shape index: {}]
  %s1 = inlined_call_operand.vmem [shape: bf16[5,28,144], index: 1, kind: input, shape index: {}]
  %s2 = inlined_call_operand.hbm [shape: f32[1,144], index: 2, kind: input, shape index: {}]
  %s3 = inlined_call_operand.vmem [shape: bf16[5,72,128], index: 3, kind: input, shape index: {}]
  %s4 = inlined_call_operand.vmem [shape: f32[1,128], index: 4, kind: input, shape index: {}]
  %s5 = inlined_call_operand.vmem [shape: bf16[144,72], index: 5, kind: input, shape index: {}]
  %s6 = inlined_call_operand.vmem [shape: bf16[144,72], index: 6, kind: input, shape index: {}]
  %s7 = inlined_call_operand.vmem [shape: bf16[128,64], index: 7, kind: input, shape index: {}]
  %s8 = inlined_call_operand.vmem [shape: bf16[128,64], index: 8, kind: input, shape index: {}]
  %s9 = inlined_call_operand.vmem [shape: bf16[4,64,120], index: 9, kind: input, shape index: {}]
  %s10 = inlined_call_operand.hbm [shape: f32[1,120], index: 10, kind: input, shape index: {}]
  %s11 = inlined_call_operand.vmem [shape: bf16[120,84], index: 11, kind: input, shape index: {}]
  %s12 = inlined_call_operand.hbm [shape: f32[1,84], index: 12, kind: input, shape index: {}]
  %s13 = inlined_call_operand.vmem [shape: bf16[84,10], index: 13, kind: input, shape index: {}]
  %s14 = inlined_call_operand.hbm [shape: f32[1,10], index: 14, kind: input, shape index: {}]
  %s15 = inlined_call_operand.vmem [shape: f32[8,10], index: 15, kind: output, shape index: {}]
  %s16 = sld [smem:[#allocation0]]
  $region86: #{lenet_forward.1} parent=0
    _
  %s18 = ssub.s32 1, %s16
  %s19 = scalar_select 0, %s18, %s16
  $region1: #{lenet_forward.1} parent=0
    #allocation2 [shape = 'u8[1024]{0}', space=vmem, size = 0x400, scoped, tag = 'input window, operand 2, single buffered']
    #allocation3 [shape = 's32[1]{0}', space=sflag, size = 0x4, scoped, tag = 'scoped memory for lenet_forward.1']
    #allocation4 [shape = 'u8[512]{0}', space=vmem, size = 0x400, scoped, tag = 'input window, operand 10, single buffered']
    #allocation5 [shape = 's32[1]{0}', space=sflag, size = 0x4, scoped, tag = 'scoped memory for lenet_forward.1']
    #allocation6 [shape = 'u8[512]{0}', space=vmem, size = 0x400, scoped, tag = 'input window, operand 12, single buffered']
    #allocation7 [shape = 'u8[512]{0}', space=vmem, size = 0x400, scoped, tag = 'input window, operand 14, single buffered']
    #allocation8 [shape = 's32[1]{0}', space=sflag, size = 0x4, scoped, tag = 'scoped memory for lenet_forward.1']
    %20 = vsyncpa [#allocation3], 0
    %21 = vsyncpa [#allocation5], 0
    %22 = vsyncpa [#allocation8], 0
    // Predicated region
    $region2: #{lenet_forward.1} parent=1 // pred_check
      _
    $region3: #{lenet_forward.1} parent=1 // pred_check_branch
      %24 = sbr.rel (0) target = $region5
    $region4: #{lenet_forward.1} parent=1 // pred_region
      _
    $region5: #{lenet_forward.1} parent=1 // pred_fallthru
      _
    // Predicated region
    $region6: #{lenet_forward.1} parent=1 // pred_check
      _
    $region7: #{lenet_forward.1} parent=1 // pred_check_branch
      %26 = sbr.rel (0) target = $region9
    $region8: #{lenet_forward.1} parent=1 // pred_region
      _
    $region9: #{lenet_forward.1} parent=1 // pred_fallthru
      _
    // Predicated region
    $region10: #{lenet_forward.1} parent=1 // pred_check
      _
    $region11: #{lenet_forward.1} parent=1 // pred_check_branch
      %28 = sbr.rel (0) target = $region13
    $region12: #{lenet_forward.1} parent=1 // pred_region
      %s30 = ssub.s32 32, 32
      %31 = vsyncadd [#allocation3], %s30
      %s33 = sshll.u32 [#allocation2], 4
      %s34 = int_to_ptr.vmem [resolvable:$true] %s33
      %36 = dma.hbm_to_vmem [thread:$0]  %s2, 32, %s34, [#allocation3]
    $region13: #{lenet_forward.1} parent=1 // pred_fallthru
      _
    // Predicated region
    $region14: #{lenet_forward.1} parent=1 // pred_check
      _
    $region15: #{lenet_forward.1} parent=1 // pred_check_branch
      %38 = sbr.rel (0) target = $region17
    $region16: #{lenet_forward.1} parent=1 // pred_region
      _
    $region17: #{lenet_forward.1} parent=1 // pred_fallthru
      _
    // Predicated region
    $region18: #{lenet_forward.1} parent=1 // pred_check
      _
    $region19: #{lenet_forward.1} parent=1 // pred_check_branch
      %40 = sbr.rel (0) target = $region21
    $region20: #{lenet_forward.1} parent=1 // pred_region
      _
    $region21: #{lenet_forward.1} parent=1 // pred_fallthru
      _
    // Predicated region
    $region22: #{lenet_forward.1} parent=1 // pred_check
      _
    $region23: #{lenet_forward.1} parent=1 // pred_check_branch
      %42 = sbr.rel (0) target = $region25
    $region24: #{lenet_forward.1} parent=1 // pred_region
      _
    $region25: #{lenet_forward.1} parent=1 // pred_fallthru
      _
    // Predicated region
    $region26: #{lenet_forward.1} parent=1 // pred_check
      _
    $region27: #{lenet_forward.1} parent=1 // pred_check_branch
      %44 = sbr.rel (0) target = $region29
    $region28: #{lenet_forward.1} parent=1 // pred_region
      _
    $region29: #{lenet_forward.1} parent=1 // pred_fallthru
      _
    // Predicated region
    $region30: #{lenet_forward.1} parent=1 // pred_check
      _
    $region31: #{lenet_forward.1} parent=1 // pred_check_branch
      %46 = sbr.rel (0) target = $region33
    $region32: #{lenet_forward.1} parent=1 // pred_region
      _
    $region33: #{lenet_forward.1} parent=1 // pred_fallthru
      _
    // Predicated region
    $region34: #{lenet_forward.1} parent=1 // pred_check
      _
    $region35: #{lenet_forward.1} parent=1 // pred_check_branch
      %48 = sbr.rel (0) target = $region37
    $region36: #{lenet_forward.1} parent=1 // pred_region
      _
    $region37: #{lenet_forward.1} parent=1 // pred_fallthru
      _
    // Predicated region
    $region38: #{lenet_forward.1} parent=1 // pred_check
      _
    $region39: #{lenet_forward.1} parent=1 // pred_check_branch
      %50 = sbr.rel (0) target = $region41
    $region40: #{lenet_forward.1} parent=1 // pred_region
      _
    $region41: #{lenet_forward.1} parent=1 // pred_fallthru
      _
    // Predicated region
    $region42: #{lenet_forward.1} parent=1 // pred_check
      _
    $region43: #{lenet_forward.1} parent=1 // pred_check_branch
      %52 = sbr.rel (0) target = $region45
    $region44: #{lenet_forward.1} parent=1 // pred_region
      %s54 = ssub.s32 16, 16
      %55 = vsyncadd [#allocation5], %s54
      %s57 = sshll.u32 [#allocation4], 4
      %s58 = int_to_ptr.vmem [resolvable:$true] %s57
      %60 = dma.hbm_to_vmem [thread:$0]  %s10, 16, %s58, [#allocation5]
    $region45: #{lenet_forward.1} parent=1 // pred_fallthru
      _
    // Predicated region
    $region46: #{lenet_forward.1} parent=1 // pred_check
      _
    $region47: #{lenet_forward.1} parent=1 // pred_check_branch
      %62 = sbr.rel (0) target = $region49
    $region48: #{lenet_forward.1} parent=1 // pred_region
      _
    $region49: #{lenet_forward.1} parent=1 // pred_fallthru
      _
    // Predicated region
    $region50: #{lenet_forward.1} parent=1 // pred_check
      _
    $region51: #{lenet_forward.1} parent=1 // pred_check_branch
      %64 = sbr.rel (0) target = $region53
    $region52: #{lenet_forward.1} parent=1 // pred_region
      %s66 = ssub.s32 16, 16
      %67 = vsyncadd [#allocation5], %s66
      %s69 = sshll.u32 [#allocation6], 4
      %s70 = int_to_ptr.vmem [resolvable:$true] %s69
      %72 = dma.hbm_to_vmem [thread:$0]  %s12, 16, %s70, [#allocation5]
    $region53: #{lenet_forward.1} parent=1 // pred_fallthru
      _
    // Predicated region
    $region54: #{lenet_forward.1} parent=1 // pred_check
      _
    $region55: #{lenet_forward.1} parent=1 // pred_check_branch
      %74 = sbr.rel (0) target = $region57
    $region56: #{lenet_forward.1} parent=1 // pred_region
      _
    $region57: #{lenet_forward.1} parent=1 // pred_fallthru
      _
    // Predicated region
    $region58: #{lenet_forward.1} parent=1 // pred_check
      _
    $region59: #{lenet_forward.1} parent=1 // pred_check_branch
      %76 = sbr.rel (0) target = $region61
    $region60: #{lenet_forward.1} parent=1 // pred_region
      %s78 = ssub.s32 16, 16
      %79 = vsyncadd [#allocation8], %s78
      %s81 = sshll.u32 [#allocation7], 4
      %s82 = int_to_ptr.vmem [resolvable:$true] %s81
      %84 = dma.hbm_to_vmem [thread:$0]  %s14, 16, %s82, [#allocation8]
    $region61: #{lenet_forward.1} parent=1 // pred_fallthru
      _
    // Predicated region
    $region62: #{lenet_forward.1} parent=1 // pred_check
      _
    $region63: #{lenet_forward.1} parent=1 // pred_check_branch
      %86 = sbr.rel (0) target = $region65
    $region64: #{lenet_forward.1} parent=1 // pred_region
      %87 = dma.done [#allocation3], 32
    $region65: #{lenet_forward.1} parent=1 // pred_fallthru
      _
    // Predicated region
    $region66: #{lenet_forward.1} parent=1 // pred_check
      _
    $region67: #{lenet_forward.1} parent=1 // pred_check_branch
      %89 = sbr.rel (0) target = $region69
    $region68: #{lenet_forward.1} parent=1 // pred_region
      %90 = dma.done [#allocation5], 16
    $region69: #{lenet_forward.1} parent=1 // pred_fallthru
      _
    // Predicated region
    $region70: #{lenet_forward.1} parent=1 // pred_check
      _
    $region71: #{lenet_forward.1} parent=1 // pred_check_branch
      %92 = sbr.rel (0) target = $region73
    $region72: #{lenet_forward.1} parent=1 // pred_region
      %93 = dma.done [#allocation5], 16
    $region73: #{lenet_forward.1} parent=1 // pred_fallthru
      _
    // Predicated region
    $region74: #{lenet_forward.1} parent=1 // pred_check
      _
    $region75: #{lenet_forward.1} parent=1 // pred_check_branch
      %95 = sbr.rel (0) target = $region77
    $region76: #{lenet_forward.1} parent=1 // pred_region
      %96 = dma.done [#allocation8], 16
    $region77: #{lenet_forward.1} parent=1 // pred_fallthru
      _
    %v98 = vld [vmem:[#allocation2] sm:$0x3]
    %v99 = vld [vmem:[%s0] sm:$0xf]
    %v100 = vld [vmem:[%s0 + $0x4] sm:$0xf]
    %v101 = vld [vmem:[%s0 + $0x8] sm:$0xf]
    %v102 = vld [vmem:[%s0 + $0xc] sm:$0xf]
    %v103 = vld [vmem:[%s0 + $0x10] sm:$0xf]
    %v104 = vld [vmem:[%s0 + $0x14] sm:$0xf]
    %v105 = vld [vmem:[%s0 + $0x18] sm:$0xf]
    %v106 = vld [vmem:[%s0 + $0x1c] sm:$0xf]
    %v107 = vld [vmem:[%s0 + $0x20] sm:$0xf]
    %v108 = vld [vmem:[%s0 + $0x24] sm:$0xf]
    %v109 = vld [vmem:[%s0 + $0x28] sm:$0xf]
    %v110 = vld [vmem:[%s0 + $0x2c] sm:$0xf]
    %v111 = vld [vmem:[%s0 + $0x30] sm:$0xf]
    %v112 = vld [vmem:[%s0 + $0x34] sm:$0xf]
    %v113 = vld [vmem:[%s0 + $0x38] sm:$0xf]
    %v114 = vld [vmem:[%s0 + $0x3c] sm:$0xf]
    %v115 = vld [vmem:[%s0 + $0x40] sm:$0xf]
    %v116 = vld [vmem:[%s0 + $0x44] sm:$0xf]
    %v117 = vld [vmem:[%s0 + $0x48] sm:$0xf]
    %v118 = vld [vmem:[%s0 + $0x4c] sm:$0xf]
    %v119 = vld [vmem:[%s0 + $0x50] sm:$0xf]
    %v120 = vld [vmem:[%s0 + $0x54] sm:$0xf]
    %v121 = vld [vmem:[%s0 + $0x58] sm:$0xf]
    %v122 = vld [vmem:[%s0 + $0x5c] sm:$0xf]
    %v123 = vld [vmem:[%s1] sm:$0xff]
    %v124 = vld [vmem:[%s1 + $0x8] sm:$0xff]
    %v125 = vld [vmem:[%s1 + $0x10] sm:$0xff]
    %v126 = vld [vmem:[%s1 + $0x18] sm:$0x33]
    %v127 = vld [vmem:[%s0 + $0x60] sm:$0xf]
    %s128 = scalar_lea.vmem %s1, 32
    %v129 = vld [vmem:[%s128] sm:$0xff]
    %v130 = vld [vmem:[%s128 + $0x8] sm:$0xff]
    %v131 = vld [vmem:[%s128 + $0x10] sm:$0xff]
    %v132 = vld [vmem:[%s128 + $0x18] sm:$0x33]
    %v157 = vunpack.c.l.b16 %v100
    %v158 = vunpack.c.l.b16 %v101
    %v159 = vunpack.c.l.b16 %v102
    %v160 = vunpack.c.l.b16 %v103
    %v161 = vunpack.c.l.b16 %v104
    %v162 = vunpack.c.l.b16 %v105
    %v163 = vunpack.c.l.b16 %v106
    %v164 = vunpack.c.l.b16 %v107
    %v165 = vunpack.c.l.b16 %v108
    %v166 = vunpack.c.l.b16 %v109
    %v167 = vunpack.c.l.b16 %v110
    %v168 = vunpack.c.l.b16 %v111
    %v169 = vunpack.c.l.b16 %v112
    %v170 = vunpack.c.l.b16 %v113
    %v171 = vunpack.c.l.b16 %v114
    %v172 = vunpack.c.l.b16 %v115
    %v173 = vunpack.c.l.b16 %v116
    %v174 = vunpack.c.l.b16 %v117
    %v175 = vunpack.c.l.b16 %v118
    %v176 = vunpack.c.l.b16 %v119
    %v177 = vunpack.c.l.b16 %v120
    %v178 = vunpack.c.l.b16 %v121
    %v179 = vunpack.c.l.b16 %v122
    %v180 = vunpack.c.l.b16 %v127
    %v181 = vpack.c.b16 %v158, %v157
    %v182 = vpack.c.b16 %v160, %v159
    %v183 = vpack.c.b16 %v162, %v161
    %v184 = vpack.c.b16 %v164, %v163
    %v185 = vpack.c.b16 %v166, %v165
    %v186 = vpack.c.b16 %v168, %v167
    %v187 = vpack.c.b16 %v170, %v169
    %v188 = vpack.c.b16 %v172, %v171
    %v189 = vpack.c.b16 %v174, %v173
    %v190 = vpack.c.b16 %v176, %v175
    %v191 = vpack.c.b16 %v178, %v177
    %v192 = vpack.c.b16 %v180, %v179
    %v197 = vunpack.c.l.b16 %v129
    %v198 = vunpack.c.h.b16 %v129
    %v199 = vunpack.c.l.b16 %v130
    %v200 = vunpack.c.h.b16 %v130
    %v201 = vunpack.c.l.b16 %v131
    %v202 = vunpack.c.h.b16 %v131
    %v203 = vunpack.c.l.b16 %v132
    %v204 = vunpack.c.h.b16 %v132
    %v205 = vpack.c.b16 %v199, %v197
    %v206 = vpack.c.b16 %v200, %v198
    %v207 = vpack.c.b16 %v203, %v201
    %v208 = vpack.c.b16 %v204, %v202
    %vm211 = vcmask 228352
    %v213 = vsel %vm211, %v181, 0
    %v216 = vsel %vm211, %v182, 0
    %v219 = vsel %vm211, %v183, 0
    %v222 = vsel %vm211, %v184, 0
    %v225 = vsel %vm211, %v185, 0
    %v228 = vsel %vm211, %v186, 0
    %v231 = vsel %vm211, %v187, 0
    %v234 = vsel %vm211, %v188, 0
    %v237 = vsel %vm211, %v189, 0
    %v240 = vsel %vm211, %v190, 0
    %v243 = vsel %vm211, %v191, 0
    %v246 = vsel %vm211, %v192, 0
    %vm248 = vcmask 1045504
    %v250 = vsel %vm248, %v207, 0
    %v253 = vsel %vm248, %v208, 0
    %255 = vmatprep.subr.bf16.mxu0 %v206
    %256 = vmatpush1.bf16.msra.mxu0 %v205
    %257 = vmatprep.subr.bf16.mxu0 %v253
    %258 = vmatpush1.bf16.msra.mxu0 %v250
    %259 = vmatprep.subr.bf16.mxu0 0
    %260 = vmatpush1.bf16.msra.mxu0 0
    %261 = vmatprep.subr.bf16.mxu0 0
    %262 = vmatpush1.bf16.msra.mxu0 0
    %263 = vmatprep.subr.bf16.mxu0 0
    %264 = vmatpush1.bf16.msra.mxu0 0
    %265 = vmatprep.subr.bf16.mxu0 0
    %266 = vmatpush1.bf16.msra.mxu0 0
    %267 = vmatprep.subr.bf16.mxu0 0
    %268 = vmatpush1.bf16.msra.mxu0 0
    %269 = vmatprep.subr.bf16.mxu0 0
    %270 = vmatpush1.bf16.msra.mxu0 0
    %271 = vmatprep.subr.bf16.mxu0 0
    %272 = vmatpush1.bf16.msra.mxu0 0
    %273 = vmatprep.subr.bf16.mxu0 0
    %274 = vmatpush1.bf16.msra.mxu0 0
    %275 = vmatprep.subr.bf16.mxu0 0
    %276 = vmatpush1.bf16.msra.mxu0 0
    %277 = vmatprep.subr.bf16.mxu0 0
    %278 = vmatpush1.bf16.msra.mxu0 0
    %279 = vmatprep.subr.bf16.mxu0 0
    %280 = vmatpush1.bf16.msra.mxu0 0
    %281 = vmatprep.subr.bf16.mxu0 0
    %282 = vmatpush1.bf16.msra.mxu0 0
    %283 = vmatprep.subr.bf16.mxu0 0
    %284 = vmatpush1.bf16.msra.mxu0 0
    %285 = vmatprep.subr.bf16.mxu0 0
    %286 = vmatpush1.bf16.msra.mxu0 0
    %287 = vmatprep.mubr.bf16.mxu0 0
    %288 = vmatmul.mubr.bf16.gmra.mrb[0].mxu0 %v213
    %v289 = vpop.f32.mrb[0].mxu0
    %v290 = vadd.f32 0.0, %v289
    %v291 = vpop.f32.mrb[0].mxu0
    %v292 = vadd.f32 0.0, %v291
    %v293 = vpop.f32.mrb[0].mxu0
    %v294 = vadd.f32 0.0, %v293
    %v295 = vpop.f32.mrb[0].mxu0
    %v296 = vadd.f32 0.0, %v295
    %297 = vmatprep.mubr.bf16.mxu0 0
    %298 = vmatmul.mubr.bf16.gmra.mrb[0].mxu0 %v216
    %v299 = vpop.f32.mrb[0].mxu0
    %v300 = vadd.f32 0.0, %v299
    %v301 = vpop.f32.mrb[0].mxu0
    %v302 = vadd.f32 0.0, %v301
    %v303 = vpop.f32.mrb[0].mxu0
    %v304 = vadd.f32 0.0, %v303
    %v305 = vpop.f32.mrb[0].mxu0
    %v306 = vadd.f32 0.0, %v305
    %307 = vmatprep.mubr.bf16.mxu0 0
    %308 = vmatmul.mubr.bf16.gmra.mrb[0].mxu0 %v219
    %v309 = vpop.f32.mrb[0].mxu0
    %v310 = vadd.f32 0.0, %v309
    %v311 = vpop.f32.mrb[0].mxu0
    %v312 = vadd.f32 0.0, %v311
    %v313 = vpop.f32.mrb[0].mxu0
    %v314 = vadd.f32 0.0, %v313
    %v315 = vpop.f32.mrb[0].mxu0
    %v316 = vadd.f32 0.0, %v315
    %317 = vmatprep.mubr.bf16.mxu0 0
    %318 = vmatmul.mubr.bf16.gmra.mrb[0].mxu0 %v222
    %v319 = vpop.f32.mrb[0].mxu0
    %v320 = vadd.f32 0.0, %v319
    %v321 = vpop.f32.mrb[0].mxu0
    %v322 = vadd.f32 0.0, %v321
    %v323 = vpop.f32.mrb[0].mxu0
    %v324 = vadd.f32 0.0, %v323
    %v325 = vpop.f32.mrb[0].mxu0
    %v326 = vadd.f32 0.0, %v325
    %327 = vmatprep.mubr.bf16.mxu0 0
    %328 = vmatmul.mubr.bf16.gmra.mrb[0].mxu0 %v225
    %v329 = vpop.f32.mrb[0].mxu0
    %v330 = vadd.f32 0.0, %v329
    %v331 = vpop.f32.mrb[0].mxu0
    %v332 = vadd.f32 0.0, %v331
    %v333 = vpop.f32.mrb[0].mxu0
    %v334 = vadd.f32 0.0, %v333
    %v335 = vpop.f32.mrb[0].mxu0
    %v336 = vadd.f32 0.0, %v335
    %337 = vmatprep.mubr.bf16.mxu0 0
    %338 = vmatmul.mubr.bf16.gmra.mrb[0].mxu0 %v228
    %v339 = vpop.f32.mrb[0].mxu0
    %v340 = vadd.f32 0.0, %v339
    %v341 = vpop.f32.mrb[0].mxu0
    %v342 = vadd.f32 0.0, %v341
    %v343 = vpop.f32.mrb[0].mxu0
    %v344 = vadd.f32 0.0, %v343
    %v345 = vpop.f32.mrb[0].mxu0
    %v346 = vadd.f32 0.0, %v345
    %347 = vmatprep.mubr.bf16.mxu0 0
    %348 = vmatmul.mubr.bf16.gmra.mrb[0].mxu0 %v231
    %v349 = vpop.f32.mrb[0].mxu0
    %v350 = vadd.f32 0.0, %v349
    %v351 = vpop.f32.mrb[0].mxu0
    %v352 = vadd.f32 0.0, %v351
    %v353 = vpop.f32.mrb[0].mxu0
    %v354 = vadd.f32 0.0, %v353
    %v355 = vpop.f32.mrb[0].mxu0
    %v356 = vadd.f32 0.0, %v355
    %357 = vmatprep.mubr.bf16.mxu0 0
    %358 = vmatmul.mubr.bf16.gmra.mrb[0].mxu0 %v234
    %v359 = vpop.f32.mrb[0].mxu0
    %v360 = vadd.f32 0.0, %v359
    %v361 = vpop.f32.mrb[0].mxu0
    %v362 = vadd.f32 0.0, %v361
    %v363 = vpop.f32.mrb[0].mxu0
    %v364 = vadd.f32 0.0, %v363
    %v365 = vpop.f32.mrb[0].mxu0
    %v366 = vadd.f32 0.0, %v365
    %367 = vmatprep.mubr.bf16.mxu0 0
    %368 = vmatmul.mubr.bf16.gmra.mrb[0].mxu0 %v237
    %v369 = vpop.f32.mrb[0].mxu0
    %v370 = vadd.f32 0.0, %v369
    %v371 = vpop.f32.mrb[0].mxu0
    %v372 = vadd.f32 0.0, %v371
    %v373 = vpop.f32.mrb[0].mxu0
    %v374 = vadd.f32 0.0, %v373
    %v375 = vpop.f32.mrb[0].mxu0
    %v376 = vadd.f32 0.0, %v375
    %377 = vmatprep.mubr.bf16.mxu0 0
    %378 = vmatmul.mubr.bf16.gmra.mrb[0].mxu0 %v240
    %v379 = vpop.f32.mrb[0].mxu0
    %v380 = vadd.f32 0.0, %v379
    %v381 = vpop.f32.mrb[0].mxu0
    %v382 = vadd.f32 0.0, %v381
    %v383 = vpop.f32.mrb[0].mxu0
    %v384 = vadd.f32 0.0, %v383
    %v385 = vpop.f32.mrb[0].mxu0
    %v386 = vadd.f32 0.0, %v385
    %387 = vmatprep.mubr.bf16.mxu0 0
    %388 = vmatmul.mubr.bf16.gmra.mrb[0].mxu0 %v243
    %v389 = vpop.f32.mrb[0].mxu0
    %v390 = vadd.f32 0.0, %v389
    %v391 = vpop.f32.mrb[0].mxu0
    %v392 = vadd.f32 0.0, %v391
    %v393 = vpop.f32.mrb[0].mxu0
    %v394 = vadd.f32 0.0, %v393
    %v395 = vpop.f32.mrb[0].mxu0
    %v396 = vadd.f32 0.0, %v395
    %397 = vmatprep.mubr.bf16.mxu0 0
    %398 = vmatmul.mubr.bf16.gmra.mrb[0].mxu0 %v246
    %v399 = vpop.f32.mrb[0].mxu0
    %v400 = vadd.f32 0.0, %v399
    %v401 = vpop.f32.mrb[0].mxu0
    %v402 = vadd.f32 0.0, %v401
    %v403 = vpop.f32.mrb[0].mxu0
    %v404 = vadd.f32 0.0, %v403
    %v405 = vpop.f32.mrb[0].mxu0
    %v406 = vadd.f32 0.0, %v405
    %407 = vdwg.mxu0
    %v409 = vunpack.c.l.b16 %v99
    %v410 = vpack.c.b16 %v157, %v409
    %v411 = vpack.c.b16 %v159, %v158
    %v412 = vpack.c.b16 %v161, %v160
    %v413 = vpack.c.b16 %v163, %v162
    %v414 = vpack.c.b16 %v165, %v164
    %v415 = vpack.c.b16 %v167, %v166
    %v416 = vpack.c.b16 %v169, %v168
    %v417 = vpack.c.b16 %v171, %v170
    %v418 = vpack.c.b16 %v173, %v172
    %v419 = vpack.c.b16 %v175, %v174
    %v420 = vpack.c.b16 %v177, %v176
    %v421 = vpack.c.b16 %v179, %v178
    %v426 = vunpack.c.l.b16 %v123
    %v427 = vunpack.c.h.b16 %v123
    %v428 = vunpack.c.l.b16 %v124
    %v429 = vunpack.c.h.b16 %v124
    %v430 = vunpack.c.l.b16 %v125
    %v431 = vunpack.c.h.b16 %v125
    %v432 = vunpack.c.l.b16 %v126
    %v433 = vunpack.c.h.b16 %v126
    %v434 = vpack.c.b16 %v428, %v426
    %v435 = vpack.c.b16 %v429, %v427
    %v436 = vpack.c.b16 %v432, %v430
    %v437 = vpack.c.b16 %v433, %v431
    %v441 = vsel %vm211, %v410, 0
    %v444 = vsel %vm211, %v411, 0
    %v447 = vsel %vm211, %v412, 0
    %v450 = vsel %vm211, %v413, 0
    %v453 = vsel %vm211, %v414, 0
    %v456 = vsel %vm211, %v415, 0
    %v459 = vsel %vm211, %v416, 0
    %v462 = vsel %vm211, %v417, 0
    %v465 = vsel %vm211, %v418, 0
    %v468 = vsel %vm211, %v419, 0
    %v471 = vsel %vm211, %v420, 0
    %v474 = vsel %vm211, %v421, 0
    %v477 = vsel %vm248, %v436, 0
    %v480 = vsel %vm248, %v437, 0
    %482 = vmatprep.subr.bf16.mxu0 %v435
    %483 = vmatpush1.bf16.msra.mxu0 %v434
    %484 = vmatprep.subr.bf16.mxu0 %v480
    %485 = vmatpush1.bf16.msra.mxu0 %v477
    %486 = vmatprep.subr.bf16.mxu0 0
    %487 = vmatpush1.bf16.msra.mxu0 0
    %488 = vmatprep.subr.bf16.mxu0 0
    %489 = vmatpush1.bf16.msra.mxu0 0
    %490 = vmatprep.subr.bf16.mxu0 0
    %491 = vmatpush1.bf16.msra.mxu0 0
    %492 = vmatprep.subr.bf16.mxu0 0
    %493 = vmatpush1.bf16.msra.mxu0 0
    %494 = vmatprep.subr.bf16.mxu0 0
    %495 = vmatpush1.bf16.msra.mxu0 0
    %496 = vmatprep.subr.bf16.mxu0 0
    %497 = vmatpush1.bf16.msra.mxu0 0
    %498 = vmatprep.subr.bf16.mxu0 0
    %499 = vmatpush1.bf16.msra.mxu0 0
    %500 = vmatprep.subr.bf16.mxu0 0
    %501 = vmatpush1.bf16.msra.mxu0 0
    %502 = vmatprep.subr.bf16.mxu0 0
    %503 = vmatpush1.bf16.msra.mxu0 0
    %504 = vmatprep.subr.bf16.mxu0 0
    %505 = vmatpush1.bf16.msra.mxu0 0
    %506 = vmatprep.subr.bf16.mxu0 0
    %507 = vmatpush1.bf16.msra.mxu0 0
    %508 = vmatprep.subr.bf16.mxu0 0
    %509 = vmatpush1.bf16.msra.mxu0 0
    %510 = vmatprep.subr.bf16.mxu0 0
    %511 = vmatpush1.bf16.msra.mxu0 0
    %512 = vmatprep.subr.bf16.mxu0 0
    %513 = vmatpush1.bf16.msra.mxu0 0
    %514 = vmatprep.mubr.bf16.mxu0 0
    %515 = vmatmul.mubr.bf16.gmra.mrb[0].mxu0 %v441
    %v516 = vpop.f32.mrb[0].mxu0
    %v517 = vadd.f32 %v290, %v516
    %v518 = vpop.f32.mrb[0].mxu0
    %v519 = vadd.f32 %v292, %v518
    %v520 = vpop.f32.mrb[0].mxu0
    %v521 = vadd.f32 %v294, %v520
    %v522 = vpop.f32.mrb[0].mxu0
    %v523 = vadd.f32 %v296, %v522
    %524 = vmatprep.mubr.bf16.mxu0 0
    %525 = vmatmul.mubr.bf16.gmra.mrb[0].mxu0 %v444
    %v526 = vpop.f32.mrb[0].mxu0
    %v527 = vadd.f32 %v300, %v526
    %v528 = vpop.f32.mrb[0].mxu0
    %v529 = vadd.f32 %v302, %v528
    %v530 = vpop.f32.mrb[0].mxu0
    %v531 = vadd.f32 %v304, %v530
    %v532 = vpop.f32.mrb[0].mxu0
    %v533 = vadd.f32 %v306, %v532
    %534 = vmatprep.mubr.bf16.mxu0 0
    %535 = vmatmul.mubr.bf16.gmra.mrb[0].mxu0 %v447
    %v536 = vpop.f32.mrb[0].mxu0
    %v537 = vadd.f32 %v310, %v536
    %v538 = vpop.f32.mrb[0].mxu0
    %v539 = vadd.f32 %v312, %v538
    %v540 = vpop.f32.mrb[0].mxu0
    %v541 = vadd.f32 %v314, %v540
    %v542 = vpop.f32.mrb[0].mxu0
    %v543 = vadd.f32 %v316, %v542
    %544 = vmatprep.mubr.bf16.mxu0 0
    %545 = vmatmul.mubr.bf16.gmra.mrb[0].mxu0 %v450
    %v546 = vpop.f32.mrb[0].mxu0
    %v547 = vadd.f32 %v320, %v546
    %v548 = vpop.f32.mrb[0].mxu0
    %v549 = vadd.f32 %v322, %v548
    %v550 = vpop.f32.mrb[0].mxu0
    %v551 = vadd.f32 %v324, %v550
    %v552 = vpop.f32.mrb[0].mxu0
    %v553 = vadd.f32 %v326, %v552
    %554 = vmatprep.mubr.bf16.mxu0 0
    %555 = vmatmul.mubr.bf16.gmra.mrb[0].mxu0 %v453
    %v556 = vpop.f32.mrb[0].mxu0
    %v557 = vadd.f32 %v330, %v556
    %v558 = vpop.f32.mrb[0].mxu0
    %v559 = vadd.f32 %v332, %v558
    %v560 = vpop.f32.mrb[0].mxu0
    %v561 = vadd.f32 %v334, %v560
    %v562 = vpop.f32.mrb[0].mxu0
    %v563 = vadd.f32 %v336, %v562
    %564 = vmatprep.mubr.bf16.mxu0 0
    %565 = vmatmul.mubr.bf16.gmra.mrb[0].mxu0 %v456
    %v566 = vpop.f32.mrb[0].mxu0
    %v567 = vadd.f32 %v340, %v566
    %v568 = vpop.f32.mrb[0].mxu0
    %v569 = vadd.f32 %v342, %v568
    %v570 = vpop.f32.mrb[0].mxu0
    %v571 = vadd.f32 %v344, %v570
    %v572 = vpop.f32.mrb[0].mxu0
    %v573 = vadd.f32 %v346, %v572
    %574 = vmatprep.mubr.bf16.mxu0 0
    %575 = vmatmul.mubr.bf16.gmra.mrb[0].mxu0 %v459
    %v576 = vpop.f32.mrb[0].mxu0
    %v577 = vadd.f32 %v350, %v576
    %v578 = vpop.f32.mrb[0].mxu0
    %v579 = vadd.f32 %v352, %v578
    %v580 = vpop.f32.mrb[0].mxu0
    %v581 = vadd.f32 %v354, %v580
    %v582 = vpop.f32.mrb[0].mxu0
    %v583 = vadd.f32 %v356, %v582
    %584 = vmatprep.mubr.bf16.mxu0 0
    %585 = vmatmul.mubr.bf16.gmra.mrb[0].mxu0 %v462
    %v586 = vpop.f32.mrb[0].mxu0
    %v587 = vadd.f32 %v360, %v586
    %v588 = vpop.f32.mrb[0].mxu0
    %v589 = vadd.f32 %v362, %v588
    %v590 = vpop.f32.mrb[0].mxu0
    %v591 = vadd.f32 %v364, %v590
    %v592 = vpop.f32.mrb[0].mxu0
    %v593 = vadd.f32 %v366, %v592
    %594 = vmatprep.mubr.bf16.mxu0 0
    %595 = vmatmul.mubr.bf16.gmra.mrb[0].mxu0 %v465
    %v596 = vpop.f32.mrb[0].mxu0
    %v597 = vadd.f32 %v370, %v596
    %v598 = vpop.f32.mrb[0].mxu0
    %v599 = vadd.f32 %v372, %v598
    %v600 = vpop.f32.mrb[0].mxu0
    %v601 = vadd.f32 %v374, %v600
    %v602 = vpop.f32.mrb[0].mxu0
    %v603 = vadd.f32 %v376, %v602
    %604 = vmatprep.mubr.bf16.mxu0 0
    %605 = vmatmul.mubr.bf16.gmra.mrb[0].mxu0 %v468
    %v606 = vpop.f32.mrb[0].mxu0
    %v607 = vadd.f32 %v380, %v606
    %v608 = vpop.f32.mrb[0].mxu0
    %v609 = vadd.f32 %v382, %v608
    %v610 = vpop.f32.mrb[0].mxu0
    %v611 = vadd.f32 %v384, %v610
    %v612 = vpop.f32.mrb[0].mxu0
    %v613 = vadd.f32 %v386, %v612
    %614 = vmatprep.mubr.bf16.mxu0 0
    %615 = vmatmul.mubr.bf16.gmra.mrb[0].mxu0 %v471
    %v616 = vpop.f32.mrb[0].mxu0
    %v617 = vadd.f32 %v390, %v616
    %v618 = vpop.f32.mrb[0].mxu0
    %v619 = vadd.f32 %v392, %v618
    %v620 = vpop.f32.mrb[0].mxu0
    %v621 = vadd.f32 %v394, %v620
    %v622 = vpop.f32.mrb[0].mxu0
    %v623 = vadd.f32 %v396, %v622
    %624 = vmatprep.mubr.bf16.mxu0 0
    %625 = vmatmul.mubr.bf16.gmra.mrb[0].mxu0 %v474
    %v626 = vpop.f32.mrb[0].mxu0
    %v627 = vadd.f32 %v400, %v626
    %v628 = vpop.f32.mrb[0].mxu0
    %v629 = vadd.f32 %v402, %v628
    %v630 = vpop.f32.mrb[0].mxu0
    %v631 = vadd.f32 %v404, %v630
    %v632 = vpop.f32.mrb[0].mxu0
    %v633 = vadd.f32 %v406, %v632
    %634 = vdwg.mxu0
    %v635 = vld [vmem:[%s0 + $0x8] sm:$0xf]
    %v636 = vld [vmem:[%s0 + $0xc] sm:$0xf]
    %v637 = vld [vmem:[%s0 + $0x10] sm:$0xf]
    %v638 = vld [vmem:[%s0 + $0x14] sm:$0xf]
    %v639 = vld [vmem:[%s0 + $0x18] sm:$0xf]
    %v640 = vld [vmem:[%s0 + $0x1c] sm:$0xf]
    %v641 = vld [vmem:[%s0 + $0x20] sm:$0xf]
    %v642 = vld [vmem:[%s0 + $0x24] sm:$0xf]
    %v643 = vld [vmem:[%s0 + $0x28] sm:$0xf]
    %v644 = vld [vmem:[%s0 + $0x2c] sm:$0xf]
    %v645 = vld [vmem:[%s0 + $0x30] sm:$0xf]
    %v646 = vld [vmem:[%s0 + $0x34] sm:$0xf]
    %v647 = vld [vmem:[%s0 + $0x38] sm:$0xf]
    %v648 = vld [vmem:[%s0 + $0x3c] sm:$0xf]
    %v649 = vld [vmem:[%s0 + $0x40] sm:$0xf]
    %v650 = vld [vmem:[%s0 + $0x44] sm:$0xf]
    %v651 = vld [vmem:[%s0 + $0x48] sm:$0xf]
    %v652 = vld [vmem:[%s0 + $0x4c] sm:$0xf]
    %v653 = vld [vmem:[%s0 + $0x50] sm:$0xf]
    %v654 = vld [vmem:[%s0 + $0x54] sm:$0xf]
    %v655 = vld [vmem:[%s0 + $0x58] sm:$0xf]
    %v656 = vld [vmem:[%s0 + $0x5c] sm:$0xf]
    %v657 = vld [vmem:[%s0 + $0x60] sm:$0xf]
    %v658 = vld [vmem:[%s0 + $0x64] sm:$0xf]
    %s659 = scalar_lea.vmem %s1, 64
    %v660 = vld [vmem:[%s659] sm:$0xff]
    %v661 = vld [vmem:[%s659 + $0x8] sm:$0xff]
    %v662 = vld [vmem:[%s659 + $0x10] sm:$0xff]
    %v663 = vld [vmem:[%s659 + $0x18] sm:$0x33]
    %v688 = vunpack.c.l.b16 %v635
    %v689 = vunpack.c.l.b16 %v636
    %v690 = vunpack.c.l.b16 %v637
    %v691 = vunpack.c.l.b16 %v638
    %v692 = vunpack.c.l.b16 %v639
    %v693 = vunpack.c.l.b16 %v640
    %v694 = vunpack.c.l.b16 %v641
    %v695 = vunpack.c.l.b16 %v642
    %v696 = vunpack.c.l.b16 %v643
    %v697 = vunpack.c.l.b16 %v644
    %v698 = vunpack.c.l.b16 %v645
    %v699 = vunpack.c.l.b16 %v646
    %v700 = vunpack.c.l.b16 %v647
    %v701 = vunpack.c.l.b16 %v648
    %v702 = vunpack.c.l.b16 %v649
    %v703 = vunpack.c.l.b16 %v650
    %v704 = vunpack.c.l.b16 %v651
    %v705 = vunpack.c.l.b16 %v652
    %v706 = vunpack.c.l.b16 %v653
    %v707 = vunpack.c.l.b16 %v654
    %v708 = vunpack.c.l.b16 %v655
    %v709 = vunpack.c.l.b16 %v656
    %v710 = vunpack.c.l.b16 %v657
    %v711 = vunpack.c.l.b16 %v658
    %v712 = vpack.c.b16 %v689, %v688
    %v713 = vpack.c.b16 %v691, %v690
    %v714 = vpack.c.b16 %v693, %v692
    %v715 = vpack.c.b16 %v695, %v694
    %v716 = vpack.c.b16 %v697, %v696
    %v717 = vpack.c.b16 %v699, %v698
    %v718 = vpack.c.b16 %v701, %v700
    %v719 = vpack.c.b16 %v703, %v702
    %v720 = vpack.c.b16 %v705, %v704
    %v721 = vpack.c.b16 %v707, %v706
    %v722 = vpack.c.b16 %v709, %v708
    %v723 = vpack.c.b16 %v711, %v710
    %v728 = vunpack.c.l.b16 %v660
    %v729 = vunpack.c.h.b16 %v660
    %v730 = vunpack.c.l.b16 %v661
    %v731 = vunpack.c.h.b16 %v661
    %v732 = vunpack.c.l.b16 %v662
    %v733 = vunpack.c.h.b16 %v662
    %v734 = vunpack.c.l.b16 %v663
    %v735 = vunpack.c.h.b16 %v663
    %v736 = vpack.c.b16 %v730, %v728
    %v737 = vpack.c.b16 %v731, %v729
    %v738 = vpack.c.b16 %v734, %v732
    %v739 = vpack.c.b16 %v735, %v733
    %v743 = vsel %vm211, %v712, 0
    %v746 = vsel %vm211, %v713, 0
    %v749 = vsel %vm211, %v714, 0
    %v752 = vsel %vm211, %v715, 0
    %v755 = vsel %vm211, %v716, 0
    %v758 = vsel %vm211, %v717, 0
    %v761 = vsel %vm211, %v718, 0
    %v764 = vsel %vm211, %v719, 0
    %v767 = vsel %vm211, %v720, 0
    %v770 = vsel %vm211, %v721, 0
    %v773 = vsel %vm211, %v722, 0
    %v776 = vsel %vm211, %v723, 0
    %v779 = vsel %vm248, %v738, 0
    %v782 = vsel %vm248, %v739, 0
    %784 = vmatprep.subr.bf16.mxu0 %v737
    %785 = vmatpush1.bf16.msra.mxu0 %v736
    %786 = vmatprep.subr.bf16.mxu0 %v782
    %787 = vmatpush1.bf16.msra.mxu0 %v779
    %788 = vmatprep.subr.bf16.mxu0 0
    %789 = vmatpush1.bf16.msra.mxu0 0
    %790 = vmatprep.subr.bf16.mxu0 0
    %791 = vmatpush1.bf16.msra.mxu0 0
    %792 = vmatprep.subr.bf16.mxu0 0
    %793 = vmatpush1.bf16.msra.mxu0 0
    %794 = vmatprep.subr.bf16.mxu0 0
    %795 = vmatpush1.bf16.msra.mxu0 0
    %796 = vmatprep.subr.bf16.mxu0 0
    %797 = vmatpush1.bf16.msra.mxu0 0
    %798 = vmatprep.subr.bf16.mxu0 0
    %799 = vmatpush1.bf16.msra.mxu0 0
    %800 = vmatprep.subr.bf16.mxu0 0
    %801 = vmatpush1.bf16.msra.mxu0 0
    %802 = vmatprep.subr.bf16.mxu0 0
    %803 = vmatpush1.bf16.msra.mxu0 0
    %804 = vmatprep.subr.bf16.mxu0 0
    %805 = vmatpush1.bf16.msra.mxu0 0
    %806 = vmatprep.subr.bf16.mxu0 0
    %807 = vmatpush1.bf16.msra.mxu0 0
    %808 = vmatprep.subr.bf16.mxu0 0
    %809 = vmatpush1.bf16.msra.mxu0 0
    %810 = vmatprep.subr.bf16.mxu0 0
    %811 = vmatpush1.bf16.msra.mxu0 0
    %812 = vmatprep.subr.bf16.mxu0 0
    %813 = vmatpush1.bf16.msra.mxu0 0
    %814 = vmatprep.subr.bf16.mxu0 0
    %815 = vmatpush1.bf16.msra.mxu0 0
    %816 = vmatprep.mubr.bf16.mxu0 0
    %817 = vmatmul.mubr.bf16.gmra.mrb[0].mxu0 %v743
    %v818 = vpop.f32.mrb[0].mxu0
    %v819 = vadd.f32 0.0, %v818
    %v820 = vpop.f32.mrb[0].mxu0
    %v821 = vadd.f32 0.0, %v820
    %v822 = vpop.f32.mrb[0].mxu0
    %v823 = vadd.f32 0.0, %v822
    %v824 = vpop.f32.mrb[0].mxu0
    %v825 = vadd.f32 0.0, %v824
    %826 = vmatprep.mubr.bf16.mxu0 0
    %827 = vmatmul.mubr.bf16.gmra.mrb[0].mxu0 %v746
    %v828 = vpop.f32.mrb[0].mxu0
    %v829 = vadd.f32 0.0, %v828
    %v830 = vpop.f32.mrb[0].mxu0
    %v831 = vadd.f32 0.0, %v830
    %v832 = vpop.f32.mrb[0].mxu0
    %v833 = vadd.f32 0.0, %v832
    %v834 = vpop.f32.mrb[0].mxu0
    %v835 = vadd.f32 0.0, %v834
    %836 = vmatprep.mubr.bf16.mxu0 0
    %837 = vmatmul.mubr.bf16.gmra.mrb[0].mxu0 %v749
    %v838 = vpop.f32.mrb[0].mxu0
    %v839 = vadd.f32 0.0, %v838
    %v840 = vpop.f32.mrb[0].mxu0
    %v841 = vadd.f32 0.0, %v840
    %v842 = vpop.f32.mrb[0].mxu0
    %v843 = vadd.f32 0.0, %v842
    %v844 = vpop.f32.mrb[0].mxu0
    %v845 = vadd.f32 0.0, %v844
    %846 = vmatprep.mubr.bf16.mxu0 0
    %847 = vmatmul.mubr.bf16.gmra.mrb[0].mxu0 %v752
    %v848 = vpop.f32.mrb[0].mxu0
    %v849 = vadd.f32 0.0, %v848
    %v850 = vpop.f32.mrb[0].mxu0
    %v851 = vadd.f32 0.0, %v850
    %v852 = vpop.f32.mrb[0].mxu0
    %v853 = vadd.f32 0.0, %v852
    %v854 = vpop.f32.mrb[0].mxu0
    %v855 = vadd.f32 0.0, %v854
    %856 = vmatprep.mubr.bf16.mxu0 0
    %857 = vmatmul.mubr.bf16.gmra.mrb[0].mxu0 %v755
    %v858 = vpop.f32.mrb[0].mxu0
    %v859 = vadd.f32 0.0, %v858
    %v860 = vpop.f32.mrb[0].mxu0
    %v861 = vadd.f32 0.0, %v860
    %v862 = vpop.f32.mrb[0].mxu0
    %v863 = vadd.f32 0.0, %v862
    %v864 = vpop.f32.mrb[0].mxu0
    %v865 = vadd.f32 0.0, %v864
    %866 = vmatprep.mubr.bf16.mxu0 0
    %867 = vmatmul.mubr.bf16.gmra.mrb[0].mxu0 %v758
    %v868 = vpop.f32.mrb[0].mxu0
    %v869 = vadd.f32 0.0, %v868
    %v870 = vpop.f32.mrb[0].mxu0
    %v871 = vadd.f32 0.0, %v870
    %v872 = vpop.f32.mrb[0].mxu0
    %v873 = vadd.f32 0.0, %v872
    %v874 = vpop.f32.mrb[0].mxu0
    %v875 = vadd.f32 0.0, %v874
    %876 = vmatprep.mubr.bf16.mxu0 0
    %877 = vmatmul.mubr.bf16.gmra.mrb[0].mxu0 %v761
    %v878 = vpop.f32.mrb[0].mxu0
    %v879 = vadd.f32 0.0, %v878
    %v880 = vpop.f32.mrb[0].mxu0
    %v881 = vadd.f32 0.0, %v880
    %v882 = vpop.f32.mrb[0].mxu0
    %v883 = vadd.f32 0.0, %v882
    %v884 = vpop.f32.mrb[0].mxu0
    %v885 = vadd.f32 0.0, %v884
    %886 = vmatprep.mubr.bf16.mxu0 0
    %887 = vmatmul.mubr.bf16.gmra.mrb[0].mxu0 %v764
    %v888 = vpop.f32.mrb[0].mxu0
    %v889 = vadd.f32 0.0, %v888
    %v890 = vpop.f32.mrb[0].mxu0
    %v891 = vadd.f32 0.0, %v890
    %v892 = vpop.f32.mrb[0].mxu0
    %v893 = vadd.f32 0.0, %v892
    %v894 = vpop.f32.mrb[0].mxu0
    %v895 = vadd.f32 0.0, %v894
    %896 = vmatprep.mubr.bf16.mxu0 0
    %897 = vmatmul.mubr.bf16.gmra.mrb[0].mxu0 %v767
    %v898 = vpop.f32.mrb[0].mxu0
    %v899 = vadd.f32 0.0, %v898
    %v900 = vpop.f32.mrb[0].mxu0
    %v901 = vadd.f32 0.0, %v900
    %v902 = vpop.f32.mrb[0].mxu0
    %v903 = vadd.f32 0.0, %v902
    %v904 = vpop.f32.mrb[0].mxu0
    %v905 = vadd.f32 0.0, %v904
    %906 = vmatprep.mubr.bf16.mxu0 0
    %907 = vmatmul.mubr.bf16.gmra.mrb[0].mxu0 %v770
    %v908 = vpop.f32.mrb[0].mxu0
    %v909 = vadd.f32 0.0, %v908
    %v910 = vpop.f32.mrb[0].mxu0
    %v911 = vadd.f32 0.0, %v910
    %v912 = vpop.f32.mrb[0].mxu0
    %v913 = vadd.f32 0.0, %v912
    %v914 = vpop.f32.mrb[0].mxu0
    %v915 = vadd.f32 0.0, %v914
    %916 = vmatprep.mubr.bf16.mxu0 0
    %917 = vmatmul.mubr.bf16.gmra.mrb[0].mxu0 %v773
    %v918 = vpop.f32.mrb[0].mxu0
    %v919 = vadd.f32 0.0, %v918
    %v920 = vpop.f32.mrb[0].mxu0
    %v921 = vadd.f32 0.0, %v920
    %v922 = vpop.f32.mrb[0].mxu0
    %v923 = vadd.f32 0.0, %v922
    %v924 = vpop.f32.mrb[0].mxu0
    %v925 = vadd.f32 0.0, %v924
    %926 = vmatprep.mubr.bf16.mxu0 0
    %927 = vmatmul.mubr.bf16.gmra.mrb[0].mxu0 %v776
    %v928 = vpop.f32.mrb[0].mxu0
    %v929 = vadd.f32 0.0, %v928
    %v930 = vpop.f32.mrb[0].mxu0
    %v931 = vadd.f32 0.0, %v930
    %v932 = vpop.f32.mrb[0].mxu0
    %v933 = vadd.f32 0.0, %v932
    %v934 = vpop.f32.mrb[0].mxu0
    %v935 = vadd.f32 0.0, %v934
    %936 = vdwg.mxu0
    %v937 = vadd.f32 %v517, %v819
    %v938 = vadd.f32 %v519, %v821
    %v939 = vadd.f32 %v521, %v823
    %v940 = vadd.f32 %v523, %v825
    %v941 = vadd.f32 %v527, %v829
    %v942 = vadd.f32 %v529, %v831
    %v943 = vadd.f32 %v531, %v833
    %v944 = vadd.f32 %v533, %v835
    %v945 = vadd.f32 %v537, %v839
    %v946 = vadd.f32 %v539, %v841
    %v947 = vadd.f32 %v541, %v843
    %v948 = vadd.f32 %v543, %v845
    %v949 = vadd.f32 %v547, %v849
    %v950 = vadd.f32 %v549, %v851
    %v951 = vadd.f32 %v551, %v853
    %v952 = vadd.f32 %v553, %v855
    %v953 = vadd.f32 %v557, %v859
    %v954 = vadd.f32 %v559, %v861
    %v955 = vadd.f32 %v561, %v863
    %v956 = vadd.f32 %v563, %v865
    %v957 = vadd.f32 %v567, %v869
    %v958 = vadd.f32 %v569, %v871
    %v959 = vadd.f32 %v571, %v873
    %v960 = vadd.f32 %v573, %v875
    %v961 = vadd.f32 %v577, %v879
    %v962 = vadd.f32 %v579, %v881
    %v963 = vadd.f32 %v581, %v883
    %v964 = vadd.f32 %v583, %v885
    %v965 = vadd.f32 %v587, %v889
    %v966 = vadd.f32 %v589, %v891
    %v967 = vadd.f32 %v591, %v893
    %v968 = vadd.f32 %v593, %v895
    %v969 = vadd.f32 %v597, %v899
    %v970 = vadd.f32 %v599, %v901
    %v971 = vadd.f32 %v601, %v903
    %v972 = vadd.f32 %v603, %v905
    %v973 = vadd.f32 %v607, %v909
    %v974 = vadd.f32 %v609, %v911
    %v975 = vadd.f32 %v611, %v913
    %v976 = vadd.f32 %v613, %v915
    %v977 = vadd.f32 %v617, %v919
    %v978 = vadd.f32 %v619, %v921
    %v979 = vadd.f32 %v621, %v923
    %v980 = vadd.f32 %v623, %v925
    %v981 = vadd.f32 %v627, %v929
    %v982 = vadd.f32 %v629, %v931
    %v983 = vadd.f32 %v631, %v933
    %v984 = vadd.f32 %v633, %v935
    %v985 = vld [vmem:[%s0 + $0xc] sm:$0xf]
    %v986 = vld [vmem:[%s0 + $0x10] sm:$0xf]
    %v987 = vld [vmem:[%s0 + $0x14] sm:$0xf]
    %v988 = vld [vmem:[%s0 + $0x18] sm:$0xf]
    %v989 = vld [vmem:[%s0 + $0x1c] sm:$0xf]
    %v990 = vld [vmem:[%s0 + $0x20] sm:$0xf]
    %v991 = vld [vmem:[%s0 + $0x24] sm:$0xf]
    %v992 = vld [vmem:[%s0 + $0x28] sm:$0xf]
    %v993 = vld [vmem:[%s0 + $0x2c] sm:$0xf]
    %v994 = vld [vmem:[%s0 + $0x30] sm:$0xf]
    %v995 = vld [vmem:[%s0 + $0x34] sm:$0xf]
    %v996 = vld [vmem:[%s0 + $0x38] sm:$0xf]
    %v997 = vld [vmem:[%s0 + $0x3c] sm:$0xf]
    %v998 = vld [vmem:[%s0 + $0x40] sm:$0xf]
    %v999 = vld [vmem:[%s0 + $0x44] sm:$0xf]
    %v1000 = vld [vmem:[%s0 + $0x48] sm:$0xf]
    %v1001 = vld [vmem:[%s0 + $0x4c] sm:$0xf]
    %v1002 = vld [vmem:[%s0 + $0x50] sm:$0xf]
    %v1003 = vld [vmem:[%s0 + $0x54] sm:$0xf]
    %v1004 = vld [vmem:[%s0 + $0x58] sm:$0xf]
    %v1005 = vld [vmem:[%s0 + $0x5c] sm:$0xf]
    %v1006 = vld [vmem:[%s0 + $0x60] sm:$0xf]
    %v1007 = vld [vmem:[%s0 + $0x64] sm:$0xf]
    %v1008 = vld [vmem:[%s0 + $0x68] sm:$0xf]
    %s1009 = scalar_lea.vmem %s1, 96
    %v1010 = vld [vmem:[%s1009] sm:$0xff]
    %v1011 = vld [vmem:[%s1009 + $0x8] sm:$0xff]
    %v1012 = vld [vmem:[%s1009 + $0x10] sm:$0xff]
    %v1013 = vld [vmem:[%s1009 + $0x18] sm:$0x33]
    %v1038 = vunpack.c.l.b16 %v985
    %v1039 = vunpack.c.l.b16 %v986
    %v1040 = vunpack.c.l.b16 %v987
    %v1041 = vunpack.c.l.b16 %v988
    %v1042 = vunpack.c.l.b16 %v989
    %v1043 = vunpack.c.l.b16 %v990
    %v1044 = vunpack.c.l.b16 %v991
    %v1045 = vunpack.c.l.b16 %v992
    %v1046 = vunpack.c.l.b16 %v993
    %v1047 = vunpack.c.l.b16 %v994
    %v1048 = vunpack.c.l.b16 %v995
    %v1049 = vunpack.c.l.b16 %v996
    %v1050 = vunpack.c.l.b16 %v997
    %v1051 = vunpack.c.l.b16 %v998
    %v1052 = vunpack.c.l.b16 %v999
    %v1053 = vunpack.c.l.b16 %v1000
    %v1054 = vunpack.c.l.b16 %v1001
    %v1055 = vunpack.c.l.b16 %v1002
    %v1056 = vunpack.c.l.b16 %v1003
    %v1057 = vunpack.c.l.b16 %v1004
    %v1058 = vunpack.c.l.b16 %v1005
    %v1059 = vunpack.c.l.b16 %v1006
    %v1060 = vunpack.c.l.b16 %v1007
    %v1061 = vunpack.c.l.b16 %v1008
    %v1062 = vpack.c.b16 %v1039, %v1038
    %v1063 = vpack.c.b16 %v1041, %v1040
    %v1064 = vpack.c.b16 %v1043, %v1042
    %v1065 = vpack.c.b16 %v1045, %v1044
    %v1066 = vpack.c.b16 %v1047, %v1046
    %v1067 = vpack.c.b16 %v1049, %v1048
    %v1068 = vpack.c.b16 %v1051, %v1050
    %v1069 = vpack.c.b16 %v1053, %v1052
    %v1070 = vpack.c.b16 %v1055, %v1054
    %v1071 = vpack.c.b16 %v1057, %v1056
    %v1072 = vpack.c.b16 %v1059, %v1058
    %v1073 = vpack.c.b16 %v1061, %v1060
    %v1078 = vunpack.c.l.b16 %v1010
    %v1079 = vunpack.c.h.b16 %v1010
    %v1080 = vunpack.c.l.b16 %v1011
    %v1081 = vunpack.c.h.b16 %v1011
    %v1082 = vunpack.c.l.b16 %v1012
    %v1083 = vunpack.c.h.b16 %v1012
    %v1084 = vunpack.c.l.b16 %v1013
    %v1085 = vunpack.c.h.b16 %v1013
    %v1086 = vpack.c.b16 %v1080, %v1078
    %v1087 = vpack.c.b16 %v1081, %v1079
    %v1088 = vpack.c.b16 %v1084, %v1082
    %v1089 = vpack.c.b16 %v1085, %v1083
    %v1093 = vsel %vm211, %v1062, 0
    %v1096 = vsel %vm211, %v1063, 0
    %v1099 = vsel %vm211, %v1064, 0
    %v1102 = vsel %vm211, %v1065, 0
    %v1105 = vsel %vm211, %v1066, 0
    %v1108 = vsel %vm211, %v1067, 0
    %v1111 = vsel %vm211, %v1068, 0
    %v1114 = vsel %vm211, %v1069, 0
    %v1117 = vsel %vm211, %v1070, 0
    %v1120 = vsel %vm211, %v1071, 0
    %v1123 = vsel %vm211, %v1072, 0
    %v1126 = vsel %vm211, %v1073, 0
    %v1129 = vsel %vm248, %v1088, 0
    %v1132 = vsel %vm248, %v1089, 0
    %1134 = vmatprep.subr.bf16.mxu0 %v1087
    %1135 = vmatpush1.bf16.msra.mxu0 %v1086
    %1136 = vmatprep.subr.bf16.mxu0 %v1132
    %1137 = vmatpush1.bf16.msra.mxu0 %v1129
    %1138 = vmatprep.subr.bf16.mxu0 0
    %1139 = vmatpush1.bf16.msra.mxu0 0
    %1140 = vmatprep.subr.bf16.mxu0 0
    %1141 = vmatpush1.bf16.msra.mxu0 0
    %1142 = vmatprep.subr.bf16.mxu0 0
    %1143 = vmatpush1.bf16.msra.mxu0 0
    %1144 = vmatprep.subr.bf16.mxu0 0
    %1145 = vmatpush1.bf16.msra.mxu0 0
    %1146 = vmatprep.subr.bf16.mxu0 0
    %1147 = vmatpush1.bf16.msra.mxu0 0
    %1148 = vmatprep.subr.bf16.mxu0 0
    %1149 = vmatpush1.bf16.msra.mxu0 0
    %1150 = vmatprep.subr.bf16.mxu0 0
    %1151 = vmatpush1.bf16.msra.mxu0 0
    %1152 = vmatprep.subr.bf16.mxu0 0
    %1153 = vmatpush1.bf16.msra.mxu0 0
    %1154 = vmatprep.subr.bf16.mxu0 0
    %1155 = vmatpush1.bf16.msra.mxu0 0
    %1156 = vmatprep.subr.bf16.mxu0 0
    %1157 = vmatpush1.bf16.msra.mxu0 0
    %1158 = vmatprep.subr.bf16.mxu0 0
    %1159 = vmatpush1.bf16.msra.mxu0 0
    %1160 = vmatprep.subr.bf16.mxu0 0
    %1161 = vmatpush1.bf16.msra.mxu0 0
    %1162 = vmatprep.subr.bf16.mxu0 0
    %1163 = vmatpush1.bf16.msra.mxu0 0
    %1164 = vmatprep.subr.bf16.mxu0 0
    %1165 = vmatpush1.bf16.msra.mxu0 0
    %1166 = vmatprep.mubr.bf16.mxu0 0
    %1167 = vmatmul.mubr.bf16.gmra.mrb[0].mxu0 %v1093
    %v1168 = vpop.f32.mrb[0].mxu0
    %v1169 = vadd.f32 0.0, %v1168
    %v1170 = vpop.f32.mrb[0].mxu0
    %v1171 = vadd.f32 0.0, %v1170
    %v1172 = vpop.f32.mrb[0].mxu0
    %v1173 = vadd.f32 0.0, %v1172
    %v1174 = vpop.f32.mrb[0].mxu0
    %v1175 = vadd.f32 0.0, %v1174
    %1176 = vmatprep.mubr.bf16.mxu0 0
    %1177 = vmatmul.mubr.bf16.gmra.mrb[0].mxu0 %v1096
    %v1178 = vpop.f32.mrb[0].mxu0
    %v1179 = vadd.f32 0.0, %v1178
    %v1180 = vpop.f32.mrb[0].mxu0
    %v1181 = vadd.f32 0.0, %v1180
    %v1182 = vpop.f32.mrb[0].mxu0
    %v1183 = vadd.f32 0.0, %v1182
    %v1184 = vpop.f32.mrb[0].mxu0
    %v1185 = vadd.f32 0.0, %v1184
    %1186 = vmatprep.mubr.bf16.mxu0 0
    %1187 = vmatmul.mubr.bf16.gmra.mrb[0].mxu0 %v1099
    %v1188 = vpop.f32.mrb[0].mxu0
    %v1189 = vadd.f32 0.0, %v1188
    %v1190 = vpop.f32.mrb[0].mxu0
    %v1191 = vadd.f32 0.0, %v1190
    %v1192 = vpop.f32.mrb[0].mxu0
    %v1193 = vadd.f32 0.0, %v1192
    %v1194 = vpop.f32.mrb[0].mxu0
    %v1195 = vadd.f32 0.0, %v1194
    %1196 = vmatprep.mubr.bf16.mxu0 0
    %1197 = vmatmul.mubr.bf16.gmra.mrb[0].mxu0 %v1102
    %v1198 = vpop.f32.mrb[0].mxu0
    %v1199 = vadd.f32 0.0, %v1198
    %v1200 = vpop.f32.mrb[0].mxu0
    %v1201 = vadd.f32 0.0, %v1200
    %v1202 = vpop.f32.mrb[0].mxu0
    %v1203 = vadd.f32 0.0, %v1202
    %v1204 = vpop.f32.mrb[0].mxu0
    %v1205 = vadd.f32 0.0, %v1204
    %1206 = vmatprep.mubr.bf16.mxu0 0
    %1207 = vmatmul.mubr.bf16.gmra.mrb[0].mxu0 %v1105
    %v1208 = vpop.f32.mrb[0].mxu0
    %v1209 = vadd.f32 0.0, %v1208
    %v1210 = vpop.f32.mrb[0].mxu0
    %v1211 = vadd.f32 0.0, %v1210
    %v1212 = vpop.f32.mrb[0].mxu0
    %v1213 = vadd.f32 0.0, %v1212
    %v1214 = vpop.f32.mrb[0].mxu0
    %v1215 = vadd.f32 0.0, %v1214
    %1216 = vmatprep.mubr.bf16.mxu0 0
    %1217 = vmatmul.mubr.bf16.gmra.mrb[0].mxu0 %v1108
    %v1218 = vpop.f32.mrb[0].mxu0
    %v1219 = vadd.f32 0.0, %v1218
    %v1220 = vpop.f32.mrb[0].mxu0
    %v1221 = vadd.f32 0.0, %v1220
    %v1222 = vpop.f32.mrb[0].mxu0
    %v1223 = vadd.f32 0.0, %v1222
    %v1224 = vpop.f32.mrb[0].mxu0
    %v1225 = vadd.f32 0.0, %v1224
    %1226 = vmatprep.mubr.bf16.mxu0 0
    %1227 = vmatmul.mubr.bf16.gmra.mrb[0].mxu0 %v1111
    %v1228 = vpop.f32.mrb[0].mxu0
    %v1229 = vadd.f32 0.0, %v1228
    %v1230 = vpop.f32.mrb[0].mxu0
    %v1231 = vadd.f32 0.0, %v1230
    %v1232 = vpop.f32.mrb[0].mxu0
    %v1233 = vadd.f32 0.0, %v1232
    %v1234 = vpop.f32.mrb[0].mxu0
    %v1235 = vadd.f32 0.0, %v1234
    %1236 = vmatprep.mubr.bf16.mxu0 0
    %1237 = vmatmul.mubr.bf16.gmra.mrb[0].mxu0 %v1114
    %v1238 = vpop.f32.mrb[0].mxu0
    %v1239 = vadd.f32 0.0, %v1238
    %v1240 = vpop.f32.mrb[0].mxu0
    %v1241 = vadd.f32 0.0, %v1240
    %v1242 = vpop.f32.mrb[0].mxu0
    %v1243 = vadd.f32 0.0, %v1242
    %v1244 = vpop.f32.mrb[0].mxu0
    %v1245 = vadd.f32 0.0, %v1244
    %1246 = vmatprep.mubr.bf16.mxu0 0
    %1247 = vmatmul.mubr.bf16.gmra.mrb[0].mxu0 %v1117
    %v1248 = vpop.f32.mrb[0].mxu0
    %v1249 = vadd.f32 0.0, %v1248
    %v1250 = vpop.f32.mrb[0].mxu0
    %v1251 = vadd.f32 0.0, %v1250
    %v1252 = vpop.f32.mrb[0].mxu0
    %v1253 = vadd.f32 0.0, %v1252
    %v1254 = vpop.f32.mrb[0].mxu0
    %v1255 = vadd.f32 0.0, %v1254
    %1256 = vmatprep.mubr.bf16.mxu0 0
    %1257 = vmatmul.mubr.bf16.gmra.mrb[0].mxu0 %v1120
    %v1258 = vpop.f32.mrb[0].mxu0
    %v1259 = vadd.f32 0.0, %v1258
    %v1260 = vpop.f32.mrb[0].mxu0
    %v1261 = vadd.f32 0.0, %v1260
    %v1262 = vpop.f32.mrb[0].mxu0
    %v1263 = vadd.f32 0.0, %v1262
    %v1264 = vpop.f32.mrb[0].mxu0
    %v1265 = vadd.f32 0.0, %v1264
    %1266 = vmatprep.mubr.bf16.mxu0 0
    %1267 = vmatmul.mubr.bf16.gmra.mrb[0].mxu0 %v1123
    %v1268 = vpop.f32.mrb[0].mxu0
    %v1269 = vadd.f32 0.0, %v1268
    %v1270 = vpop.f32.mrb[0].mxu0
    %v1271 = vadd.f32 0.0, %v1270
    %v1272 = vpop.f32.mrb[0].mxu0
    %v1273 = vadd.f32 0.0, %v1272
    %v1274 = vpop.f32.mrb[0].mxu0
    %v1275 = vadd.f32 0.0, %v1274
    %1276 = vmatprep.mubr.bf16.mxu0 0
    %1277 = vmatmul.mubr.bf16.gmra.mrb[0].mxu0 %v1126
    %v1278 = vpop.f32.mrb[0].mxu0
    %v1279 = vadd.f32 0.0, %v1278
    %v1280 = vpop.f32.mrb[0].mxu0
    %v1281 = vadd.f32 0.0, %v1280
    %v1282 = vpop.f32.mrb[0].mxu0
    %v1283 = vadd.f32 0.0, %v1282
    %v1284 = vpop.f32.mrb[0].mxu0
    %v1285 = vadd.f32 0.0, %v1284
    %1286 = vdwg.mxu0
    %v1287 = vadd.f32 %v937, %v1169
    %v1288 = vadd.f32 %v938, %v1171
    %v1289 = vadd.f32 %v939, %v1173
    %v1290 = vadd.f32 %v940, %v1175
    %v1291 = vadd.f32 %v941, %v1179
    %v1292 = vadd.f32 %v942, %v1181
    %v1293 = vadd.f32 %v943, %v1183
    %v1294 = vadd.f32 %v944, %v1185
    %v1295 = vadd.f32 %v945, %v1189
    %v1296 = vadd.f32 %v946, %v1191
    %v1297 = vadd.f32 %v947, %v1193
    %v1298 = vadd.f32 %v948, %v1195
    %v1299 = vadd.f32 %v949, %v1199
    %v1300 = vadd.f32 %v950, %v1201
    %v1301 = vadd.f32 %v951, %v1203
    %v1302 = vadd.f32 %v952, %v1205
    %v1303 = vadd.f32 %v953, %v1209
    %v1304 = vadd.f32 %v954, %v1211
    %v1305 = vadd.f32 %v955, %v1213
    %v1306 = vadd.f32 %v956, %v1215
    %v1307 = vadd.f32 %v957, %v1219
    %v1308 = vadd.f32 %v958, %v1221
    %v1309 = vadd.f32 %v959, %v1223
    %v1310 = vadd.f32 %v960, %v1225
    %v1311 = vadd.f32 %v961, %v1229
    %v1312 = vadd.f32 %v962, %v1231
    %v1313 = vadd.f32 %v963, %v1233
    %v1314 = vadd.f32 %v964, %v1235
    %v1315 = vadd.f32 %v965, %v1239
    %v1316 = vadd.f32 %v966, %v1241
    %v1317 = vadd.f32 %v967, %v1243
    %v1318 = vadd.f32 %v968, %v1245
    %v1319 = vadd.f32 %v969, %v1249
    %v1320 = vadd.f32 %v970, %v1251
    %v1321 = vadd.f32 %v971, %v1253
    %v1322 = vadd.f32 %v972, %v1255
    %v1323 = vadd.f32 %v973, %v1259
    %v1324 = vadd.f32 %v974, %v1261
    %v1325 = vadd.f32 %v975, %v1263
    %v1326 = vadd.f32 %v976, %v1265
    %v1327 = vadd.f32 %v977, %v1269
    %v1328 = vadd.f32 %v978, %v1271
    %v1329 = vadd.f32 %v979, %v1273
    %v1330 = vadd.f32 %v980, %v1275
    %v1331 = vadd.f32 %v981, %v1279
    %v1332 = vadd.f32 %v982, %v1281
    %v1333 = vadd.f32 %v983, %v1283
    %v1334 = vadd.f32 %v984, %v1285
    %v1335 = vld [vmem:[%s0 + $0x10] sm:$0xf]
    %v1336 = vld [vmem:[%s0 + $0x14] sm:$0xf]
    %v1337 = vld [vmem:[%s0 + $0x18] sm:$0xf]
    %v1338 = vld [vmem:[%s0 + $0x1c] sm:$0xf]
    %v1339 = vld [vmem:[%s0 + $0x20] sm:$0xf]
    %v1340 = vld [vmem:[%s0 + $0x24] sm:$0xf]
    %v1341 = vld [vmem:[%s0 + $0x28] sm:$0xf]
    %v1342 = vld [vmem:[%s0 + $0x2c] sm:$0xf]
    %v1343 = vld [vmem:[%s0 + $0x30] sm:$0xf]
    %v1344 = vld [vmem:[%s0 + $0x34] sm:$0xf]
    %v1345 = vld [vmem:[%s0 + $0x38] sm:$0xf]
    %v1346 = vld [vmem:[%s0 + $0x3c] sm:$0xf]
    %v1347 = vld [vmem:[%s0 + $0x40] sm:$0xf]
    %v1348 = vld [vmem:[%s0 + $0x44] sm:$0xf]
    %v1349 = vld [vmem:[%s0 + $0x48] sm:$0xf]
    %v1350 = vld [vmem:[%s0 + $0x4c] sm:$0xf]
    %v1351 = vld [vmem:[%s0 + $0x50] sm:$0xf]
    %v1352 = vld [vmem:[%s0 + $0x54] sm:$0xf]
    %v1353 = vld [vmem:[%s0 + $0x58] sm:$0xf]
    %v1354 = vld [vmem:[%s0 + $0x5c] sm:$0xf]
    %v1355 = vld [vmem:[%s0 + $0x60] sm:$0xf]
    %v1356 = vld [vmem:[%s0 + $0x64] sm:$0xf]
    %v1357 = vld [vmem:[%s0 + $0x68] sm:$0xf]
    %v1358 = vld [vmem:[%s0 + $0x6c] sm:$0xf]
    %s1359 = scalar_lea.vmem %s1, 128
    %v1360 = vld [vmem:[%s1359] sm:$0xff]
    %v1361 = vld [vmem:[%s1359 + $0x8] sm:$0xff]
    %v1362 = vld [vmem:[%s1359 + $0x10] sm:$0xff]
    %v1363 = vld [vmem:[%s1359 + $0x18] sm:$0x33]
    %v1388 = vunpack.c.l.b16 %v1335
    %v1389 = vunpack.c.l.b16 %v1336
    %v1390 = vunpack.c.l.b16 %v1337
    %v1391 = vunpack.c.l.b16 %v1338
    %v1392 = vunpack.c.l.b16 %v1339
    %v1393 = vunpack.c.l.b16 %v1340
    %v1394 = vunpack.c.l.b16 %v1341
    %v1395 = vunpack.c.l.b16 %v1342
    %v1396 = vunpack.c.l.b16 %v1343
    %v1397 = vunpack.c.l.b16 %v1344
    %v1398 = vunpack.c.l.b16 %v1345
    %v1399 = vunpack.c.l.b16 %v1346
    %v1400 = vunpack.c.l.b16 %v1347
    %v1401 = vunpack.c.l.b16 %v1348
    %v1402 = vunpack.c.l.b16 %v1349
    %v1403 = vunpack.c.l.b16 %v1350
    %v1404 = vunpack.c.l.b16 %v1351
    %v1405 = vunpack.c.l.b16 %v1352
    %v1406 = vunpack.c.l.b16 %v1353
    %v1407 = vunpack.c.l.b16 %v1354
    %v1408 = vunpack.c.l.b16 %v1355
    %v1409 = vunpack.c.l.b16 %v1356
    %v1410 = vunpack.c.l.b16 %v1357
    %v1411 = vunpack.c.l.b16 %v1358
    %v1412 = vpack.c.b16 %v1389, %v1388
    %v1413 = vpack.c.b16 %v1391, %v1390
    %v1414 = vpack.c.b16 %v1393, %v1392
    %v1415 = vpack.c.b16 %v1395, %v1394
    %v1416 = vpack.c.b16 %v1397, %v1396
    %v1417 = vpack.c.b16 %v1399, %v1398
    %v1418 = vpack.c.b16 %v1401, %v1400
    %v1419 = vpack.c.b16 %v1403, %v1402
    %v1420 = vpack.c.b16 %v1405, %v1404
    %v1421 = vpack.c.b16 %v1407, %v1406
    %v1422 = vpack.c.b16 %v1409, %v1408
    %v1423 = vpack.c.b16 %v1411, %v1410
    %v1428 = vunpack.c.l.b16 %v1360
    %v1429 = vunpack.c.h.b16 %v1360
    %v1430 = vunpack.c.l.b16 %v1361
    %v1431 = vunpack.c.h.b16 %v1361
    %v1432 = vunpack.c.l.b16 %v1362
    %v1433 = vunpack.c.h.b16 %v1362
    %v1434 = vunpack.c.l.b16 %v1363
    %v1435 = vunpack.c.h.b16 %v1363
    %v1436 = vpack.c.b16 %v1430, %v1428
    %v1437 = vpack.c.b16 %v1431, %v1429
    %v1438 = vpack.c.b16 %v1434, %v1432
    %v1439 = vpack.c.b16 %v1435, %v1433
    %v1443 = vsel %vm211, %v1412, 0
    %v1446 = vsel %vm211, %v1413, 0
    %v1449 = vsel %vm211, %v1414, 0
    %v1452 = vsel %vm211, %v1415, 0
    %v1455 = vsel %vm211, %v1416, 0
    %v1458 = vsel %vm211, %v1417, 0
    %v1461 = vsel %vm211, %v1418, 0
    %v1464 = vsel %vm211, %v1419, 0
    %v1467 = vsel %vm211, %v1420, 0
    %v1470 = vsel %vm211, %v1421, 0
    %v1473 = vsel %vm211, %v1422, 0
    %v1476 = vsel %vm211, %v1423, 0
    %v1479 = vsel %vm248, %v1438, 0
    %v1482 = vsel %vm248, %v1439, 0
    %1484 = vmatprep.subr.bf16.mxu0 %v1437
    %1485 = vmatpush1.bf16.msra.mxu0 %v1436
    %1486 = vmatprep.subr.bf16.mxu0 %v1482
    %1487 = vmatpush1.bf16.msra.mxu0 %v1479
    %1488 = vmatprep.subr.bf16.mxu0 0
    %1489 = vmatpush1.bf16.msra.mxu0 0
    %1490 = vmatprep.subr.bf16.mxu0 0
    %1491 = vmatpush1.bf16.msra.mxu0 0
    %1492 = vmatprep.subr.bf16.mxu0 0
    %1493 = vmatpush1.bf16.msra.mxu0 0
    %1494 = vmatprep.subr.bf16.mxu0 0
    %1495 = vmatpush1.bf16.msra.mxu0 0
    %1496 = vmatprep.subr.bf16.mxu0 0
    %1497 = vmatpush1.bf16.msra.mxu0 0
    %1498 = vmatprep.subr.bf16.mxu0 0
    %1499 = vmatpush1.bf16.msra.mxu0 0
    %1500 = vmatprep.subr.bf16.mxu0 0
    %1501 = vmatpush1.bf16.msra.mxu0 0
    %1502 = vmatprep.subr.bf16.mxu0 0
    %1503 = vmatpush1.bf16.msra.mxu0 0
    %1504 = vmatprep.subr.bf16.mxu0 0
    %1505 = vmatpush1.bf16.msra.mxu0 0
    %1506 = vmatprep.subr.bf16.mxu0 0
    %1507 = vmatpush1.bf16.msra.mxu0 0
    %1508 = vmatprep.subr.bf16.mxu0 0
    %1509 = vmatpush1.bf16.msra.mxu0 0
    %1510 = vmatprep.subr.bf16.mxu0 0
    %1511 = vmatpush1.bf16.msra.mxu0 0
    %1512 = vmatprep.subr.bf16.mxu0 0
    %1513 = vmatpush1.bf16.msra.mxu0 0
    %1514 = vmatprep.subr.bf16.mxu0 0
    %1515 = vmatpush1.bf16.msra.mxu0 0
    %1516 = vmatprep.mubr.bf16.mxu0 0
    %1517 = vmatmul.mubr.bf16.gmra.mrb[0].mxu0 %v1443
    %v1518 = vpop.f32.mrb[0].mxu0
    %v1519 = vadd.f32 0.0, %v1518
    %v1520 = vpop.f32.mrb[0].mxu0
    %v1521 = vadd.f32 0.0, %v1520
    %v1522 = vpop.f32.mrb[0].mxu0
    %v1523 = vadd.f32 0.0, %v1522
    %v1524 = vpop.f32.mrb[0].mxu0
    %v1525 = vadd.f32 0.0, %v1524
    %1526 = vmatprep.mubr.bf16.mxu0 0
    %1527 = vmatmul.mubr.bf16.gmra.mrb[0].mxu0 %v1446
    %v1528 = vpop.f32.mrb[0].mxu0
    %v1529 = vadd.f32 0.0, %v1528
    %v1530 = vpop.f32.mrb[0].mxu0
    %v1531 = vadd.f32 0.0, %v1530
    %v1532 = vpop.f32.mrb[0].mxu0
    %v1533 = vadd.f32 0.0, %v1532
    %v1534 = vpop.f32.mrb[0].mxu0
    %v1535 = vadd.f32 0.0, %v1534
    %1536 = vmatprep.mubr.bf16.mxu0 0
    %1537 = vmatmul.mubr.bf16.gmra.mrb[0].mxu0 %v1449
    %v1538 = vpop.f32.mrb[0].mxu0
    %v1539 = vadd.f32 0.0, %v1538
    %v1540 = vpop.f32.mrb[0].mxu0
    %v1541 = vadd.f32 0.0, %v1540
    %v1542 = vpop.f32.mrb[0].mxu0
    %v1543 = vadd.f32 0.0, %v1542
    %v1544 = vpop.f32.mrb[0].mxu0
    %v1545 = vadd.f32 0.0, %v1544
    %1546 = vmatprep.mubr.bf16.mxu0 0
    %1547 = vmatmul.mubr.bf16.gmra.mrb[0].mxu0 %v1452
    %v1548 = vpop.f32.mrb[0].mxu0
    %v1549 = vadd.f32 0.0, %v1548
    %v1550 = vpop.f32.mrb[0].mxu0
    %v1551 = vadd.f32 0.0, %v1550
    %v1552 = vpop.f32.mrb[0].mxu0
    %v1553 = vadd.f32 0.0, %v1552
    %v1554 = vpop.f32.mrb[0].mxu0
    %v1555 = vadd.f32 0.0, %v1554
    %1556 = vmatprep.mubr.bf16.mxu0 0
    %1557 = vmatmul.mubr.bf16.gmra.mrb[0].mxu0 %v1455
    %v1558 = vpop.f32.mrb[0].mxu0
    %v1559 = vadd.f32 0.0, %v1558
    %v1560 = vpop.f32.mrb[0].mxu0
    %v1561 = vadd.f32 0.0, %v1560
    %v1562 = vpop.f32.mrb[0].mxu0
    %v1563 = vadd.f32 0.0, %v1562
    %v1564 = vpop.f32.mrb[0].mxu0
    %v1565 = vadd.f32 0.0, %v1564
    %1566 = vmatprep.mubr.bf16.mxu0 0
    %1567 = vmatmul.mubr.bf16.gmra.mrb[0].mxu0 %v1458
    %v1568 = vpop.f32.mrb[0].mxu0
    %v1569 = vadd.f32 0.0, %v1568
    %v1570 = vpop.f32.mrb[0].mxu0
    %v1571 = vadd.f32 0.0, %v1570
    %v1572 = vpop.f32.mrb[0].mxu0
    %v1573 = vadd.f32 0.0, %v1572
    %v1574 = vpop.f32.mrb[0].mxu0
    %v1575 = vadd.f32 0.0, %v1574
    %1576 = vmatprep.mubr.bf16.mxu0 0
    %1577 = vmatmul.mubr.bf16.gmra.mrb[0].mxu0 %v1461
    %v1578 = vpop.f32.mrb[0].mxu0
    %v1579 = vadd.f32 0.0, %v1578
    %v1580 = vpop.f32.mrb[0].mxu0
    %v1581 = vadd.f32 0.0, %v1580
    %v1582 = vpop.f32.mrb[0].mxu0
    %v1583 = vadd.f32 0.0, %v1582
    %v1584 = vpop.f32.mrb[0].mxu0
    %v1585 = vadd.f32 0.0, %v1584
    %1586 = vmatprep.mubr.bf16.mxu0 0
    %1587 = vmatmul.mubr.bf16.gmra.mrb[0].mxu0 %v1464
    %v1588 = vpop.f32.mrb[0].mxu0
    %v1589 = vadd.f32 0.0, %v1588
    %v1590 = vpop.f32.mrb[0].mxu0
    %v1591 = vadd.f32 0.0, %v1590
    %v1592 = vpop.f32.mrb[0].mxu0
    %v1593 = vadd.f32 0.0, %v1592
    %v1594 = vpop.f32.mrb[0].mxu0
    %v1595 = vadd.f32 0.0, %v1594
    %1596 = vmatprep.mubr.bf16.mxu0 0
    %1597 = vmatmul.mubr.bf16.gmra.mrb[0].mxu0 %v1467
    %v1598 = vpop.f32.mrb[0].mxu0
    %v1599 = vadd.f32 0.0, %v1598
    %v1600 = vpop.f32.mrb[0].mxu0
    %v1601 = vadd.f32 0.0, %v1600
    %v1602 = vpop.f32.mrb[0].mxu0
    %v1603 = vadd.f32 0.0, %v1602
    %v1604 = vpop.f32.mrb[0].mxu0
    %v1605 = vadd.f32 0.0, %v1604
    %1606 = vmatprep.mubr.bf16.mxu0 0
    %1607 = vmatmul.mubr.bf16.gmra.mrb[0].mxu0 %v1470
    %v1608 = vpop.f32.mrb[0].mxu0
    %v1609 = vadd.f32 0.0, %v1608
    %v1610 = vpop.f32.mrb[0].mxu0
    %v1611 = vadd.f32 0.0, %v1610
    %v1612 = vpop.f32.mrb[0].mxu0
    %v1613 = vadd.f32 0.0, %v1612
    %v1614 = vpop.f32.mrb[0].mxu0
    %v1615 = vadd.f32 0.0, %v1614
    %1616 = vmatprep.mubr.bf16.mxu0 0
    %1617 = vmatmul.mubr.bf16.gmra.mrb[0].mxu0 %v1473
    %v1618 = vpop.f32.mrb[0].mxu0
    %v1619 = vadd.f32 0.0, %v1618
    %v1620 = vpop.f32.mrb[0].mxu0
    %v1621 = vadd.f32 0.0, %v1620
    %v1622 = vpop.f32.mrb[0].mxu0
    %v1623 = vadd.f32 0.0, %v1622
    %v1624 = vpop.f32.mrb[0].mxu0
    %v1625 = vadd.f32 0.0, %v1624
    %1626 = vmatprep.mubr.bf16.mxu0 0
    %1627 = vmatmul.mubr.bf16.gmra.mrb[0].mxu0 %v1476
    %v1628 = vpop.f32.mrb[0].mxu0
    %v1629 = vadd.f32 0.0, %v1628
    %v1630 = vpop.f32.mrb[0].mxu0
    %v1631 = vadd.f32 0.0, %v1630
    %v1632 = vpop.f32.mrb[0].mxu0
    %v1633 = vadd.f32 0.0, %v1632
    %v1634 = vpop.f32.mrb[0].mxu0
    %v1635 = vadd.f32 0.0, %v1634
    %1636 = vdwg.mxu0
    %v1637 = vadd.f32 %v1287, %v1519
    %v1638 = vadd.f32 %v1288, %v1521
    %v1639 = vadd.f32 %v1289, %v1523
    %v1640 = vadd.f32 %v1290, %v1525
    %v1641 = vadd.f32 %v1291, %v1529
    %v1642 = vadd.f32 %v1292, %v1531
    %v1643 = vadd.f32 %v1293, %v1533
    %v1644 = vadd.f32 %v1294, %v1535
    %v1645 = vadd.f32 %v1295, %v1539
    %v1646 = vadd.f32 %v1296, %v1541
    %v1647 = vadd.f32 %v1297, %v1543
    %v1648 = vadd.f32 %v1298, %v1545
    %v1649 = vadd.f32 %v1299, %v1549
    %v1650 = vadd.f32 %v1300, %v1551
    %v1651 = vadd.f32 %v1301, %v1553
    %v1652 = vadd.f32 %v1302, %v1555
    %v1653 = vadd.f32 %v1303, %v1559
    %v1654 = vadd.f32 %v1304, %v1561
    %v1655 = vadd.f32 %v1305, %v1563
    %v1656 = vadd.f32 %v1306, %v1565
    %v1657 = vadd.f32 %v1307, %v1569
    %v1658 = vadd.f32 %v1308, %v1571
    %v1659 = vadd.f32 %v1309, %v1573
    %v1660 = vadd.f32 %v1310, %v1575
    %v1661 = vadd.f32 %v1311, %v1579
    %v1662 = vadd.f32 %v1312, %v1581
    %v1663 = vadd.f32 %v1313, %v1583
    %v1664 = vadd.f32 %v1314, %v1585
    %v1665 = vadd.f32 %v1315, %v1589
    %v1666 = vadd.f32 %v1316, %v1591
    %v1667 = vadd.f32 %v1317, %v1593
    %v1668 = vadd.f32 %v1318, %v1595
    %v1669 = vadd.f32 %v1319, %v1599
    %v1670 = vadd.f32 %v1320, %v1601
    %v1671 = vadd.f32 %v1321, %v1603
    %v1672 = vadd.f32 %v1322, %v1605
    %v1673 = vadd.f32 %v1323, %v1609
    %v1674 = vadd.f32 %v1324, %v1611
    %v1675 = vadd.f32 %v1325, %v1613
    %v1676 = vadd.f32 %v1326, %v1615
    %v1677 = vadd.f32 %v1327, %v1619
    %v1678 = vadd.f32 %v1328, %v1621
    %v1679 = vadd.f32 %v1329, %v1623
    %v1680 = vadd.f32 %v1330, %v1625
    %v1681 = vadd.f32 %v1331, %v1629
    %v1682 = vadd.f32 %v1332, %v1631
    %v1683 = vadd.f32 %v1333, %v1633
    %v1684 = vadd.f32 %v1334, %v1635
    %v1686 = vlaneseq
    %v1687 = vshrl.u32 %v1686, 7
    %v1688 = vsub.s32 0, %v1687
    %v1689 = vrot.slane %v98, %v1688
    %v1690 = vlaneseq
    %v1691 = vshrl.u32 %v1690, 7
    %v1692 = vsub.s32 1, %v1691
    %v1693 = vrot.slane %v98, %v1692
    %v1696 = vadd.f32 %v1637, %v1689
    %v1697 = vadd.f32 %v1638, %v1693
    %v1698 = vadd.f32 %v1639, %v1689
    %v1699 = vadd.f32 %v1640, %v1693
    %v1700 = vadd.f32 %v1641, %v1689
    %v1701 = vadd.f32 %v1642, %v1693
    %v1702 = vadd.f32 %v1643, %v1689
    %v1703 = vadd.f32 %v1644, %v1693
    %v1704 = vadd.f32 %v1645, %v1689
    %v1705 = vadd.f32 %v1646, %v1693
    %v1706 = vadd.f32 %v1647, %v1689
    %v1707 = vadd.f32 %v1648, %v1693
    %v1708 = vadd.f32 %v1649, %v1689
    %v1709 = vadd.f32 %v1650, %v1693
    %v1710 = vadd.f32 %v1651, %v1689
    %v1711 = vadd.f32 %v1652, %v1693
    %v1712 = vadd.f32 %v1653, %v1689
    %v1713 = vadd.f32 %v1654, %v1693
    %v1714 = vadd.f32 %v1655, %v1689
    %v1715 = vadd.f32 %v1656, %v1693
    %v1716 = vadd.f32 %v1657, %v1689
    %v1717 = vadd.f32 %v1658, %v1693
    %v1718 = vadd.f32 %v1659, %v1689
    %v1719 = vadd.f32 %v1660, %v1693
    %v1720 = vadd.f32 %v1661, %v1689
    %v1721 = vadd.f32 %v1662, %v1693
    %v1722 = vadd.f32 %v1663, %v1689
    %v1723 = vadd.f32 %v1664, %v1693
    %v1724 = vadd.f32 %v1665, %v1689
    %v1725 = vadd.f32 %v1666, %v1693
    %v1726 = vadd.f32 %v1667, %v1689
    %v1727 = vadd.f32 %v1668, %v1693
    %v1728 = vadd.f32 %v1669, %v1689
    %v1729 = vadd.f32 %v1670, %v1693
    %v1730 = vadd.f32 %v1671, %v1689
    %v1731 = vadd.f32 %v1672, %v1693
    %v1732 = vadd.f32 %v1673, %v1689
    %v1733 = vadd.f32 %v1674, %v1693
    %v1734 = vadd.f32 %v1675, %v1689
    %v1735 = vadd.f32 %v1676, %v1693
    %v1736 = vadd.f32 %v1677, %v1689
    %v1737 = vadd.f32 %v1678, %v1693
    %v1738 = vadd.f32 %v1679, %v1689
    %v1739 = vadd.f32 %v1680, %v1693
    %v1740 = vadd.f32 %v1681, %v1689
    %v1741 = vadd.f32 %v1682, %v1693
    %v1742 = vadd.f32 %v1683, %v1689
    %v1743 = vadd.f32 %v1684, %v1693
    %v1744 = vsub.f32 0.0, %v1696
    %v1745 = vsub.f32 0.0, %v1697
    %v1746 = vsub.f32 0.0, %v1698
    %v1747 = vsub.f32 0.0, %v1699
    %v1748 = vsub.f32 0.0, %v1700
    %v1749 = vsub.f32 0.0, %v1701
    %v1750 = vsub.f32 0.0, %v1702
    %v1751 = vsub.f32 0.0, %v1703
    %v1752 = vsub.f32 0.0, %v1704
    %v1753 = vsub.f32 0.0, %v1705
    %v1754 = vsub.f32 0.0, %v1706
    %v1755 = vsub.f32 0.0, %v1707
    %v1756 = vsub.f32 0.0, %v1708
    %v1757 = vsub.f32 0.0, %v1709
    %v1758 = vsub.f32 0.0, %v1710
    %v1759 = vsub.f32 0.0, %v1711
    %v1760 = vsub.f32 0.0, %v1712
    %v1761 = vsub.f32 0.0, %v1713
    %v1762 = vsub.f32 0.0, %v1714
    %v1763 = vsub.f32 0.0, %v1715
    %v1764 = vsub.f32 0.0, %v1716
    %v1765 = vsub.f32 0.0, %v1717
    %v1766 = vsub.f32 0.0, %v1718
    %v1767 = vsub.f32 0.0, %v1719
    %v1768 = vsub.f32 0.0, %v1720
    %v1769 = vsub.f32 0.0, %v1721
    %v1770 = vsub.f32 0.0, %v1722
    %v1771 = vsub.f32 0.0, %v1723
    %v1772 = vsub.f32 0.0, %v1724
    %v1773 = vsub.f32 0.0, %v1725
    %v1774 = vsub.f32 0.0, %v1726
    %v1775 = vsub.f32 0.0, %v1727
    %v1776 = vsub.f32 0.0, %v1728
    %v1777 = vsub.f32 0.0, %v1729
    %v1778 = vsub.f32 0.0, %v1730
    %v1779 = vsub.f32 0.0, %v1731
    %v1780 = vsub.f32 0.0, %v1732
    %v1781 = vsub.f32 0.0, %v1733
    %v1782 = vsub.f32 0.0, %v1734
    %v1783 = vsub.f32 0.0, %v1735
    %v1784 = vsub.f32 0.0, %v1736
    %v1785 = vsub.f32 0.0, %v1737
    %v1786 = vsub.f32 0.0, %v1738
    %v1787 = vsub.f32 0.0, %v1739
    %v1788 = vsub.f32 0.0, %v1740
    %v1789 = vsub.f32 0.0, %v1741
    %v1790 = vsub.f32 0.0, %v1742
    %v1791 = vsub.f32 0.0, %v1743
    %v1792 = vmul.f32 %v1744, 1.442695
    %v1793 = vpow.pop %v1792
    %v1794 = vmul.f32 %v1745, 1.442695
    %v1795 = vpow.pop %v1794
    %v1796 = vmul.f32 %v1746, 1.442695
    %v1797 = vpow.pop %v1796
    %v1798 = vmul.f32 %v1747, 1.442695
    %v1799 = vpow.pop %v1798
    %v1800 = vmul.f32 %v1748, 1.442695
    %v1801 = vpow.pop %v1800
    %v1802 = vmul.f32 %v1749, 1.442695
    %v1803 = vpow.pop %v1802
    %v1804 = vmul.f32 %v1750, 1.442695
    %v1805 = vpow.pop %v1804
    %v1806 = vmul.f32 %v1751, 1.442695
    %v1807 = vpow.pop %v1806
    %v1808 = vmul.f32 %v1752, 1.442695
    %v1809 = vpow.pop %v1808
    %v1810 = vmul.f32 %v1753, 1.442695
    %v1811 = vpow.pop %v1810
    %v1812 = vmul.f32 %v1754, 1.442695
    %v1813 = vpow.pop %v1812
    %v1814 = vmul.f32 %v1755, 1.442695
    %v1815 = vpow.pop %v1814
    %v1816 = vmul.f32 %v1756, 1.442695
    %v1817 = vpow.pop %v1816
    %v1818 = vmul.f32 %v1757, 1.442695
    %v1819 = vpow.pop %v1818
    %v1820 = vmul.f32 %v1758, 1.442695
    %v1821 = vpow.pop %v1820
    %v1822 = vmul.f32 %v1759, 1.442695
    %v1823 = vpow.pop %v1822
    %v1824 = vmul.f32 %v1760, 1.442695
    %v1825 = vpow.pop %v1824
    %v1826 = vmul.f32 %v1761, 1.442695
    %v1827 = vpow.pop %v1826
    %v1828 = vmul.f32 %v1762, 1.442695
    %v1829 = vpow.pop %v1828
    %v1830 = vmul.f32 %v1763, 1.442695
    %v1831 = vpow.pop %v1830
    %v1832 = vmul.f32 %v1764, 1.442695
    %v1833 = vpow.pop %v1832
    %v1834 = vmul.f32 %v1765, 1.442695
    %v1835 = vpow.pop %v1834
    %v1836 = vmul.f32 %v1766, 1.442695
    %v1837 = vpow.pop %v1836
    %v1838 = vmul.f32 %v1767, 1.442695
    %v1839 = vpow.pop %v1838
    %v1840 = vmul.f32 %v1768, 1.442695
    %v1841 = vpow.pop %v1840
    %v1842 = vmul.f32 %v1769, 1.442695
    %v1843 = vpow.pop %v1842
    %v1844 = vmul.f32 %v1770, 1.442695
    %v1845 = vpow.pop %v1844
    %v1846 = vmul.f32 %v1771, 1.442695
    %v1847 = vpow.pop %v1846
    %v1848 = vmul.f32 %v1772, 1.442695
    %v1849 = vpow.pop %v1848
    %v1850 = vmul.f32 %v1773, 1.442695
    %v1851 = vpow.pop %v1850
    %v1852 = vmul.f32 %v1774, 1.442695
    %v1853 = vpow.pop %v1852
    %v1854 = vmul.f32 %v1775, 1.442695
    %v1855 = vpow.pop %v1854
    %v1856 = vmul.f32 %v1776, 1.442695
    %v1857 = vpow.pop %v1856
    %v1858 = vmul.f32 %v1777, 1.442695
    %v1859 = vpow.pop %v1858
    %v1860 = vmul.f32 %v1778, 1.442695
    %v1861 = vpow.pop %v1860
    %v1862 = vmul.f32 %v1779, 1.442695
    %v1863 = vpow.pop %v1862
    %v1864 = vmul.f32 %v1780, 1.442695
    %v1865 = vpow.pop %v1864
    %v1866 = vmul.f32 %v1781, 1.442695
    %v1867 = vpow.pop %v1866
    %v1868 = vmul.f32 %v1782, 1.442695
    %v1869 = vpow.pop %v1868
    %v1870 = vmul.f32 %v1783, 1.442695
    %v1871 = vpow.pop %v1870
    %v1872 = vmul.f32 %v1784, 1.442695
    %v1873 = vpow.pop %v1872
    %v1874 = vmul.f32 %v1785, 1.442695
    %v1875 = vpow.pop %v1874
    %v1876 = vmul.f32 %v1786, 1.442695
    %v1877 = vpow.pop %v1876
    %v1878 = vmul.f32 %v1787, 1.442695
    %v1879 = vpow.pop %v1878
    %v1880 = vmul.f32 %v1788, 1.442695
    %v1881 = vpow.pop %v1880
    %v1882 = vmul.f32 %v1789, 1.442695
    %v1883 = vpow.pop %v1882
    %v1884 = vmul.f32 %v1790, 1.442695
    %v1885 = vpow.pop %v1884
    %v1886 = vmul.f32 %v1791, 1.442695
    %v1887 = vpow.pop %v1886
    %v1888 = vadd.f32 %v1793, 1.0
    %v1889 = vadd.f32 %v1795, 1.0
    %v1890 = vadd.f32 %v1797, 1.0
    %v1891 = vadd.f32 %v1799, 1.0
    %v1892 = vadd.f32 %v1801, 1.0
    %v1893 = vadd.f32 %v1803, 1.0
    %v1894 = vadd.f32 %v1805, 1.0
    %v1895 = vadd.f32 %v1807, 1.0
    %v1896 = vadd.f32 %v1809, 1.0
    %v1897 = vadd.f32 %v1811, 1.0
    %v1898 = vadd.f32 %v1813, 1.0
    %v1899 = vadd.f32 %v1815, 1.0
    %v1900 = vadd.f32 %v1817, 1.0
    %v1901 = vadd.f32 %v1819, 1.0
    %v1902 = vadd.f32 %v1821, 1.0
    %v1903 = vadd.f32 %v1823, 1.0
    %v1904 = vadd.f32 %v1825, 1.0
    %v1905 = vadd.f32 %v1827, 1.0
    %v1906 = vadd.f32 %v1829, 1.0
    %v1907 = vadd.f32 %v1831, 1.0
    %v1908 = vadd.f32 %v1833, 1.0
    %v1909 = vadd.f32 %v1835, 1.0
    %v1910 = vadd.f32 %v1837, 1.0
    %v1911 = vadd.f32 %v1839, 1.0
    %v1912 = vadd.f32 %v1841, 1.0
    %v1913 = vadd.f32 %v1843, 1.0
    %v1914 = vadd.f32 %v1845, 1.0
    %v1915 = vadd.f32 %v1847, 1.0
    %v1916 = vadd.f32 %v1849, 1.0
    %v1917 = vadd.f32 %v1851, 1.0
    %v1918 = vadd.f32 %v1853, 1.0
    %v1919 = vadd.f32 %v1855, 1.0
    %v1920 = vadd.f32 %v1857, 1.0
    %v1921 = vadd.f32 %v1859, 1.0
    %v1922 = vadd.f32 %v1861, 1.0
    %v1923 = vadd.f32 %v1863, 1.0
    %v1924 = vadd.f32 %v1865, 1.0
    %v1925 = vadd.f32 %v1867, 1.0
    %v1926 = vadd.f32 %v1869, 1.0
    %v1927 = vadd.f32 %v1871, 1.0
    %v1928 = vadd.f32 %v1873, 1.0
    %v1929 = vadd.f32 %v1875, 1.0
    %v1930 = vadd.f32 %v1877, 1.0
    %v1931 = vadd.f32 %v1879, 1.0
    %v1932 = vadd.f32 %v1881, 1.0
    %v1933 = vadd.f32 %v1883, 1.0
    %v1934 = vadd.f32 %v1885, 1.0
    %v1935 = vadd.f32 %v1887, 1.0
    %v1936 = vrcp.pop %v1888
    %v1937 = vrcp.pop %v1889
    %v1938 = vrcp.pop %v1890
    %v1939 = vrcp.pop %v1891
    %v1940 = vrcp.pop %v1892
    %v1941 = vrcp.pop %v1893
    %v1942 = vrcp.pop %v1894
    %v1943 = vrcp.pop %v1895
    %v1944 = vrcp.pop %v1896
    %v1945 = vrcp.pop %v1897
    %v1946 = vrcp.pop %v1898
    %v1947 = vrcp.pop %v1899
    %v1948 = vrcp.pop %v1900
    %v1949 = vrcp.pop %v1901
    %v1950 = vrcp.pop %v1902
    %v1951 = vrcp.pop %v1903
    %v1952 = vrcp.pop %v1904
    %v1953 = vrcp.pop %v1905
    %v1954 = vrcp.pop %v1906
    %v1955 = vrcp.pop %v1907
    %v1956 = vrcp.pop %v1908
    %v1957 = vrcp.pop %v1909
    %v1958 = vrcp.pop %v1910
    %v1959 = vrcp.pop %v1911
    %v1960 = vrcp.pop %v1912
    %v1961 = vrcp.pop %v1913
    %v1962 = vrcp.pop %v1914
    %v1963 = vrcp.pop %v1915
    %v1964 = vrcp.pop %v1916
    %v1965 = vrcp.pop %v1917
    %v1966 = vrcp.pop %v1918
    %v1967 = vrcp.pop %v1919
    %v1968 = vrcp.pop %v1920
    %v1969 = vrcp.pop %v1921
    %v1970 = vrcp.pop %v1922
    %v1971 = vrcp.pop %v1923
    %v1972 = vrcp.pop %v1924
    %v1973 = vrcp.pop %v1925
    %v1974 = vrcp.pop %v1926
    %v1975 = vrcp.pop %v1927
    %v1976 = vrcp.pop %v1928
    %v1977 = vrcp.pop %v1929
    %v1978 = vrcp.pop %v1930
    %v1979 = vrcp.pop %v1931
    %v1980 = vrcp.pop %v1932
    %v1981 = vrcp.pop %v1933
    %v1982 = vrcp.pop %v1934
    %v1983 = vrcp.pop %v1935
    %v1984 = vmax.f32 %v1936, %v1938
    %v1985 = vmax.f32 %v1937, %v1939
    %v1986 = vmax.f32 %v1940, %v1942
    %v1987 = vmax.f32 %v1941, %v1943
    %v1988 = vmax.f32 %v1944, %v1946
    %v1989 = vmax.f32 %v1945, %v1947
    %v1990 = vmax.f32 %v1948, %v1950
    %v1991 = vmax.f32 %v1949, %v1951
    %v1992 = vmax.f32 %v1952, %v1954
    %v1993 = vmax.f32 %v1953, %v1955
    %v1994 = vmax.f32 %v1956, %v1958
    %v1995 = vmax.f32 %v1957, %v1959
    %v1996 = vmax.f32 %v1960, %v1962
    %v1997 = vmax.f32 %v1961, %v1963
    %v1998 = vmax.f32 %v1964, %v1966
    %v1999 = vmax.f32 %v1965, %v1967
    %v2000 = vmax.f32 %v1968, %v1970
    %v2001 = vmax.f32 %v1969, %v1971
    %v2002 = vmax.f32 %v1972, %v1974
    %v2003 = vmax.f32 %v1973, %v1975
    %v2004 = vmax.f32 %v1976, %v1978
    %v2005 = vmax.f32 %v1977, %v1979
    %v2006 = vmax.f32 %v1980, %v1982
    %v2007 = vmax.f32 %v1981, %v1983
    %v2008 = vpack.c.bf16 %v1986, %v1984
    %v2009 = vpack.c.bf16 %v1987, %v1985
    %v2010 = vpack.c.bf16 %v1990, %v1988
    %v2011 = vpack.c.bf16 %v1991, %v1989
    %v2012 = vpack.c.bf16 %v1994, %v1992
    %v2013 = vpack.c.bf16 %v1995, %v1993
    %v2014 = vpack.c.bf16 %v1998, %v1996
    %v2015 = vpack.c.bf16 %v1999, %v1997
    %v2016 = vpack.c.bf16 %v2002, %v2000
    %v2017 = vpack.c.bf16 %v2003, %v2001
    %v2018 = vpack.c.bf16 %v2006, %v2004
    %v2019 = vpack.c.bf16 %v2007, %v2005
    %v2020 = vld [vmem:[%s5] sm:$0xf]
    %v2021 = vld [vmem:[%s5 + $0x4] sm:$0xf]
    %v2022 = vld [vmem:[%s5 + $0x8] sm:$0xf]
    %v2023 = vld [vmem:[%s5 + $0xc] sm:$0xf]
    %v2024 = vld [vmem:[%s5 + $0x10] sm:$0xf]
    %v2025 = vld [vmem:[%s5 + $0x14] sm:$0xf]
    %v2026 = vld [vmem:[%s5 + $0x18] sm:$0xf]
    %v2027 = vld [vmem:[%s5 + $0x1c] sm:$0xf]
    %v2028 = vld [vmem:[%s5 + $0x20] sm:$0xf]
    %v2029 = vld [vmem:[%s5 + $0x24] sm:$0xf]
    %v2030 = vld [vmem:[%s5 + $0x28] sm:$0xf]
    %v2031 = vld [vmem:[%s5 + $0x2c] sm:$0xf]
    %v2032 = vld [vmem:[%s5 + $0x30] sm:$0xf]
    %v2033 = vld [vmem:[%s5 + $0x34] sm:$0xf]
    %v2034 = vld [vmem:[%s5 + $0x38] sm:$0xf]
    %v2035 = vld [vmem:[%s5 + $0x3c] sm:$0xf]
    %v2036 = vld [vmem:[%s5 + $0x40] sm:$0xf]
    %v2037 = vld [vmem:[%s5 + $0x44] sm:$0xf]
    %v2038 = vld [vmem:[%s6] sm:$0xf]
    %v2039 = vld [vmem:[%s6 + $0x4] sm:$0xf]
    %v2040 = vld [vmem:[%s6 + $0x8] sm:$0xf]
    %v2041 = vld [vmem:[%s6 + $0xc] sm:$0xf]
    %v2042 = vld [vmem:[%s6 + $0x10] sm:$0xf]
    %v2043 = vld [vmem:[%s6 + $0x14] sm:$0xf]
    %v2044 = vld [vmem:[%s6 + $0x18] sm:$0xf]
    %v2045 = vld [vmem:[%s6 + $0x1c] sm:$0xf]
    %v2046 = vld [vmem:[%s6 + $0x20] sm:$0xf]
    %v2047 = vld [vmem:[%s6 + $0x24] sm:$0xf]
    %v2048 = vld [vmem:[%s6 + $0x28] sm:$0xf]
    %v2049 = vld [vmem:[%s6 + $0x2c] sm:$0xf]
    %v2050 = vld [vmem:[%s6 + $0x30] sm:$0xf]
    %v2051 = vld [vmem:[%s6 + $0x34] sm:$0xf]
    %v2052 = vld [vmem:[%s6 + $0x38] sm:$0xf]
    %v2053 = vld [vmem:[%s6 + $0x3c] sm:$0xf]
    %v2054 = vld [vmem:[%s6 + $0x40] sm:$0xf]
    %v2055 = vld [vmem:[%s6 + $0x44] sm:$0xf]
    %v2074 = vunpack.c.l.b16 %v2020
    %v2075 = vunpack.c.l.b16 %v2021
    %v2076 = vunpack.c.l.b16 %v2022
    %v2077 = vunpack.c.l.b16 %v2023
    %v2078 = vunpack.c.l.b16 %v2024
    %v2079 = vunpack.c.l.b16 %v2025
    %v2080 = vunpack.c.l.b16 %v2026
    %v2081 = vunpack.c.l.b16 %v2027
    %v2082 = vunpack.c.l.b16 %v2028
    %v2083 = vunpack.c.l.b16 %v2029
    %v2084 = vunpack.c.l.b16 %v2030
    %v2085 = vunpack.c.l.b16 %v2031
    %v2086 = vunpack.c.l.b16 %v2032
    %v2087 = vunpack.c.l.b16 %v2033
    %v2088 = vunpack.c.l.b16 %v2034
    %v2089 = vunpack.c.l.b16 %v2035
    %v2090 = vunpack.c.l.b16 %v2036
    %v2091 = vunpack.c.l.b16 %v2037
    %v2092 = vpack.c.b16 %v2075, %v2074
    %v2093 = vpack.c.b16 %v2077, %v2076
    %v2094 = vpack.c.b16 %v2079, %v2078
    %v2095 = vpack.c.b16 %v2081, %v2080
    %v2096 = vpack.c.b16 %v2083, %v2082
    %v2097 = vpack.c.b16 %v2085, %v2084
    %v2098 = vpack.c.b16 %v2087, %v2086
    %v2099 = vpack.c.b16 %v2089, %v2088
    %v2100 = vpack.c.b16 %v2091, %v2090
    %vm2110 = vcmask 130048
    %v2112 = vsel %vm2110, %v2009, 0
    %v2115 = vsel %vm2110, %v2011, 0
    %v2118 = vsel %vm2110, %v2013, 0
    %v2121 = vsel %vm2110, %v2015, 0
    %v2124 = vsel %vm2110, %v2017, 0
    %v2127 = vsel %vm2110, %v2019, 0
    %2129 = vmatprep.subr.bf16.mxu0 0
    %2130 = vmatpush1.bf16.msra.mxu0 %v2092
    %2131 = vmatprep.subr.bf16.mxu0 0
    %2132 = vmatpush1.bf16.msra.mxu0 %v2093
    %2133 = vmatprep.subr.bf16.mxu0 0
    %2134 = vmatpush1.bf16.msra.mxu0 %v2094
    %2135 = vmatprep.subr.bf16.mxu0 0
    %2136 = vmatpush1.bf16.msra.mxu0 %v2095
    %2137 = vmatprep.subr.bf16.mxu0 0
    %2138 = vmatpush1.bf16.msra.mxu0 %v2096
    %2139 = vmatprep.subr.bf16.mxu0 0
    %2140 = vmatpush1.bf16.msra.mxu0 %v2097
    %2141 = vmatprep.subr.bf16.mxu0 0
    %2142 = vmatpush1.bf16.msra.mxu0 %v2098
    %2143 = vmatprep.subr.bf16.mxu0 0
    %2144 = vmatpush1.bf16.msra.mxu0 %v2099
    %2145 = vmatprep.subr.bf16.mxu0 0
    %2146 = vmatpush1.bf16.msra.mxu0 %v2100
    %2147 = vmatprep.subr.bf16.mxu0 0
    %2148 = vmatpush1.bf16.msra.mxu0 0
    %2149 = vmatprep.subr.bf16.mxu0 0
    %2150 = vmatpush1.bf16.msra.mxu0 0
    %2151 = vmatprep.subr.bf16.mxu0 0
    %2152 = vmatpush1.bf16.msra.mxu0 0
    %2153 = vmatprep.subr.bf16.mxu0 0
    %2154 = vmatpush1.bf16.msra.mxu0 0
    %2155 = vmatprep.subr.bf16.mxu0 0
    %2156 = vmatpush1.bf16.msra.mxu0 0
    %2157 = vmatprep.subr.bf16.mxu0 0
    %2158 = vmatpush1.bf16.msra.mxu0 0
    %2159 = vmatprep.subr.bf16.mxu0 0
    %2160 = vmatpush1.bf16.msra.mxu0 0
    %2161 = vmatprep.mubr.bf16.mxu0 %v2112
    %2162 = vmatmul.mubr.bf16.gmra.mrb[0].mxu0 %v2008
    %v2163 = vpop.f32.mrb[0].mxu0
    %v2164 = vadd.f32 0.0, %v2163
    %v2165 = vpop.f32.mrb[0].mxu0
    %v2166 = vpop.f32.mrb[0].mxu0
    %v2167 = vadd.f32 0.0, %v2166
    %v2168 = vpop.f32.mrb[0].mxu0
    %2169 = vmatprep.mubr.bf16.mxu0 %v2115
    %2170 = vmatmul.mubr.bf16.gmra.mrb[0].mxu0 %v2010
    %v2171 = vpop.f32.mrb[0].mxu0
    %v2172 = vadd.f32 0.0, %v2171
    %v2173 = vpop.f32.mrb[0].mxu0
    %v2174 = vpop.f32.mrb[0].mxu0
    %v2175 = vadd.f32 0.0, %v2174
    %v2176 = vpop.f32.mrb[0].mxu0
    %2177 = vmatprep.mubr.bf16.mxu0 %v2118
    %2178 = vmatmul.mubr.bf16.gmra.mrb[0].mxu0 %v2012
    %v2179 = vpop.f32.mrb[0].mxu0
    %v2180 = vadd.f32 0.0, %v2179
    %v2181 = vpop.f32.mrb[0].mxu0
    %v2182 = vpop.f32.mrb[0].mxu0
    %v2183 = vadd.f32 0.0, %v2182
    %v2184 = vpop.f32.mrb[0].mxu0
    %2185 = vmatprep.mubr.bf16.mxu0 %v2121
    %2186 = vmatmul.mubr.bf16.gmra.mrb[0].mxu0 %v2014
    %v2187 = vpop.f32.mrb[0].mxu0
    %v2188 = vadd.f32 0.0, %v2187
    %v2189 = vpop.f32.mrb[0].mxu0
    %v2190 = vpop.f32.mrb[0].mxu0
    %v2191 = vadd.f32 0.0, %v2190
    %v2192 = vpop.f32.mrb[0].mxu0
    %2193 = vmatprep.mubr.bf16.mxu0 %v2124
    %2194 = vmatmul.mubr.bf16.gmra.mrb[0].mxu0 %v2016
    %v2195 = vpop.f32.mrb[0].mxu0
    %v2196 = vadd.f32 0.0, %v2195
    %v2197 = vpop.f32.mrb[0].mxu0
    %v2198 = vpop.f32.mrb[0].mxu0
    %v2199 = vadd.f32 0.0, %v2198
    %v2200 = vpop.f32.mrb[0].mxu0
    %2201 = vmatprep.mubr.bf16.mxu0 %v2127
    %2202 = vmatmul.mubr.bf16.gmra.mrb[0].mxu0 %v2018
    %v2203 = vpop.f32.mrb[0].mxu0
    %v2204 = vadd.f32 0.0, %v2203
    %v2205 = vpop.f32.mrb[0].mxu0
    %v2206 = vpop.f32.mrb[0].mxu0
    %v2207 = vadd.f32 0.0, %v2206
    %v2208 = vpop.f32.mrb[0].mxu0
    %2209 = vdwg.mxu0
    %v2228 = vunpack.c.l.b16 %v2038
    %v2229 = vunpack.c.l.b16 %v2039
    %v2230 = vunpack.c.l.b16 %v2040
    %v2231 = vunpack.c.l.b16 %v2041
    %v2232 = vunpack.c.l.b16 %v2042
    %v2233 = vunpack.c.l.b16 %v2043
    %v2234 = vunpack.c.l.b16 %v2044
    %v2235 = vunpack.c.l.b16 %v2045
    %v2236 = vunpack.c.l.b16 %v2046
    %v2237 = vunpack.c.l.b16 %v2047
    %v2238 = vunpack.c.l.b16 %v2048
    %v2239 = vunpack.c.l.b16 %v2049
    %v2240 = vunpack.c.l.b16 %v2050
    %v2241 = vunpack.c.l.b16 %v2051
    %v2242 = vunpack.c.l.b16 %v2052
    %v2243 = vunpack.c.l.b16 %v2053
    %v2244 = vunpack.c.l.b16 %v2054
    %v2245 = vunpack.c.l.b16 %v2055
    %v2246 = vpack.c.b16 %v2229, %v2228
    %v2247 = vpack.c.b16 %v2231, %v2230
    %v2248 = vpack.c.b16 %v2233, %v2232
    %v2249 = vpack.c.b16 %v2235, %v2234
    %v2250 = vpack.c.b16 %v2237, %v2236
    %v2251 = vpack.c.b16 %v2239, %v2238
    %v2252 = vpack.c.b16 %v2241, %v2240
    %v2253 = vpack.c.b16 %v2243, %v2242
    %v2254 = vpack.c.b16 %v2245, %v2244
    %2264 = vmatprep.subr.bf16.mxu0 0
    %2265 = vmatpush1.bf16.msra.mxu0 %v2246
    %2266 = vmatprep.subr.bf16.mxu0 0
    %2267 = vmatpush1.bf16.msra.mxu0 %v2247
    %2268 = vmatprep.subr.bf16.mxu0 0
    %2269 = vmatpush1.bf16.msra.mxu0 %v2248
    %2270 = vmatprep.subr.bf16.mxu0 0
    %2271 = vmatpush1.bf16.msra.mxu0 %v2249
    %2272 = vmatprep.subr.bf16.mxu0 0
    %2273 = vmatpush1.bf16.msra.mxu0 %v2250
    %2274 = vmatprep.subr.bf16.mxu0 0
    %2275 = vmatpush1.bf16.msra.mxu0 %v2251
    %2276 = vmatprep.subr.bf16.mxu0 0
    %2277 = vmatpush1.bf16.msra.mxu0 %v2252
    %2278 = vmatprep.subr.bf16.mxu0 0
    %2279 = vmatpush1.bf16.msra.mxu0 %v2253
    %2280 = vmatprep.subr.bf16.mxu0 0
    %2281 = vmatpush1.bf16.msra.mxu0 %v2254
    %2282 = vmatprep.subr.bf16.mxu0 0
    %2283 = vmatpush1.bf16.msra.mxu0 0
    %2284 = vmatprep.subr.bf16.mxu0 0
    %2285 = vmatpush1.bf16.msra.mxu0 0
    %2286 = vmatprep.subr.bf16.mxu0 0
    %2287 = vmatpush1.bf16.msra.mxu0 0
    %2288 = vmatprep.subr.bf16.mxu0 0
    %2289 = vmatpush1.bf16.msra.mxu0 0
    %2290 = vmatprep.subr.bf16.mxu0 0
    %2291 = vmatpush1.bf16.msra.mxu0 0
    %2292 = vmatprep.subr.bf16.mxu0 0
    %2293 = vmatpush1.bf16.msra.mxu0 0
    %2294 = vmatprep.subr.bf16.mxu0 0
    %2295 = vmatpush1.bf16.msra.mxu0 0
    %2296 = vmatprep.mubr.bf16.mxu0 %v2112
    %2297 = vmatmul.mubr.bf16.gmra.mrb[0].mxu0 %v2008
    %v2298 = vpop.f32.mrb[0].mxu0
    %v2299 = vadd.f32 0.0, %v2298
    %v2300 = vpop.f32.mrb[0].mxu0
    %v2301 = vpop.f32.mrb[0].mxu0
    %v2302 = vadd.f32 0.0, %v2301
    %v2303 = vpop.f32.mrb[0].mxu0
    %2304 = vmatprep.mubr.bf16.mxu0 %v2115
    %2305 = vmatmul.mubr.bf16.gmra.mrb[0].mxu0 %v2010
    %v2306 = vpop.f32.mrb[0].mxu0
    %v2307 = vadd.f32 0.0, %v2306
    %v2308 = vpop.f32.mrb[0].mxu0
    %v2309 = vpop.f32.mrb[0].mxu0
    %v2310 = vadd.f32 0.0, %v2309
    %v2311 = vpop.f32.mrb[0].mxu0
    %2312 = vmatprep.mubr.bf16.mxu0 %v2118
    %2313 = vmatmul.mubr.bf16.gmra.mrb[0].mxu0 %v2012
    %v2314 = vpop.f32.mrb[0].mxu0
    %v2315 = vadd.f32 0.0, %v2314
    %v2316 = vpop.f32.mrb[0].mxu0
    %v2317 = vpop.f32.mrb[0].mxu0
    %v2318 = vadd.f32 0.0, %v2317
    %v2319 = vpop.f32.mrb[0].mxu0
    %2320 = vmatprep.mubr.bf16.mxu0 %v2121
    %2321 = vmatmul.mubr.bf16.gmra.mrb[0].mxu0 %v2014
    %v2322 = vpop.f32.mrb[0].mxu0
    %v2323 = vadd.f32 0.0, %v2322
    %v2324 = vpop.f32.mrb[0].mxu0
    %v2325 = vpop.f32.mrb[0].mxu0
    %v2326 = vadd.f32 0.0, %v2325
    %v2327 = vpop.f32.mrb[0].mxu0
    %2328 = vmatprep.mubr.bf16.mxu0 %v2124
    %2329 = vmatmul.mubr.bf16.gmra.mrb[0].mxu0 %v2016
    %v2330 = vpop.f32.mrb[0].mxu0
    %v2331 = vadd.f32 0.0, %v2330
    %v2332 = vpop.f32.mrb[0].mxu0
    %v2333 = vpop.f32.mrb[0].mxu0
    %v2334 = vadd.f32 0.0, %v2333
    %v2335 = vpop.f32.mrb[0].mxu0
    %2336 = vmatprep.mubr.bf16.mxu0 %v2127
    %2337 = vmatmul.mubr.bf16.gmra.mrb[0].mxu0 %v2018
    %v2338 = vpop.f32.mrb[0].mxu0
    %v2339 = vadd.f32 0.0, %v2338
    %v2340 = vpop.f32.mrb[0].mxu0
    %v2341 = vpop.f32.mrb[0].mxu0
    %v2342 = vadd.f32 0.0, %v2341
    %v2343 = vpop.f32.mrb[0].mxu0
    %2344 = vdwg.mxu0
    %v2345 = vmax.f32 %v2164, %v2299
    %v2346 = vmax.f32 %v2167, %v2302
    %v2347 = vmax.f32 %v2172, %v2307
    %v2348 = vmax.f32 %v2175, %v2310
    %v2349 = vmax.f32 %v2180, %v2315
    %v2350 = vmax.f32 %v2183, %v2318
    %v2351 = vmax.f32 %v2188, %v2323
    %v2352 = vmax.f32 %v2191, %v2326
    %v2353 = vmax.f32 %v2196, %v2331
    %v2354 = vmax.f32 %v2199, %v2334
    %v2355 = vmax.f32 %v2204, %v2339
    %v2356 = vmax.f32 %v2207, %v2342
    %v2357 = vpack.c.bf16 %v2346, %v2345
    %v2358 = vpack.c.bf16 %v2348, %v2347
    %v2359 = vpack.c.bf16 %v2350, %v2349
    %v2360 = vpack.c.bf16 %v2352, %v2351
    %v2361 = vpack.c.bf16 %v2354, %v2353
    %v2362 = vpack.c.bf16 %v2356, %v2355
    %v2363 = vld [vmem:[%s4] sm:$0x1]
    %v2364 = vld [vmem:[%s3] sm:$0xf]
    %v2365 = vld [vmem:[%s3 + $0x4] sm:$0xf]
    %v2366 = vld [vmem:[%s3 + $0x8] sm:$0xf]
    %v2367 = vld [vmem:[%s3 + $0xc] sm:$0xf]
    %v2368 = vld [vmem:[%s3 + $0x10] sm:$0xf]
    %v2369 = vld [vmem:[%s3 + $0x14] sm:$0xf]
    %v2370 = vld [vmem:[%s3 + $0x18] sm:$0xf]
    %v2371 = vld [vmem:[%s3 + $0x1c] sm:$0xf]
    %v2372 = vld [vmem:[%s3 + $0x20] sm:$0xf]
    %s2373 = scalar_lea.vmem %s3, 36
    %v2374 = vld [vmem:[%s2373] sm:$0xf]
    %v2375 = vld [vmem:[%s2373 + $0x4] sm:$0xf]
    %v2376 = vld [vmem:[%s2373 + $0x8] sm:$0xf]
    %v2377 = vld [vmem:[%s2373 + $0xc] sm:$0xf]
    %v2378 = vld [vmem:[%s2373 + $0x10] sm:$0xf]
    %v2379 = vld [vmem:[%s2373 + $0x14] sm:$0xf]
    %v2380 = vld [vmem:[%s2373 + $0x18] sm:$0xf]
    %v2381 = vld [vmem:[%s2373 + $0x1c] sm:$0xf]
    %v2382 = vld [vmem:[%s2373 + $0x20] sm:$0xf]
    %vm2388 = vcmask 1043456
    %v2389 = vrot.slane %v2357, 4
    %v2390 = vrot.slane %v2358, 4
    %v2391 = vsel %vm2388, %v2389, %v2390
    %v2392 = vrot.slane %v2359, 4
    %v2393 = vsel %vm2388, %v2390, %v2392
    %v2394 = vrot.slane %v2360, 4
    %v2395 = vsel %vm2388, %v2392, %v2394
    %v2396 = vrot.slane %v2361, 4
    %v2397 = vsel %vm2388, %v2394, %v2396
    %v2407 = vunpack.c.l.b16 %v2374
    %v2408 = vunpack.c.l.b16 %v2375
    %v2409 = vunpack.c.l.b16 %v2376
    %v2410 = vunpack.c.l.b16 %v2377
    %v2411 = vunpack.c.l.b16 %v2378
    %v2412 = vunpack.c.l.b16 %v2379
    %v2413 = vunpack.c.l.b16 %v2380
    %v2414 = vunpack.c.l.b16 %v2381
    %v2415 = vunpack.c.l.b16 %v2382
    %v2416 = vpack.c.b16 %v2408, %v2407
    %v2417 = vpack.c.b16 %v2410, %v2409
    %v2418 = vpack.c.b16 %v2412, %v2411
    %v2419 = vpack.c.b16 %v2414, %v2413
    %v2420 = vpack.c.b16 %v2415, %v2415
    %vm2425 = vcmask 588800
    %v2427 = vsel %vm2425, %v2391, 0
    %v2430 = vsel %vm2425, %v2393, 0
    %v2433 = vsel %vm2425, %v2395, 0
    %v2436 = vsel %vm2425, %v2397, 0
    %vm2438 = vcmask 1043456
    %v2440 = vsel %vm2438, %v2420, 0
    %2442 = vmatprep.subr.bf16.mxu0 0
    %2443 = vmatpush1.bf16.msra.mxu0 %v2416
    %2444 = vmatprep.subr.bf16.mxu0 0
    %2445 = vmatpush1.bf16.msra.mxu0 %v2417
    %2446 = vmatprep.subr.bf16.mxu0 0
    %2447 = vmatpush1.bf16.msra.mxu0 %v2418
    %2448 = vmatprep.subr.bf16.mxu0 0
    %2449 = vmatpush1.bf16.msra.mxu0 %v2419
    %2450 = vmatprep.subr.bf16.mxu0 0
    %2451 = vmatpush1.bf16.msra.mxu0 %v2440
    %2452 = vmatprep.subr.bf16.mxu0 0
    %2453 = vmatpush1.bf16.msra.mxu0 0
    %2454 = vmatprep.subr.bf16.mxu0 0
    %2455 = vmatpush1.bf16.msra.mxu0 0
    %2456 = vmatprep.subr.bf16.mxu0 0
    %2457 = vmatpush1.bf16.msra.mxu0 0
    %2458 = vmatprep.subr.bf16.mxu0 0
    %2459 = vmatpush1.bf16.msra.mxu0 0
    %2460 = vmatprep.subr.bf16.mxu0 0
    %2461 = vmatpush1.bf16.msra.mxu0 0
    %2462 = vmatprep.subr.bf16.mxu0 0
    %2463 = vmatpush1.bf16.msra.mxu0 0
    %2464 = vmatprep.subr.bf16.mxu0 0
    %2465 = vmatpush1.bf16.msra.mxu0 0
    %2466 = vmatprep.subr.bf16.mxu0 0
    %2467 = vmatpush1.bf16.msra.mxu0 0
    %2468 = vmatprep.subr.bf16.mxu0 0
    %2469 = vmatpush1.bf16.msra.mxu0 0
    %2470 = vmatprep.subr.bf16.mxu0 0
    %2471 = vmatpush1.bf16.msra.mxu0 0
    %2472 = vmatprep.subr.bf16.mxu0 0
    %2473 = vmatpush1.bf16.msra.mxu0 0
    %2474 = vmatprep.mubr.bf16.mxu0 0
    %2475 = vmatmul.mubr.bf16.gmra.mrb[0].mxu0 %v2427
    %v2476 = vpop.f32.mrb[0].mxu0
    %v2477 = vadd.f32 0.0, %v2476
    %v2478 = vpop.f32.mrb[0].mxu0
    %v2479 = vpop.f32.mrb[0].mxu0
    %v2480 = vadd.f32 0.0, %v2479
    %v2481 = vpop.f32.mrb[0].mxu0
    %2482 = vmatprep.mubr.bf16.mxu0 0
    %2483 = vmatmul.mubr.bf16.gmra.mrb[0].mxu0 %v2430
    %v2484 = vpop.f32.mrb[0].mxu0
    %v2485 = vadd.f32 0.0, %v2484
    %v2486 = vpop.f32.mrb[0].mxu0
    %v2487 = vpop.f32.mrb[0].mxu0
    %v2488 = vadd.f32 0.0, %v2487
    %v2489 = vpop.f32.mrb[0].mxu0
    %2490 = vmatprep.mubr.bf16.mxu0 0
    %2491 = vmatmul.mubr.bf16.gmra.mrb[0].mxu0 %v2433
    %v2492 = vpop.f32.mrb[0].mxu0
    %v2493 = vadd.f32 0.0, %v2492
    %v2494 = vpop.f32.mrb[0].mxu0
    %v2495 = vpop.f32.mrb[0].mxu0
    %v2496 = vadd.f32 0.0, %v2495
    %v2497 = vpop.f32.mrb[0].mxu0
    %2498 = vmatprep.mubr.bf16.mxu0 0
    %2499 = vmatmul.mubr.bf16.gmra.mrb[0].mxu0 %v2436
    %v2500 = vpop.f32.mrb[0].mxu0
    %v2501 = vadd.f32 0.0, %v2500
    %v2502 = vpop.f32.mrb[0].mxu0
    %v2503 = vpop.f32.mrb[0].mxu0
    %v2504 = vadd.f32 0.0, %v2503
    %v2505 = vpop.f32.mrb[0].mxu0
    %2506 = vdwg.mxu0
    %v2516 = vunpack.c.l.b16 %v2364
    %v2517 = vunpack.c.l.b16 %v2365
    %v2518 = vunpack.c.l.b16 %v2366
    %v2519 = vunpack.c.l.b16 %v2367
    %v2520 = vunpack.c.l.b16 %v2368
    %v2521 = vunpack.c.l.b16 %v2369
    %v2522 = vunpack.c.l.b16 %v2370
    %v2523 = vunpack.c.l.b16 %v2371
    %v2524 = vunpack.c.l.b16 %v2372
    %v2525 = vpack.c.b16 %v2517, %v2516
    %v2526 = vpack.c.b16 %v2519, %v2518
    %v2527 = vpack.c.b16 %v2521, %v2520
    %v2528 = vpack.c.b16 %v2523, %v2522
    %v2529 = vpack.c.b16 %v2524, %v2524
    %v2535 = vsel %vm2425, %v2357, 0
    %v2538 = vsel %vm2425, %v2358, 0
    %v2541 = vsel %vm2425, %v2359, 0
    %v2544 = vsel %vm2425, %v2360, 0
    %v2547 = vsel %vm2438, %v2529, 0
    %2549 = vmatprep.subr.bf16.mxu0 0
    %2550 = vmatpush1.bf16.msra.mxu0 %v2525
    %2551 = vmatprep.subr.bf16.mxu0 0
    %2552 = vmatpush1.bf16.msra.mxu0 %v2526
    %2553 = vmatprep.subr.bf16.mxu0 0
    %2554 = vmatpush1.bf16.msra.mxu0 %v2527
    %2555 = vmatprep.subr.bf16.mxu0 0
    %2556 = vmatpush1.bf16.msra.mxu0 %v2528
    %2557 = vmatprep.subr.bf16.mxu0 0
    %2558 = vmatpush1.bf16.msra.mxu0 %v2547
    %2559 = vmatprep.subr.bf16.mxu0 0
    %2560 = vmatpush1.bf16.msra.mxu0 0
    %2561 = vmatprep.subr.bf16.mxu0 0
    %2562 = vmatpush1.bf16.msra.mxu0 0
    %2563 = vmatprep.subr.bf16.mxu0 0
    %2564 = vmatpush1.bf16.msra.mxu0 0
    %2565 = vmatprep.subr.bf16.mxu0 0
    %2566 = vmatpush1.bf16.msra.mxu0 0
    %2567 = vmatprep.subr.bf16.mxu0 0
    %2568 = vmatpush1.bf16.msra.mxu0 0
    %2569 = vmatprep.subr.bf16.mxu0 0
    %2570 = vmatpush1.bf16.msra.mxu0 0
    %2571 = vmatprep.subr.bf16.mxu0 0
    %2572 = vmatpush1.bf16.msra.mxu0 0
    %2573 = vmatprep.subr.bf16.mxu0 0
    %2574 = vmatpush1.bf16.msra.mxu0 0
    %2575 = vmatprep.subr.bf16.mxu0 0
    %2576 = vmatpush1.bf16.msra.mxu0 0
    %2577 = vmatprep.subr.bf16.mxu0 0
    %2578 = vmatpush1.bf16.msra.mxu0 0
    %2579 = vmatprep.subr.bf16.mxu0 0
    %2580 = vmatpush1.bf16.msra.mxu0 0
    %2581 = vmatprep.mubr.bf16.mxu0 0
    %2582 = vmatmul.mubr.bf16.gmra.mrb[0].mxu0 %v2535
    %v2583 = vpop.f32.mrb[0].mxu0
    %v2584 = vadd.f32 %v2477, %v2583
    %v2585 = vpop.f32.mrb[0].mxu0
    %v2586 = vpop.f32.mrb[0].mxu0
    %v2587 = vadd.f32 %v2480, %v2586
    %v2588 = vpop.f32.mrb[0].mxu0
    %2589 = vmatprep.mubr.bf16.mxu0 0
    %2590 = vmatmul.mubr.bf16.gmra.mrb[0].mxu0 %v2538
    %v2591 = vpop.f32.mrb[0].mxu0
    %v2592 = vadd.f32 %v2485, %v2591
    %v2593 = vpop.f32.mrb[0].mxu0
    %v2594 = vpop.f32.mrb[0].mxu0
    %v2595 = vadd.f32 %v2488, %v2594
    %v2596 = vpop.f32.mrb[0].mxu0
    %2597 = vmatprep.mubr.bf16.mxu0 0
    %2598 = vmatmul.mubr.bf16.gmra.mrb[0].mxu0 %v2541
    %v2599 = vpop.f32.mrb[0].mxu0
    %v2600 = vadd.f32 %v2493, %v2599
    %v2601 = vpop.f32.mrb[0].mxu0
    %v2602 = vpop.f32.mrb[0].mxu0
    %v2603 = vadd.f32 %v2496, %v2602
    %v2604 = vpop.f32.mrb[0].mxu0
    %2605 = vmatprep.mubr.bf16.mxu0 0
    %2606 = vmatmul.mubr.bf16.gmra.mrb[0].mxu0 %v2544
    %v2607 = vpop.f32.mrb[0].mxu0
    %v2608 = vadd.f32 %v2501, %v2607
    %v2609 = vpop.f32.mrb[0].mxu0
    %v2610 = vpop.f32.mrb[0].mxu0
    %v2611 = vadd.f32 %v2504, %v2610
    %v2612 = vpop.f32.mrb[0].mxu0
    %2613 = vdwg.mxu0
    %s2614 = scalar_lea.vmem %s3, 72
    %v2615 = vld [vmem:[%s2614] sm:$0xf]
    %v2616 = vld [vmem:[%s2614 + $0x4] sm:$0xf]
    %v2617 = vld [vmem:[%s2614 + $0x8] sm:$0xf]
    %v2618 = vld [vmem:[%s2614 + $0xc] sm:$0xf]
    %v2619 = vld [vmem:[%s2614 + $0x10] sm:$0xf]
    %v2620 = vld [vmem:[%s2614 + $0x14] sm:$0xf]
    %v2621 = vld [vmem:[%s2614 + $0x18] sm:$0xf]
    %v2622 = vld [vmem:[%s2614 + $0x1c] sm:$0xf]
    %v2623 = vld [vmem:[%s2614 + $0x20] sm:$0xf]
    %v2633 = vunpack.c.l.b16 %v2615
    %v2634 = vunpack.c.l.b16 %v2616
    %v2635 = vunpack.c.l.b16 %v2617
    %v2636 = vunpack.c.l.b16 %v2618
    %v2637 = vunpack.c.l.b16 %v2619
    %v2638 = vunpack.c.l.b16 %v2620
    %v2639 = vunpack.c.l.b16 %v2621
    %v2640 = vunpack.c.l.b16 %v2622
    %v2641 = vunpack.c.l.b16 %v2623
    %v2642 = vpack.c.b16 %v2634, %v2633
    %v2643 = vpack.c.b16 %v2636, %v2635
    %v2644 = vpack.c.b16 %v2638, %v2637
    %v2645 = vpack.c.b16 %v2640, %v2639
    %v2646 = vpack.c.b16 %v2641, %v2641
    %v2652 = vsel %vm2425, %v2361, 0
    %v2655 = vsel %vm2438, %v2646, 0
    %2657 = vmatprep.subr.bf16.mxu0 0
    %2658 = vmatpush1.bf16.msra.mxu0 %v2642
    %2659 = vmatprep.subr.bf16.mxu0 0
    %2660 = vmatpush1.bf16.msra.mxu0 %v2643
    %2661 = vmatprep.subr.bf16.mxu0 0
    %2662 = vmatpush1.bf16.msra.mxu0 %v2644
    %2663 = vmatprep.subr.bf16.mxu0 0
    %2664 = vmatpush1.bf16.msra.mxu0 %v2645
    %2665 = vmatprep.subr.bf16.mxu0 0
    %2666 = vmatpush1.bf16.msra.mxu0 %v2655
    %2667 = vmatprep.subr.bf16.mxu0 0
    %2668 = vmatpush1.bf16.msra.mxu0 0
    %2669 = vmatprep.subr.bf16.mxu0 0
    %2670 = vmatpush1.bf16.msra.mxu0 0
    %2671 = vmatprep.subr.bf16.mxu0 0
    %2672 = vmatpush1.bf16.msra.mxu0 0
    %2673 = vmatprep.subr.bf16.mxu0 0
    %2674 = vmatpush1.bf16.msra.mxu0 0
    %2675 = vmatprep.subr.bf16.mxu0 0
    %2676 = vmatpush1.bf16.msra.mxu0 0
    %2677 = vmatprep.subr.bf16.mxu0 0
    %2678 = vmatpush1.bf16.msra.mxu0 0
    %2679 = vmatprep.subr.bf16.mxu0 0
    %2680 = vmatpush1.bf16.msra.mxu0 0
    %2681 = vmatprep.subr.bf16.mxu0 0
    %2682 = vmatpush1.bf16.msra.mxu0 0
    %2683 = vmatprep.subr.bf16.mxu0 0
    %2684 = vmatpush1.bf16.msra.mxu0 0
    %2685 = vmatprep.subr.bf16.mxu0 0
    %2686 = vmatpush1.bf16.msra.mxu0 0
    %2687 = vmatprep.subr.bf16.mxu0 0
    %2688 = vmatpush1.bf16.msra.mxu0 0
    %2689 = vmatprep.mubr.bf16.mxu0 0
    %2690 = vmatmul.mubr.bf16.gmra.mrb[0].mxu0 %v2538
    %v2691 = vpop.f32.mrb[0].mxu0
    %v2692 = vadd.f32 0.0, %v2691
    %v2693 = vpop.f32.mrb[0].mxu0
    %v2694 = vpop.f32.mrb[0].mxu0
    %v2695 = vadd.f32 0.0, %v2694
    %v2696 = vpop.f32.mrb[0].mxu0
    %2697 = vmatprep.mubr.bf16.mxu0 0
    %2698 = vmatmul.mubr.bf16.gmra.mrb[0].mxu0 %v2541
    %v2699 = vpop.f32.mrb[0].mxu0
    %v2700 = vadd.f32 0.0, %v2699
    %v2701 = vpop.f32.mrb[0].mxu0
    %v2702 = vpop.f32.mrb[0].mxu0
    %v2703 = vadd.f32 0.0, %v2702
    %v2704 = vpop.f32.mrb[0].mxu0
    %2705 = vmatprep.mubr.bf16.mxu0 0
    %2706 = vmatmul.mubr.bf16.gmra.mrb[0].mxu0 %v2544
    %v2707 = vpop.f32.mrb[0].mxu0
    %v2708 = vadd.f32 0.0, %v2707
    %v2709 = vpop.f32.mrb[0].mxu0
    %v2710 = vpop.f32.mrb[0].mxu0
    %v2711 = vadd.f32 0.0, %v2710
    %v2712 = vpop.f32.mrb[0].mxu0
    %2713 = vmatprep.mubr.bf16.mxu0 0
    %2714 = vmatmul.mubr.bf16.gmra.mrb[0].mxu0 %v2652
    %v2715 = vpop.f32.mrb[0].mxu0
    %v2716 = vadd.f32 0.0, %v2715
    %v2717 = vpop.f32.mrb[0].mxu0
    %v2718 = vpop.f32.mrb[0].mxu0
    %v2719 = vadd.f32 0.0, %v2718
    %v2720 = vpop.f32.mrb[0].mxu0
    %2721 = vdwg.mxu0
    %v2722 = vadd.f32 %v2584, %v2692
    %v2723 = vadd.f32 %v2587, %v2695
    %v2724 = vadd.f32 %v2592, %v2700
    %v2725 = vadd.f32 %v2595, %v2703
    %v2726 = vadd.f32 %v2600, %v2708
    %v2727 = vadd.f32 %v2603, %v2711
    %v2728 = vadd.f32 %v2608, %v2716
    %v2729 = vadd.f32 %v2611, %v2719
    %s2730 = scalar_lea.vmem %s3, 108
    %v2731 = vld [vmem:[%s2730] sm:$0xf]
    %v2732 = vld [vmem:[%s2730 + $0x4] sm:$0xf]
    %v2733 = vld [vmem:[%s2730 + $0x8] sm:$0xf]
    %v2734 = vld [vmem:[%s2730 + $0xc] sm:$0xf]
    %v2735 = vld [vmem:[%s2730 + $0x10] sm:$0xf]
    %v2736 = vld [vmem:[%s2730 + $0x14] sm:$0xf]
    %v2737 = vld [vmem:[%s2730 + $0x18] sm:$0xf]
    %v2738 = vld [vmem:[%s2730 + $0x1c] sm:$0xf]
    %v2739 = vld [vmem:[%s2730 + $0x20] sm:$0xf]
    %v2741 = vrot.slane %v2362, 4
    %v2742 = vsel %vm2388, %v2396, %v2741
    %v2752 = vunpack.c.l.b16 %v2731
    %v2753 = vunpack.c.l.b16 %v2732
    %v2754 = vunpack.c.l.b16 %v2733
    %v2755 = vunpack.c.l.b16 %v2734
    %v2756 = vunpack.c.l.b16 %v2735
    %v2757 = vunpack.c.l.b16 %v2736
    %v2758 = vunpack.c.l.b16 %v2737
    %v2759 = vunpack.c.l.b16 %v2738
    %v2760 = vunpack.c.l.b16 %v2739
    %v2761 = vpack.c.b16 %v2753, %v2752
    %v2762 = vpack.c.b16 %v2755, %v2754
    %v2763 = vpack.c.b16 %v2757, %v2756
    %v2764 = vpack.c.b16 %v2759, %v2758
    %v2765 = vpack.c.b16 %v2760, %v2760
    %v2771 = vsel %vm2425, %v2742, 0
    %v2774 = vsel %vm2438, %v2765, 0
    %2776 = vmatprep.subr.bf16.mxu0 0
    %2777 = vmatpush1.bf16.msra.mxu0 %v2761
    %2778 = vmatprep.subr.bf16.mxu0 0
    %2779 = vmatpush1.bf16.msra.mxu0 %v2762
    %2780 = vmatprep.subr.bf16.mxu0 0
    %2781 = vmatpush1.bf16.msra.mxu0 %v2763
    %2782 = vmatprep.subr.bf16.mxu0 0
    %2783 = vmatpush1.bf16.msra.mxu0 %v2764
    %2784 = vmatprep.subr.bf16.mxu0 0
    %2785 = vmatpush1.bf16.msra.mxu0 %v2774
    %2786 = vmatprep.subr.bf16.mxu0 0
    %2787 = vmatpush1.bf16.msra.mxu0 0
    %2788 = vmatprep.subr.bf16.mxu0 0
    %2789 = vmatpush1.bf16.msra.mxu0 0
    %2790 = vmatprep.subr.bf16.mxu0 0
    %2791 = vmatpush1.bf16.msra.mxu0 0
    %2792 = vmatprep.subr.bf16.mxu0 0
    %2793 = vmatpush1.bf16.msra.mxu0 0
    %2794 = vmatprep.subr.bf16.mxu0 0
    %2795 = vmatpush1.bf16.msra.mxu0 0
    %2796 = vmatprep.subr.bf16.mxu0 0
    %2797 = vmatpush1.bf16.msra.mxu0 0
    %2798 = vmatprep.subr.bf16.mxu0 0
    %2799 = vmatpush1.bf16.msra.mxu0 0
    %2800 = vmatprep.subr.bf16.mxu0 0
    %2801 = vmatpush1.bf16.msra.mxu0 0
    %2802 = vmatprep.subr.bf16.mxu0 0
    %2803 = vmatpush1.bf16.msra.mxu0 0
    %2804 = vmatprep.subr.bf16.mxu0 0
    %2805 = vmatpush1.bf16.msra.mxu0 0
    %2806 = vmatprep.subr.bf16.mxu0 0
    %2807 = vmatpush1.bf16.msra.mxu0 0
    %2808 = vmatprep.mubr.bf16.mxu0 0
    %2809 = vmatmul.mubr.bf16.gmra.mrb[0].mxu0 %v2430
    %v2810 = vpop.f32.mrb[0].mxu0
    %v2811 = vadd.f32 0.0, %v2810
    %v2812 = vpop.f32.mrb[0].mxu0
    %v2813 = vpop.f32.mrb[0].mxu0
    %v2814 = vadd.f32 0.0, %v2813
    %v2815 = vpop.f32.mrb[0].mxu0
    %2816 = vmatprep.mubr.bf16.mxu0 0
    %2817 = vmatmul.mubr.bf16.gmra.mrb[0].mxu0 %v2433
    %v2818 = vpop.f32.mrb[0].mxu0
    %v2819 = vadd.f32 0.0, %v2818
    %v2820 = vpop.f32.mrb[0].mxu0
    %v2821 = vpop.f32.mrb[0].mxu0
    %v2822 = vadd.f32 0.0, %v2821
    %v2823 = vpop.f32.mrb[0].mxu0
    %2824 = vmatprep.mubr.bf16.mxu0 0
    %2825 = vmatmul.mubr.bf16.gmra.mrb[0].mxu0 %v2436
    %v2826 = vpop.f32.mrb[0].mxu0
    %v2827 = vadd.f32 0.0, %v2826
    %v2828 = vpop.f32.mrb[0].mxu0
    %v2829 = vpop.f32.mrb[0].mxu0
    %v2830 = vadd.f32 0.0, %v2829
    %v2831 = vpop.f32.mrb[0].mxu0
    %2832 = vmatprep.mubr.bf16.mxu0 0
    %2833 = vmatmul.mubr.bf16.gmra.mrb[0].mxu0 %v2771
    %v2834 = vpop.f32.mrb[0].mxu0
    %v2835 = vadd.f32 0.0, %v2834
    %v2836 = vpop.f32.mrb[0].mxu0
    %v2837 = vpop.f32.mrb[0].mxu0
    %v2838 = vadd.f32 0.0, %v2837
    %v2839 = vpop.f32.mrb[0].mxu0
    %2840 = vdwg.mxu0
    %v2841 = vadd.f32 %v2722, %v2811
    %v2842 = vadd.f32 %v2723, %v2814
    %v2843 = vadd.f32 %v2724, %v2819
    %v2844 = vadd.f32 %v2725, %v2822
    %v2845 = vadd.f32 %v2726, %v2827
    %v2846 = vadd.f32 %v2727, %v2830
    %v2847 = vadd.f32 %v2728, %v2835
    %v2848 = vadd.f32 %v2729, %v2838
    %s2849 = scalar_lea.vmem %s3, 144
    %v2850 = vld [vmem:[%s2849] sm:$0xf]
    %v2851 = vld [vmem:[%s2849 + $0x4] sm:$0xf]
    %v2852 = vld [vmem:[%s2849 + $0x8] sm:$0xf]
    %v2853 = vld [vmem:[%s2849 + $0xc] sm:$0xf]
    %v2854 = vld [vmem:[%s2849 + $0x10] sm:$0xf]
    %v2855 = vld [vmem:[%s2849 + $0x14] sm:$0xf]
    %v2856 = vld [vmem:[%s2849 + $0x18] sm:$0xf]
    %v2857 = vld [vmem:[%s2849 + $0x1c] sm:$0xf]
    %v2858 = vld [vmem:[%s2849 + $0x20] sm:$0xf]
    %v2868 = vunpack.c.l.b16 %v2850
    %v2869 = vunpack.c.l.b16 %v2851
    %v2870 = vunpack.c.l.b16 %v2852
    %v2871 = vunpack.c.l.b16 %v2853
    %v2872 = vunpack.c.l.b16 %v2854
    %v2873 = vunpack.c.l.b16 %v2855
    %v2874 = vunpack.c.l.b16 %v2856
    %v2875 = vunpack.c.l.b16 %v2857
    %v2876 = vunpack.c.l.b16 %v2858
    %v2877 = vpack.c.b16 %v2869, %v2868
    %v2878 = vpack.c.b16 %v2871, %v2870
    %v2879 = vpack.c.b16 %v2873, %v2872
    %v2880 = vpack.c.b16 %v2875, %v2874
    %v2881 = vpack.c.b16 %v2876, %v2876
    %v2887 = vsel %vm2425, %v2362, 0
    %v2890 = vsel %vm2438, %v2881, 0
    %2892 = vmatprep.subr.bf16.mxu0 0
    %2893 = vmatpush1.bf16.msra.mxu0 %v2877
    %2894 = vmatprep.subr.bf16.mxu0 0
    %2895 = vmatpush1.bf16.msra.mxu0 %v2878
    %2896 = vmatprep.subr.bf16.mxu0 0
    %2897 = vmatpush1.bf16.msra.mxu0 %v2879
    %2898 = vmatprep.subr.bf16.mxu0 0
    %2899 = vmatpush1.bf16.msra.mxu0 %v2880
    %2900 = vmatprep.subr.bf16.mxu0 0
    %2901 = vmatpush1.bf16.msra.mxu0 %v2890
    %2902 = vmatprep.subr.bf16.mxu0 0
    %2903 = vmatpush1.bf16.msra.mxu0 0
    %2904 = vmatprep.subr.bf16.mxu0 0
    %2905 = vmatpush1.bf16.msra.mxu0 0
    %2906 = vmatprep.subr.bf16.mxu0 0
    %2907 = vmatpush1.bf16.msra.mxu0 0
    %2908 = vmatprep.subr.bf16.mxu0 0
    %2909 = vmatpush1.bf16.msra.mxu0 0
    %2910 = vmatprep.subr.bf16.mxu0 0
    %2911 = vmatpush1.bf16.msra.mxu0 0
    %2912 = vmatprep.subr.bf16.mxu0 0
    %2913 = vmatpush1.bf16.msra.mxu0 0
    %2914 = vmatprep.subr.bf16.mxu0 0
    %2915 = vmatpush1.bf16.msra.mxu0 0
    %2916 = vmatprep.subr.bf16.mxu0 0
    %2917 = vmatpush1.bf16.msra.mxu0 0
    %2918 = vmatprep.subr.bf16.mxu0 0
    %2919 = vmatpush1.bf16.msra.mxu0 0
    %2920 = vmatprep.subr.bf16.mxu0 0
    %2921 = vmatpush1.bf16.msra.mxu0 0
    %2922 = vmatprep.subr.bf16.mxu0 0
    %2923 = vmatpush1.bf16.msra.mxu0 0
    %2924 = vmatprep.mubr.bf16.mxu0 0
    %2925 = vmatmul.mubr.bf16.gmra.mrb[0].mxu0 %v2541
    %v2926 = vpop.f32.mrb[0].mxu0
    %v2927 = vadd.f32 0.0, %v2926
    %v2928 = vpop.f32.mrb[0].mxu0
    %v2929 = vpop.f32.mrb[0].mxu0
    %v2930 = vadd.f32 0.0, %v2929
    %v2931 = vpop.f32.mrb[0].mxu0
    %2932 = vmatprep.mubr.bf16.mxu0 0
    %2933 = vmatmul.mubr.bf16.gmra.mrb[0].mxu0 %v2544
    %v2934 = vpop.f32.mrb[0].mxu0
    %v2935 = vadd.f32 0.0, %v2934
    %v2936 = vpop.f32.mrb[0].mxu0
    %v2937 = vpop.f32.mrb[0].mxu0
    %v2938 = vadd.f32 0.0, %v2937
    %v2939 = vpop.f32.mrb[0].mxu0
    %2940 = vmatprep.mubr.bf16.mxu0 0
    %2941 = vmatmul.mubr.bf16.gmra.mrb[0].mxu0 %v2652
    %v2942 = vpop.f32.mrb[0].mxu0
    %v2943 = vadd.f32 0.0, %v2942
    %v2944 = vpop.f32.mrb[0].mxu0
    %v2945 = vpop.f32.mrb[0].mxu0
    %v2946 = vadd.f32 0.0, %v2945
    %v2947 = vpop.f32.mrb[0].mxu0
    %2948 = vmatprep.mubr.bf16.mxu0 0
    %2949 = vmatmul.mubr.bf16.gmra.mrb[0].mxu0 %v2887
    %v2950 = vpop.f32.mrb[0].mxu0
    %v2951 = vadd.f32 0.0, %v2950
    %v2952 = vpop.f32.mrb[0].mxu0
    %v2953 = vpop.f32.mrb[0].mxu0
    %v2954 = vadd.f32 0.0, %v2953
    %v2955 = vpop.f32.mrb[0].mxu0
    %2956 = vdwg.mxu0
    %v2957 = vadd.f32 %v2841, %v2927
    %v2958 = vadd.f32 %v2842, %v2930
    %v2959 = vadd.f32 %v2843, %v2935
    %v2960 = vadd.f32 %v2844, %v2938
    %v2961 = vadd.f32 %v2845, %v2943
    %v2962 = vadd.f32 %v2846, %v2946
    %v2963 = vadd.f32 %v2847, %v2951
    %v2964 = vadd.f32 %v2848, %v2954
    %v2966 = vlaneseq
    %v2967 = vshrl.u32 %v2966, 7
    %v2968 = vsub.s32 0, %v2967
    %v2969 = vrot.slane %v2363, %v2968
    %v2971 = vadd.f32 %v2957, %v2969
    %v2972 = vadd.f32 %v2958, %v2969
    %v2973 = vadd.f32 %v2959, %v2969
    %v2974 = vadd.f32 %v2960, %v2969
    %v2975 = vadd.f32 %v2961, %v2969
    %v2976 = vadd.f32 %v2962, %v2969
    %v2977 = vadd.f32 %v2963, %v2969
    %v2978 = vadd.f32 %v2964, %v2969
    %v2979 = vsub.f32 0.0, %v2971
    %v2980 = vsub.f32 0.0, %v2972
    %v2981 = vsub.f32 0.0, %v2973
    %v2982 = vsub.f32 0.0, %v2974
    %v2983 = vsub.f32 0.0, %v2975
    %v2984 = vsub.f32 0.0, %v2976
    %v2985 = vsub.f32 0.0, %v2977
    %v2986 = vsub.f32 0.0, %v2978
    %v2987 = vmul.f32 %v2979, 1.442695
    %v2988 = vpow.pop %v2987
    %v2989 = vmul.f32 %v2980, 1.442695
    %v2990 = vpow.pop %v2989
    %v2991 = vmul.f32 %v2981, 1.442695
    %v2992 = vpow.pop %v2991
    %v2993 = vmul.f32 %v2982, 1.442695
    %v2994 = vpow.pop %v2993
    %v2995 = vmul.f32 %v2983, 1.442695
    %v2996 = vpow.pop %v2995
    %v2997 = vmul.f32 %v2984, 1.442695
    %v2998 = vpow.pop %v2997
    %v2999 = vmul.f32 %v2985, 1.442695
    %v3000 = vpow.pop %v2999
    %v3001 = vmul.f32 %v2986, 1.442695
    %v3002 = vpow.pop %v3001
    %v3003 = vadd.f32 %v2988, 1.0
    %v3004 = vadd.f32 %v2990, 1.0
    %v3005 = vadd.f32 %v2992, 1.0
    %v3006 = vadd.f32 %v2994, 1.0
    %v3007 = vadd.f32 %v2996, 1.0
    %v3008 = vadd.f32 %v2998, 1.0
    %v3009 = vadd.f32 %v3000, 1.0
    %v3010 = vadd.f32 %v3002, 1.0
    %v3011 = vrcp.pop %v3003
    %v3012 = vrcp.pop %v3004
    %v3013 = vrcp.pop %v3005
    %v3014 = vrcp.pop %v3006
    %v3015 = vrcp.pop %v3007
    %v3016 = vrcp.pop %v3008
    %v3017 = vrcp.pop %v3009
    %v3018 = vrcp.pop %v3010
    %v3019 = vmax.f32 %v3011, %v3012
    %v3020 = vmax.f32 %v3013, %v3014
    %v3021 = vmax.f32 %v3015, %v3016
    %v3022 = vmax.f32 %v3017, %v3018
    %v3023 = vpack.c.bf16 %v3020, %v3019
    %v3024 = vpack.c.bf16 %v3022, %v3021
    %v3025 = vld [vmem:[%s7] sm:$0xf]
    %v3026 = vld [vmem:[%s7 + $0x4] sm:$0xf]
    %v3027 = vld [vmem:[%s7 + $0x8] sm:$0xf]
    %v3028 = vld [vmem:[%s7 + $0xc] sm:$0xf]
    %v3029 = vld [vmem:[%s7 + $0x10] sm:$0xf]
    %v3030 = vld [vmem:[%s7 + $0x14] sm:$0xf]
    %v3031 = vld [vmem:[%s7 + $0x18] sm:$0xf]
    %v3032 = vld [vmem:[%s7 + $0x1c] sm:$0xf]
    %v3033 = vld [vmem:[%s7 + $0x20] sm:$0xf]
    %v3034 = vld [vmem:[%s7 + $0x24] sm:$0xf]
    %v3035 = vld [vmem:[%s7 + $0x28] sm:$0xf]
    %v3036 = vld [vmem:[%s7 + $0x2c] sm:$0xf]
    %v3037 = vld [vmem:[%s7 + $0x30] sm:$0xf]
    %v3038 = vld [vmem:[%s7 + $0x34] sm:$0xf]
    %v3039 = vld [vmem:[%s7 + $0x38] sm:$0xf]
    %v3040 = vld [vmem:[%s7 + $0x3c] sm:$0xf]
    %v3041 = vld [vmem:[%s8] sm:$0xf]
    %v3042 = vld [vmem:[%s8 + $0x4] sm:$0xf]
    %v3043 = vld [vmem:[%s8 + $0x8] sm:$0xf]
    %v3044 = vld [vmem:[%s8 + $0xc] sm:$0xf]
    %v3045 = vld [vmem:[%s8 + $0x10] sm:$0xf]
    %v3046 = vld [vmem:[%s8 + $0x14] sm:$0xf]
    %v3047 = vld [vmem:[%s8 + $0x18] sm:$0xf]
    %v3048 = vld [vmem:[%s8 + $0x1c] sm:$0xf]
    %v3049 = vld [vmem:[%s8 + $0x20] sm:$0xf]
    %v3050 = vld [vmem:[%s8 + $0x24] sm:$0xf]
    %v3051 = vld [vmem:[%s8 + $0x28] sm:$0xf]
    %v3052 = vld [vmem:[%s8 + $0x2c] sm:$0xf]
    %v3053 = vld [vmem:[%s8 + $0x30] sm:$0xf]
    %v3054 = vld [vmem:[%s8 + $0x34] sm:$0xf]
    %v3055 = vld [vmem:[%s8 + $0x38] sm:$0xf]
    %v3056 = vld [vmem:[%s8 + $0x3c] sm:$0xf]
    %v3073 = vunpack.c.l.b16 %v3025
    %v3074 = vunpack.c.l.b16 %v3026
    %v3075 = vunpack.c.l.b16 %v3027
    %v3076 = vunpack.c.l.b16 %v3028
    %v3077 = vunpack.c.l.b16 %v3029
    %v3078 = vunpack.c.l.b16 %v3030
    %v3079 = vunpack.c.l.b16 %v3031
    %v3080 = vunpack.c.l.b16 %v3032
    %v3081 = vunpack.c.l.b16 %v3033
    %v3082 = vunpack.c.l.b16 %v3034
    %v3083 = vunpack.c.l.b16 %v3035
    %v3084 = vunpack.c.l.b16 %v3036
    %v3085 = vunpack.c.l.b16 %v3037
    %v3086 = vunpack.c.l.b16 %v3038
    %v3087 = vunpack.c.l.b16 %v3039
    %v3088 = vunpack.c.l.b16 %v3040
    %v3089 = vpack.c.b16 %v3074, %v3073
    %v3090 = vpack.c.b16 %v3076, %v3075
    %v3091 = vpack.c.b16 %v3078, %v3077
    %v3092 = vpack.c.b16 %v3080, %v3079
    %v3093 = vpack.c.b16 %v3082, %v3081
    %v3094 = vpack.c.b16 %v3084, %v3083
    %v3095 = vpack.c.b16 %v3086, %v3085
    %v3096 = vpack.c.b16 %v3088, %v3087
    %3105 = vmatprep.subr.bf16.mxu0 0
    %3106 = vmatpush1.bf16.msra.mxu0 %v3089
    %3107 = vmatprep.subr.bf16.mxu0 0
    %3108 = vmatpush1.bf16.msra.mxu0 %v3090
    %3109 = vmatprep.subr.bf16.mxu0 0
    %3110 = vmatpush1.bf16.msra.mxu0 %v3091
    %3111 = vmatprep.subr.bf16.mxu0 0
    %3112 = vmatpush1.bf16.msra.mxu0 %v3092
    %3113 = vmatprep.subr.bf16.mxu0 0
    %3114 = vmatpush1.bf16.msra.mxu0 %v3093
    %3115 = vmatprep.subr.bf16.mxu0 0
    %3116 = vmatpush1.bf16.msra.mxu0 %v3094
    %3117 = vmatprep.subr.bf16.mxu0 0
    %3118 = vmatpush1.bf16.msra.mxu0 %v3095
    %3119 = vmatprep.subr.bf16.mxu0 0
    %3120 = vmatpush1.bf16.msra.mxu0 %v3096
    %3121 = vmatprep.subr.bf16.mxu0 0
    %3122 = vmatpush1.bf16.msra.mxu0 0
    %3123 = vmatprep.subr.bf16.mxu0 0
    %3124 = vmatpush1.bf16.msra.mxu0 0
    %3125 = vmatprep.subr.bf16.mxu0 0
    %3126 = vmatpush1.bf16.msra.mxu0 0
    %3127 = vmatprep.subr.bf16.mxu0 0
    %3128 = vmatpush1.bf16.msra.mxu0 0
    %3129 = vmatprep.subr.bf16.mxu0 0
    %3130 = vmatpush1.bf16.msra.mxu0 0
    %3131 = vmatprep.subr.bf16.mxu0 0
    %3132 = vmatpush1.bf16.msra.mxu0 0
    %3133 = vmatprep.subr.bf16.mxu0 0
    %3134 = vmatpush1.bf16.msra.mxu0 0
    %3135 = vmatprep.subr.bf16.mxu0 0
    %3136 = vmatpush1.bf16.msra.mxu0 0
    %3137 = vmatprep.mubr.bf16.mxu0 0
    %3138 = vmatmul.mubr.bf16.gmra.mrb[0].mxu0 %v3023
    %v3139 = vpop.f32.mrb[0].mxu0
    %v3140 = vadd.f32 0.0, %v3139
    %v3141 = vpop.f32.mrb[0].mxu0
    %v3142 = vpop.f32.mrb[0].mxu0
    %v3143 = vadd.f32 0.0, %v3142
    %v3144 = vpop.f32.mrb[0].mxu0
    %3145 = vmatprep.mubr.bf16.mxu0 0
    %3146 = vmatmul.mubr.bf16.gmra.mrb[0].mxu0 %v3024
    %v3147 = vpop.f32.mrb[0].mxu0
    %v3148 = vadd.f32 0.0, %v3147
    %v3149 = vpop.f32.mrb[0].mxu0
    %v3150 = vpop.f32.mrb[0].mxu0
    %v3151 = vadd.f32 0.0, %v3150
    %v3152 = vpop.f32.mrb[0].mxu0
    %3153 = vdwg.mxu0
    %v3170 = vunpack.c.l.b16 %v3041
    %v3171 = vunpack.c.l.b16 %v3042
    %v3172 = vunpack.c.l.b16 %v3043
    %v3173 = vunpack.c.l.b16 %v3044
    %v3174 = vunpack.c.l.b16 %v3045
    %v3175 = vunpack.c.l.b16 %v3046
    %v3176 = vunpack.c.l.b16 %v3047
    %v3177 = vunpack.c.l.b16 %v3048
    %v3178 = vunpack.c.l.b16 %v3049
    %v3179 = vunpack.c.l.b16 %v3050
    %v3180 = vunpack.c.l.b16 %v3051
    %v3181 = vunpack.c.l.b16 %v3052
    %v3182 = vunpack.c.l.b16 %v3053
    %v3183 = vunpack.c.l.b16 %v3054
    %v3184 = vunpack.c.l.b16 %v3055
    %v3185 = vunpack.c.l.b16 %v3056
    %v3186 = vpack.c.b16 %v3171, %v3170
    %v3187 = vpack.c.b16 %v3173, %v3172
    %v3188 = vpack.c.b16 %v3175, %v3174
    %v3189 = vpack.c.b16 %v3177, %v3176
    %v3190 = vpack.c.b16 %v3179, %v3178
    %v3191 = vpack.c.b16 %v3181, %v3180
    %v3192 = vpack.c.b16 %v3183, %v3182
    %v3193 = vpack.c.b16 %v3185, %v3184
    %3202 = vmatprep.subr.bf16.mxu0 0
    %3203 = vmatpush1.bf16.msra.mxu0 %v3186
    %3204 = vmatprep.subr.bf16.mxu0 0
    %3205 = vmatpush1.bf16.msra.mxu0 %v3187
    %3206 = vmatprep.subr.bf16.mxu0 0
    %3207 = vmatpush1.bf16.msra.mxu0 %v3188
    %3208 = vmatprep.subr.bf16.mxu0 0
    %3209 = vmatpush1.bf16.msra.mxu0 %v3189
    %3210 = vmatprep.subr.bf16.mxu0 0
    %3211 = vmatpush1.bf16.msra.mxu0 %v3190
    %3212 = vmatprep.subr.bf16.mxu0 0
    %3213 = vmatpush1.bf16.msra.mxu0 %v3191
    %3214 = vmatprep.subr.bf16.mxu0 0
    %3215 = vmatpush1.bf16.msra.mxu0 %v3192
    %3216 = vmatprep.subr.bf16.mxu0 0
    %3217 = vmatpush1.bf16.msra.mxu0 %v3193
    %3218 = vmatprep.subr.bf16.mxu0 0
    %3219 = vmatpush1.bf16.msra.mxu0 0
    %3220 = vmatprep.subr.bf16.mxu0 0
    %3221 = vmatpush1.bf16.msra.mxu0 0
    %3222 = vmatprep.subr.bf16.mxu0 0
    %3223 = vmatpush1.bf16.msra.mxu0 0
    %3224 = vmatprep.subr.bf16.mxu0 0
    %3225 = vmatpush1.bf16.msra.mxu0 0
    %3226 = vmatprep.subr.bf16.mxu0 0
    %3227 = vmatpush1.bf16.msra.mxu0 0
    %3228 = vmatprep.subr.bf16.mxu0 0
    %3229 = vmatpush1.bf16.msra.mxu0 0
    %3230 = vmatprep.subr.bf16.mxu0 0
    %3231 = vmatpush1.bf16.msra.mxu0 0
    %3232 = vmatprep.subr.bf16.mxu0 0
    %3233 = vmatpush1.bf16.msra.mxu0 0
    %3234 = vmatprep.mubr.bf16.mxu0 0
    %3235 = vmatmul.mubr.bf16.gmra.mrb[0].mxu0 %v3023
    %v3236 = vpop.f32.mrb[0].mxu0
    %v3237 = vadd.f32 0.0, %v3236
    %v3238 = vpop.f32.mrb[0].mxu0
    %v3239 = vpop.f32.mrb[0].mxu0
    %v3240 = vadd.f32 0.0, %v3239
    %v3241 = vpop.f32.mrb[0].mxu0
    %3242 = vmatprep.mubr.bf16.mxu0 0
    %3243 = vmatmul.mubr.bf16.gmra.mrb[0].mxu0 %v3024
    %v3244 = vpop.f32.mrb[0].mxu0
    %v3245 = vadd.f32 0.0, %v3244
    %v3246 = vpop.f32.mrb[0].mxu0
    %v3247 = vpop.f32.mrb[0].mxu0
    %v3248 = vadd.f32 0.0, %v3247
    %v3249 = vpop.f32.mrb[0].mxu0
    %3250 = vdwg.mxu0
    %v3251 = vmax.f32 %v3140, %v3237
    %v3252 = vmax.f32 %v3143, %v3240
    %v3253 = vmax.f32 %v3148, %v3245
    %v3254 = vmax.f32 %v3151, %v3248
    %v3255 = vpack.c.bf16 %v3252, %v3251
    %v3256 = vpack.c.bf16 %v3254, %v3253
    %v3257 = vld [vmem:[%s9] sm:$0xf]
    %v3258 = vld [vmem:[%s9 + $0x4] sm:$0xf]
    %v3259 = vld [vmem:[%s9 + $0x8] sm:$0xf]
    %v3260 = vld [vmem:[%s9 + $0xc] sm:$0xf]
    %v3261 = vld [vmem:[%s9 + $0x10] sm:$0xf]
    %v3262 = vld [vmem:[%s9 + $0x14] sm:$0xf]
    %v3263 = vld [vmem:[%s9 + $0x18] sm:$0xf]
    %v3264 = vld [vmem:[%s9 + $0x1c] sm:$0xf]
    %s3265 = scalar_lea.vmem %s9, 32
    %v3266 = vld [vmem:[%s3265] sm:$0xf]
    %v3267 = vld [vmem:[%s3265 + $0x4] sm:$0xf]
    %v3268 = vld [vmem:[%s3265 + $0x8] sm:$0xf]
    %v3269 = vld [vmem:[%s3265 + $0xc] sm:$0xf]
    %v3270 = vld [vmem:[%s3265 + $0x10] sm:$0xf]
    %v3271 = vld [vmem:[%s3265 + $0x14] sm:$0xf]
    %v3272 = vld [vmem:[%s3265 + $0x18] sm:$0xf]
    %v3273 = vld [vmem:[%s3265 + $0x1c] sm:$0xf]
    %v3275 = vrot.slane %v3255, 4
    %v3284 = vunpack.c.l.b16 %v3266
    %v3285 = vunpack.c.l.b16 %v3267
    %v3286 = vunpack.c.l.b16 %v3268
    %v3287 = vunpack.c.l.b16 %v3269
    %v3288 = vunpack.c.l.b16 %v3270
    %v3289 = vunpack.c.l.b16 %v3271
    %v3290 = vunpack.c.l.b16 %v3272
    %v3291 = vunpack.c.l.b16 %v3273
    %v3292 = vpack.c.b16 %v3285, %v3284
    %v3293 = vpack.c.b16 %v3287, %v3286
    %v3294 = vpack.c.b16 %v3289, %v3288
    %v3295 = vpack.c.b16 %v3291, %v3290
    %vm3300 = vcmask 523264
    %v3302 = vsel %vm3300, %v3275, 0
    %3304 = vmatprep.subr.bf16.mxu0 0
    %3305 = vmatpush1.bf16.msra.mxu0 %v3292
    %3306 = vmatprep.subr.bf16.mxu0 0
    %3307 = vmatpush1.bf16.msra.mxu0 %v3293
    %3308 = vmatprep.subr.bf16.mxu0 0
    %3309 = vmatpush1.bf16.msra.mxu0 %v3294
    %3310 = vmatprep.subr.bf16.mxu0 0
    %3311 = vmatpush1.bf16.msra.mxu0 %v3295
    %3312 = vmatprep.subr.bf16.mxu0 0
    %3313 = vmatpush1.bf16.msra.mxu0 0
    %3314 = vmatprep.subr.bf16.mxu0 0
    %3315 = vmatpush1.bf16.msra.mxu0 0
    %3316 = vmatprep.subr.bf16.mxu0 0
    %3317 = vmatpush1.bf16.msra.mxu0 0
    %3318 = vmatprep.subr.bf16.mxu0 0
    %3319 = vmatpush1.bf16.msra.mxu0 0
    %3320 = vmatprep.subr.bf16.mxu0 0
    %3321 = vmatpush1.bf16.msra.mxu0 0
    %3322 = vmatprep.subr.bf16.mxu0 0
    %3323 = vmatpush1.bf16.msra.mxu0 0
    %3324 = vmatprep.subr.bf16.mxu0 0
    %3325 = vmatpush1.bf16.msra.mxu0 0
    %3326 = vmatprep.subr.bf16.mxu0 0
    %3327 = vmatpush1.bf16.msra.mxu0 0
    %3328 = vmatprep.subr.bf16.mxu0 0
    %3329 = vmatpush1.bf16.msra.mxu0 0
    %3330 = vmatprep.subr.bf16.mxu0 0
    %3331 = vmatpush1.bf16.msra.mxu0 0
    %3332 = vmatprep.subr.bf16.mxu0 0
    %3333 = vmatpush1.bf16.msra.mxu0 0
    %3334 = vmatprep.subr.bf16.mxu0 0
    %3335 = vmatpush1.bf16.msra.mxu0 0
    %3336 = vmatprep.mubr.bf16.mxu0 0
    %3337 = vmatmul.mubr.bf16.gmra.mrb[0].mxu0 %v3302
    %v3338 = vpop.f32.mrb[0].mxu0
    %v3339 = vadd.f32 0.0, %v3338
    %v3340 = vpop.f32.mrb[0].mxu0
    %v3341 = vpop.f32.mrb[0].mxu0
    %v3342 = vpop.f32.mrb[0].mxu0
    %3343 = vdwg.mxu0
    %v3352 = vunpack.c.l.b16 %v3257
    %v3353 = vunpack.c.l.b16 %v3258
    %v3354 = vunpack.c.l.b16 %v3259
    %v3355 = vunpack.c.l.b16 %v3260
    %v3356 = vunpack.c.l.b16 %v3261
    %v3357 = vunpack.c.l.b16 %v3262
    %v3358 = vunpack.c.l.b16 %v3263
    %v3359 = vunpack.c.l.b16 %v3264
    %v3360 = vpack.c.b16 %v3353, %v3352
    %v3361 = vpack.c.b16 %v3355, %v3354
    %v3362 = vpack.c.b16 %v3357, %v3356
    %v3363 = vpack.c.b16 %v3359, %v3358
    %v3369 = vsel %vm3300, %v3255, 0
    %3371 = vmatprep.subr.bf16.mxu0 0
    %3372 = vmatpush1.bf16.msra.mxu0 %v3360
    %3373 = vmatprep.subr.bf16.mxu0 0
    %3374 = vmatpush1.bf16.msra.mxu0 %v3361
    %3375 = vmatprep.subr.bf16.mxu0 0
    %3376 = vmatpush1.bf16.msra.mxu0 %v3362
    %3377 = vmatprep.subr.bf16.mxu0 0
    %3378 = vmatpush1.bf16.msra.mxu0 %v3363
    %3379 = vmatprep.subr.bf16.mxu0 0
    %3380 = vmatpush1.bf16.msra.mxu0 0
    %3381 = vmatprep.subr.bf16.mxu0 0
    %3382 = vmatpush1.bf16.msra.mxu0 0
    %3383 = vmatprep.subr.bf16.mxu0 0
    %3384 = vmatpush1.bf16.msra.mxu0 0
    %3385 = vmatprep.subr.bf16.mxu0 0
    %3386 = vmatpush1.bf16.msra.mxu0 0
    %3387 = vmatprep.subr.bf16.mxu0 0
    %3388 = vmatpush1.bf16.msra.mxu0 0
    %3389 = vmatprep.subr.bf16.mxu0 0
    %3390 = vmatpush1.bf16.msra.mxu0 0
    %3391 = vmatprep.subr.bf16.mxu0 0
    %3392 = vmatpush1.bf16.msra.mxu0 0
    %3393 = vmatprep.subr.bf16.mxu0 0
    %3394 = vmatpush1.bf16.msra.mxu0 0
    %3395 = vmatprep.subr.bf16.mxu0 0
    %3396 = vmatpush1.bf16.msra.mxu0 0
    %3397 = vmatprep.subr.bf16.mxu0 0
    %3398 = vmatpush1.bf16.msra.mxu0 0
    %3399 = vmatprep.subr.bf16.mxu0 0
    %3400 = vmatpush1.bf16.msra.mxu0 0
    %3401 = vmatprep.subr.bf16.mxu0 0
    %3402 = vmatpush1.bf16.msra.mxu0 0
    %3403 = vmatprep.mubr.bf16.mxu0 0
    %3404 = vmatmul.mubr.bf16.gmra.mrb[0].mxu0 %v3369
    %v3405 = vpop.f32.mrb[0].mxu0
    %v3406 = vadd.f32 %v3339, %v3405
    %v3407 = vpop.f32.mrb[0].mxu0
    %v3408 = vpop.f32.mrb[0].mxu0
    %v3409 = vpop.f32.mrb[0].mxu0
    %3410 = vdwg.mxu0
    %s3411 = scalar_lea.vmem %s9, 64
    %v3412 = vld [vmem:[%s3411] sm:$0xf]
    %v3413 = vld [vmem:[%s3411 + $0x4] sm:$0xf]
    %v3414 = vld [vmem:[%s3411 + $0x8] sm:$0xf]
    %v3415 = vld [vmem:[%s3411 + $0xc] sm:$0xf]
    %v3416 = vld [vmem:[%s3411 + $0x10] sm:$0xf]
    %v3417 = vld [vmem:[%s3411 + $0x14] sm:$0xf]
    %v3418 = vld [vmem:[%s3411 + $0x18] sm:$0xf]
    %v3419 = vld [vmem:[%s3411 + $0x1c] sm:$0xf]
    %v3428 = vunpack.c.l.b16 %v3412
    %v3429 = vunpack.c.l.b16 %v3413
    %v3430 = vunpack.c.l.b16 %v3414
    %v3431 = vunpack.c.l.b16 %v3415
    %v3432 = vunpack.c.l.b16 %v3416
    %v3433 = vunpack.c.l.b16 %v3417
    %v3434 = vunpack.c.l.b16 %v3418
    %v3435 = vunpack.c.l.b16 %v3419
    %v3436 = vpack.c.b16 %v3429, %v3428
    %v3437 = vpack.c.b16 %v3431, %v3430
    %v3438 = vpack.c.b16 %v3433, %v3432
    %v3439 = vpack.c.b16 %v3435, %v3434
    %v3445 = vsel %vm3300, %v3256, 0
    %3447 = vmatprep.subr.bf16.mxu0 0
    %3448 = vmatpush1.bf16.msra.mxu0 %v3436
    %3449 = vmatprep.subr.bf16.mxu0 0
    %3450 = vmatpush1.bf16.msra.mxu0 %v3437
    %3451 = vmatprep.subr.bf16.mxu0 0
    %3452 = vmatpush1.bf16.msra.mxu0 %v3438
    %3453 = vmatprep.subr.bf16.mxu0 0
    %3454 = vmatpush1.bf16.msra.mxu0 %v3439
    %3455 = vmatprep.subr.bf16.mxu0 0
    %3456 = vmatpush1.bf16.msra.mxu0 0
    %3457 = vmatprep.subr.bf16.mxu0 0
    %3458 = vmatpush1.bf16.msra.mxu0 0
    %3459 = vmatprep.subr.bf16.mxu0 0
    %3460 = vmatpush1.bf16.msra.mxu0 0
    %3461 = vmatprep.subr.bf16.mxu0 0
    %3462 = vmatpush1.bf16.msra.mxu0 0
    %3463 = vmatprep.subr.bf16.mxu0 0
    %3464 = vmatpush1.bf16.msra.mxu0 0
    %3465 = vmatprep.subr.bf16.mxu0 0
    %3466 = vmatpush1.bf16.msra.mxu0 0
    %3467 = vmatprep.subr.bf16.mxu0 0
    %3468 = vmatpush1.bf16.msra.mxu0 0
    %3469 = vmatprep.subr.bf16.mxu0 0
    %3470 = vmatpush1.bf16.msra.mxu0 0
    %3471 = vmatprep.subr.bf16.mxu0 0
    %3472 = vmatpush1.bf16.msra.mxu0 0
    %3473 = vmatprep.subr.bf16.mxu0 0
    %3474 = vmatpush1.bf16.msra.mxu0 0
    %3475 = vmatprep.subr.bf16.mxu0 0
    %3476 = vmatpush1.bf16.msra.mxu0 0
    %3477 = vmatprep.subr.bf16.mxu0 0
    %3478 = vmatpush1.bf16.msra.mxu0 0
    %3479 = vmatprep.mubr.bf16.mxu0 0
    %3480 = vmatmul.mubr.bf16.gmra.mrb[0].mxu0 %v3445
    %v3481 = vpop.f32.mrb[0].mxu0
    %v3482 = vadd.f32 0.0, %v3481
    %v3483 = vpop.f32.mrb[0].mxu0
    %v3484 = vpop.f32.mrb[0].mxu0
    %v3485 = vpop.f32.mrb[0].mxu0
    %3486 = vdwg.mxu0
    %v3487 = vadd.f32 %v3406, %v3482
    %s3488 = scalar_lea.vmem %s9, 96
    %v3489 = vld [vmem:[%s3488] sm:$0xf]
    %v3490 = vld [vmem:[%s3488 + $0x4] sm:$0xf]
    %v3491 = vld [vmem:[%s3488 + $0x8] sm:$0xf]
    %v3492 = vld [vmem:[%s3488 + $0xc] sm:$0xf]
    %v3493 = vld [vmem:[%s3488 + $0x10] sm:$0xf]
    %v3494 = vld [vmem:[%s3488 + $0x14] sm:$0xf]
    %v3495 = vld [vmem:[%s3488 + $0x18] sm:$0xf]
    %v3496 = vld [vmem:[%s3488 + $0x1c] sm:$0xf]
    %v3498 = vrot.slane %v3256, 4
    %v3507 = vunpack.c.l.b16 %v3489
    %v3508 = vunpack.c.l.b16 %v3490
    %v3509 = vunpack.c.l.b16 %v3491
    %v3510 = vunpack.c.l.b16 %v3492
    %v3511 = vunpack.c.l.b16 %v3493
    %v3512 = vunpack.c.l.b16 %v3494
    %v3513 = vunpack.c.l.b16 %v3495
    %v3514 = vunpack.c.l.b16 %v3496
    %v3515 = vpack.c.b16 %v3508, %v3507
    %v3516 = vpack.c.b16 %v3510, %v3509
    %v3517 = vpack.c.b16 %v3512, %v3511
    %v3518 = vpack.c.b16 %v3514, %v3513
    %v3524 = vsel %vm3300, %v3498, 0
    %3526 = vmatprep.subr.bf16.mxu0 0
    %3527 = vmatpush1.bf16.msra.mxu0 %v3515
    %3528 = vmatprep.subr.bf16.mxu0 0
    %3529 = vmatpush1.bf16.msra.mxu0 %v3516
    %3530 = vmatprep.subr.bf16.mxu0 0
    %3531 = vmatpush1.bf16.msra.mxu0 %v3517
    %3532 = vmatprep.subr.bf16.mxu0 0
    %3533 = vmatpush1.bf16.msra.mxu0 %v3518
    %3534 = vmatprep.subr.bf16.mxu0 0
    %3535 = vmatpush1.bf16.msra.mxu0 0
    %3536 = vmatprep.subr.bf16.mxu0 0
    %3537 = vmatpush1.bf16.msra.mxu0 0
    %3538 = vmatprep.subr.bf16.mxu0 0
    %3539 = vmatpush1.bf16.msra.mxu0 0
    %3540 = vmatprep.subr.bf16.mxu0 0
    %3541 = vmatpush1.bf16.msra.mxu0 0
    %3542 = vmatprep.subr.bf16.mxu0 0
    %3543 = vmatpush1.bf16.msra.mxu0 0
    %3544 = vmatprep.subr.bf16.mxu0 0
    %3545 = vmatpush1.bf16.msra.mxu0 0
    %3546 = vmatprep.subr.bf16.mxu0 0
    %3547 = vmatpush1.bf16.msra.mxu0 0
    %3548 = vmatprep.subr.bf16.mxu0 0
    %3549 = vmatpush1.bf16.msra.mxu0 0
    %3550 = vmatprep.subr.bf16.mxu0 0
    %3551 = vmatpush1.bf16.msra.mxu0 0
    %3552 = vmatprep.subr.bf16.mxu0 0
    %3553 = vmatpush1.bf16.msra.mxu0 0
    %3554 = vmatprep.subr.bf16.mxu0 0
    %3555 = vmatpush1.bf16.msra.mxu0 0
    %3556 = vmatprep.subr.bf16.mxu0 0
    %3557 = vmatpush1.bf16.msra.mxu0 0
    %3558 = vmatprep.mubr.bf16.mxu0 0
    %3559 = vmatmul.mubr.bf16.gmra.mrb[0].mxu0 %v3524
    %v3560 = vpop.f32.mrb[0].mxu0
    %v3561 = vadd.f32 0.0, %v3560
    %v3562 = vpop.f32.mrb[0].mxu0
    %v3563 = vpop.f32.mrb[0].mxu0
    %v3564 = vpop.f32.mrb[0].mxu0
    %3565 = vdwg.mxu0
    %v3566 = vadd.f32 %v3487, %v3561
    %v3567 = vld [vmem:[#allocation4] sm:$0x1]
    %v3569 = vlaneseq
    %v3570 = vshrl.u32 %v3569, 7
    %v3571 = vsub.s32 0, %v3570
    %v3572 = vrot.slane %v3567, %v3571
    %v3574 = vadd.f32 %v3566, %v3572
    %v3575 = vsub.f32 0.0, %v3574
    %v3576 = vmul.f32 %v3575, 1.442695
    %v3577 = vpow.pop %v3576
    %v3578 = vadd.f32 %v3577, 1.0
    %v3579 = vrcp.pop %v3578
    %v3580 = vpack.c.bf16 %v3579, %v3579
    %v3581 = vld [vmem:[%s11] sm:$0xf]
    %v3582 = vld [vmem:[%s11 + $0x4] sm:$0xf]
    %v3583 = vld [vmem:[%s11 + $0x8] sm:$0xf]
    %v3584 = vld [vmem:[%s11 + $0xc] sm:$0xf]
    %v3585 = vld [vmem:[%s11 + $0x10] sm:$0xf]
    %v3586 = vld [vmem:[%s11 + $0x14] sm:$0xf]
    %v3587 = vld [vmem:[%s11 + $0x18] sm:$0xf]
    %v3588 = vld [vmem:[%s11 + $0x1c] sm:$0xf]
    %v3589 = vld [vmem:[%s11 + $0x20] sm:$0xf]
    %v3590 = vld [vmem:[%s11 + $0x24] sm:$0xf]
    %v3591 = vld [vmem:[%s11 + $0x28] sm:$0xf]
    %v3592 = vld [vmem:[%s11 + $0x2c] sm:$0xf]
    %v3593 = vld [vmem:[%s11 + $0x30] sm:$0xf]
    %v3594 = vld [vmem:[%s11 + $0x34] sm:$0xf]
    %v3595 = vld [vmem:[%s11 + $0x38] sm:$0xf]
    %v3596 = vld [vmem:[#allocation6] sm:$0x1]
    %v3598 = vlaneseq
    %v3599 = vshrl.u32 %v3598, 7
    %v3600 = vsub.s32 0, %v3599
    %v3601 = vrot.slane %v3596, %v3600
    %v3618 = vunpack.c.l.b16 %v3581
    %v3619 = vunpack.c.l.b16 %v3582
    %v3620 = vunpack.c.l.b16 %v3583
    %v3621 = vunpack.c.l.b16 %v3584
    %v3622 = vunpack.c.l.b16 %v3585
    %v3623 = vunpack.c.l.b16 %v3586
    %v3624 = vunpack.c.l.b16 %v3587
    %v3625 = vunpack.c.l.b16 %v3588
    %v3626 = vunpack.c.l.b16 %v3589
    %v3627 = vunpack.c.l.b16 %v3590
    %v3628 = vunpack.c.l.b16 %v3591
    %v3629 = vunpack.c.l.b16 %v3592
    %v3630 = vunpack.c.l.b16 %v3593
    %v3631 = vunpack.c.l.b16 %v3594
    %v3632 = vunpack.c.l.b16 %v3595
    %v3633 = vpack.c.b16 %v3619, %v3618
    %v3634 = vpack.c.b16 %v3621, %v3620
    %v3635 = vpack.c.b16 %v3623, %v3622
    %v3636 = vpack.c.b16 %v3625, %v3624
    %v3637 = vpack.c.b16 %v3627, %v3626
    %v3638 = vpack.c.b16 %v3629, %v3628
    %v3639 = vpack.c.b16 %v3631, %v3630
    %v3640 = vpack.c.b16 %v3632, %v3632
    %vm3648 = vcmask 982016
    %v3650 = vsel %vm3648, %v3580, 0
    %v3653 = vsel %vm2438, %v3640, 0
    %3655 = vmatprep.subr.bf16.mxu0 0
    %3656 = vmatpush1.bf16.msra.mxu0 %v3633
    %3657 = vmatprep.subr.bf16.mxu0 0
    %3658 = vmatpush1.bf16.msra.mxu0 %v3634
    %3659 = vmatprep.subr.bf16.mxu0 0
    %3660 = vmatpush1.bf16.msra.mxu0 %v3635
    %3661 = vmatprep.subr.bf16.mxu0 0
    %3662 = vmatpush1.bf16.msra.mxu0 %v3636
    %3663 = vmatprep.subr.bf16.mxu0 0
    %3664 = vmatpush1.bf16.msra.mxu0 %v3637
    %3665 = vmatprep.subr.bf16.mxu0 0
    %3666 = vmatpush1.bf16.msra.mxu0 %v3638
    %3667 = vmatprep.subr.bf16.mxu0 0
    %3668 = vmatpush1.bf16.msra.mxu0 %v3639
    %3669 = vmatprep.subr.bf16.mxu0 0
    %3670 = vmatpush1.bf16.msra.mxu0 %v3653
    %3671 = vmatprep.subr.bf16.mxu0 0
    %3672 = vmatpush1.bf16.msra.mxu0 0
    %3673 = vmatprep.subr.bf16.mxu0 0
    %3674 = vmatpush1.bf16.msra.mxu0 0
    %3675 = vmatprep.subr.bf16.mxu0 0
    %3676 = vmatpush1.bf16.msra.mxu0 0
    %3677 = vmatprep.subr.bf16.mxu0 0
    %3678 = vmatpush1.bf16.msra.mxu0 0
    %3679 = vmatprep.subr.bf16.mxu0 0
    %3680 = vmatpush1.bf16.msra.mxu0 0
    %3681 = vmatprep.subr.bf16.mxu0 0
    %3682 = vmatpush1.bf16.msra.mxu0 0
    %3683 = vmatprep.subr.bf16.mxu0 0
    %3684 = vmatpush1.bf16.msra.mxu0 0
    %3685 = vmatprep.subr.bf16.mxu0 0
    %3686 = vmatpush1.bf16.msra.mxu0 0
    %3687 = vmatprep.mubr.bf16.mxu0 0
    %3688 = vmatmul.mubr.bf16.gmra.mrb[0].mxu0 %v3650
    %v3689 = vpop.f32.mrb[0].mxu0
    %v3690 = vadd.f32 %v3601, %v3689
    %v3691 = vpop.f32.mrb[0].mxu0
    %v3692 = vpop.f32.mrb[0].mxu0
    %v3693 = vpop.f32.mrb[0].mxu0
    %3694 = vdwg.mxu0
    %v3695 = vsub.f32 0.0, %v3690
    %v3696 = vmul.f32 %v3695, 1.442695
    %v3697 = vpow.pop %v3696
    %v3698 = vadd.f32 %v3697, 1.0
    %v3699 = vrcp.pop %v3698
    %v3700 = vpack.c.bf16 %v3699, %v3699
    %v3701 = vld [vmem:[%s13] sm:$0xf]
    %v3702 = vld [vmem:[%s13 + $0x4] sm:$0xf]
    %v3703 = vld [vmem:[%s13 + $0x8] sm:$0xf]
    %v3704 = vld [vmem:[%s13 + $0xc] sm:$0xf]
    %v3705 = vld [vmem:[%s13 + $0x10] sm:$0xf]
    %v3706 = vld [vmem:[%s13 + $0x14] sm:$0xf]
    %v3707 = vld [vmem:[%s13 + $0x18] sm:$0xf]
    %v3708 = vld [vmem:[%s13 + $0x1c] sm:$0xf]
    %v3709 = vld [vmem:[%s13 + $0x20] sm:$0xf]
    %v3710 = vld [vmem:[%s13 + $0x24] sm:$0xf]
    %v3711 = vld [vmem:[%s13 + $0x28] sm:$0x3]
    %v3712 = vld [vmem:[#allocation7] sm:$0x1]
    %v3714 = vlaneseq
    %v3715 = vshrl.u32 %v3714, 7
    %v3716 = vsub.s32 0, %v3715
    %v3717 = vrot.slane %v3712, %v3716
    %v3730 = vunpack.c.l.b16 %v3701
    %v3731 = vunpack.c.l.b16 %v3702
    %v3732 = vunpack.c.l.b16 %v3703
    %v3733 = vunpack.c.l.b16 %v3704
    %v3734 = vunpack.c.l.b16 %v3705
    %v3735 = vunpack.c.l.b16 %v3706
    %v3736 = vunpack.c.l.b16 %v3707
    %v3737 = vunpack.c.l.b16 %v3708
    %v3738 = vunpack.c.l.b16 %v3709
    %v3739 = vunpack.c.l.b16 %v3710
    %v3740 = vunpack.c.l.b16 %v3711
    %v3741 = vpack.c.b16 %v3731, %v3730
    %v3742 = vpack.c.b16 %v3733, %v3732
    %v3743 = vpack.c.b16 %v3735, %v3734
    %v3744 = vpack.c.b16 %v3737, %v3736
    %v3745 = vpack.c.b16 %v3739, %v3738
    %v3746 = vpack.c.b16 %v3740, %v3740
    %vm3752 = vcmask 687104
    %v3754 = vsel %vm3752, %v3700, 0
    %vm3756 = vcmask 1041408
    %v3758 = vsel %vm3756, %v3746, 0
    %3760 = vmatprep.subr.bf16.mxu0 0
    %3761 = vmatpush1.bf16.msra.mxu0 %v3741
    %3762 = vmatprep.subr.bf16.mxu0 0
    %3763 = vmatpush1.bf16.msra.mxu0 %v3742
    %3764 = vmatprep.subr.bf16.mxu0 0
    %3765 = vmatpush1.bf16.msra.mxu0 %v3743
    %3766 = vmatprep.subr.bf16.mxu0 0
    %3767 = vmatpush1.bf16.msra.mxu0 %v3744
    %3768 = vmatprep.subr.bf16.mxu0 0
    %3769 = vmatpush1.bf16.msra.mxu0 %v3745
    %3770 = vmatprep.subr.bf16.mxu0 0
    %3771 = vmatpush1.bf16.msra.mxu0 %v3758
    %3772 = vmatprep.subr.bf16.mxu0 0
    %3773 = vmatpush1.bf16.msra.mxu0 0
    %3774 = vmatprep.subr.bf16.mxu0 0
    %3775 = vmatpush1.bf16.msra.mxu0 0
    %3776 = vmatprep.subr.bf16.mxu0 0
    %3777 = vmatpush1.bf16.msra.mxu0 0
    %3778 = vmatprep.subr.bf16.mxu0 0
    %3779 = vmatpush1.bf16.msra.mxu0 0
    %3780 = vmatprep.subr.bf16.mxu0 0
    %3781 = vmatpush1.bf16.msra.mxu0 0
    %3782 = vmatprep.subr.bf16.mxu0 0
    %3783 = vmatpush1.bf16.msra.mxu0 0
    %3784 = vmatprep.subr.bf16.mxu0 0
    %3785 = vmatpush1.bf16.msra.mxu0 0
    %3786 = vmatprep.subr.bf16.mxu0 0
    %3787 = vmatpush1.bf16.msra.mxu0 0
    %3788 = vmatprep.subr.bf16.mxu0 0
    %3789 = vmatpush1.bf16.msra.mxu0 0
    %3790 = vmatprep.subr.bf16.mxu0 0
    %3791 = vmatpush1.bf16.msra.mxu0 0
    %3792 = vmatprep.mubr.bf16.mxu0 0
    %3793 = vmatmul.mubr.bf16.gmra.mrb[0].mxu0 %v3754
    %v3794 = vpop.f32.mrb[0].mxu0
    %v3795 = vadd.f32 %v3717, %v3794
    %v3796 = vpop.f32.mrb[0].mxu0
    %v3797 = vpop.f32.mrb[0].mxu0
    %v3798 = vpop.f32.mrb[0].mxu0
    %3799 = vdwg.mxu0
    %vm3800 = vcmask 80896
    %3801 = vst.msk [vmem:[%s15] sm:$0xff] %vm3800, %v3795
    // Predicated region
    $region78: #{lenet_forward.1} parent=1 // pred_check
      _
    $region79: #{lenet_forward.1} parent=1 // pred_check_branch
      %3803 = sbr.rel (0) target = $region81
    $region80: #{lenet_forward.1} parent=1 // pred_region
      _
    $region81: #{lenet_forward.1} parent=1 // pred_fallthru
      _
    // Predicated region
    $region82: #{lenet_forward.1} parent=1 // pred_check
      _
    $region83: #{lenet_forward.1} parent=1 // pred_check_branch
      %3805 = sbr.rel (0) target = $region85
    $region84: #{lenet_forward.1} parent=1 // pred_region
      _
    $region85: #{lenet_forward.1} parent=1 // pred_fallthru
      _
    %3806 = vsyncpa [#allocation3], 1
    %3807 = vsyncpa [#allocation5], 1
    %3808 = vsyncpa [#allocation8], 1

</llo_original>
